<compile_context>
chip_gen: v7x
topology: tpu7x:2x2x1
jax: 0.10.0
libtpu: 0.0.40
codegen_flags: <defaults>
</compile_context>

<pallas_src>
import functools

import jax
import jax.numpy as jnp
from jax.experimental import pallas as pl
from jax.experimental.pallas import tpu as pltpu


# ---------------------------------------------------------------------------
# Fused Pallas kernel: all GRU layers + FC head in one invocation
# ---------------------------------------------------------------------------

def _fused_gru_fc_kernel(x_ref, *refs, num_layers, T, B, Hp):
    """refs layout (after x_ref):
         per layer l: wih_t (Din, 3Hp), whh_t (Hp, 3Hp), bx (1, 3Hp), bhn (1, 3Hp)
         fc_w_t (Hp, Cp), fc_b (1, Cp)
         out_ref (B, Cp)
         seq_scr (T*B, Hp)   - inter-layer hidden sequence (VMEM)
         gx_scr  (T*B, 3Hp)  - hoisted input projection slab (VMEM)

    Gate order follows PyTorch nn.GRU: [r, z, n].
      r = sigmoid(x W_ir^T + b_ir + h W_hr^T + b_hr)
      z = sigmoid(x W_iz^T + b_iz + h W_hz^T + b_hz)
      n = tanh   (x W_in^T + b_in + r * (h W_hn^T + b_hn))
      h' = (1 - z) * n + z * h
    """
    layer_refs = [refs[4 * l: 4 * (l + 1)] for l in range(num_layers)]
    fc_w_ref = refs[4 * num_layers]
    fc_b_ref = refs[4 * num_layers + 1]
    out_ref = refs[4 * num_layers + 2]
    seq_scr = refs[4 * num_layers + 3]
    gx_scr = refs[4 * num_layers + 4]

    h = jnp.zeros((B, Hp), jnp.float32)
    for l in range(num_layers):
        wih_ref, whh_ref, bx_ref, bhn_ref = layer_refs[l]
        wdt = wih_ref.dtype

        # ---- Hoisted input projection: one big MXU matmul over all timesteps ----
        if l == 0:
            xin = x_ref[...].astype(wdt)          # (T*B, D)
        else:
            xin = seq_scr[...].astype(wdt)        # (T*B, Hp)
        gx_scr[...] = (jnp.dot(xin, wih_ref[...],
                               preferred_element_type=jnp.float32)
                       + bx_ref[...])

        whh = whh_ref[...]
        bhn = bhn_ref[...]
        write_seq = (l < num_layers - 1)          # last layer: only final h is needed

        def step(t, h_prev, whh=whh, bhn=bhn, write_seq=write_seq):
            row = pl.multiple_of(t * B, B)
            gx_t = gx_scr[pl.ds(row, B), :]                       # (B, 3Hp)
            gh = jnp.dot(h_prev.astype(whh.dtype), whh,
                         preferred_element_type=jnp.float32) + bhn
            # Hp is a multiple of 128, so these are clean lane-aligned tile views.
            r = jax.nn.sigmoid(gx_t[:, 0 * Hp:1 * Hp] + gh[:, 0 * Hp:1 * Hp])
            z = jax.nn.sigmoid(gx_t[:, 1 * Hp:2 * Hp] + gh[:, 1 * Hp:2 * Hp])
            n = jnp.tanh(gx_t[:, 2 * Hp:3 * Hp] + r * gh[:, 2 * Hp:3 * Hp])
            h_new = (1.0 - z) * n + z * h_prev
            if write_seq:
                seq_scr[pl.ds(row, B), :] = h_new
            return h_new

        # PyTorch forward uses zero h0 per layer.
        h = jax.lax.fori_loop(0, T, step, jnp.zeros((B, Hp), jnp.float32),
                              unroll=True)

    # ---- FC head on the final hidden state of the last layer ----
    out_ref[...] = (jnp.dot(h.astype(fc_w_ref.dtype), fc_w_ref[...],
                            preferred_element_type=jnp.float32)
                    + fc_b_ref[...]).astype(out_ref.dtype)


def _fused_gru_fc(x_flat, layer_params, fc_w_t, fc_b, *, T, B, Hp):
    """x_flat: (T*B, D) time-major-flattened, batch already padded to B (mult of 8)."""
    D = x_flat.shape[1]
    Cp = fc_w_t.shape[1]
    num_layers = len(layer_params)

    inputs = [x_flat]
    in_specs = [pl.BlockSpec((T * B, D), lambda i: (0, 0))]
    for p in layer_params:
        for name in ("wih_t", "whh_t", "bx", "bhn"):
            a = p[name]
            inputs.append(a)
            in_specs.append(pl.BlockSpec(a.shape, lambda i, nd=a.ndim: (0,) * nd))
    for a in (fc_w_t, fc_b):
        inputs.append(a)
        in_specs.append(pl.BlockSpec(a.shape, lambda i, nd=a.ndim: (0,) * nd))

    kernel = functools.partial(_fused_gru_fc_kernel,
                               num_layers=num_layers, T=T, B=B, Hp=Hp)

    return pl.pallas_call(
        kernel,
        out_shape=jax.ShapeDtypeStruct((B, Cp), jnp.float32),
        grid_spec=pltpu.PrefetchScalarGridSpec(
            num_scalar_prefetch=0,
            grid=(1,),
            in_specs=in_specs,
            out_specs=pl.BlockSpec((B, Cp), lambda i: (0, 0)),
            scratch_shapes=[
                pltpu.VMEM((T * B, Hp), jnp.float32),       # inter-layer sequence
                pltpu.VMEM((T * B, 3 * Hp), jnp.float32),   # hoisted gx slab
            ],
        ),
        compiler_params=pltpu.CompilerParams(
            dimension_semantics=("arbitrary",)),
    )(*inputs)


# ---------------------------------------------------------------------------
# Parameter preparation (pad to lane/sublane tiles, fold biases, transpose)
# ---------------------------------------------------------------------------

def _round_up(n, m):
    return ((n + m - 1) // m) * m


def _prepare_kernel_params(params, *, lane=128, param_dtype=jnp.float32):
    """PyTorch-layout params -> padded, transposed, bias-folded kernel params.

    Zero padding of the hidden/class dims is exact: padded hidden units stay 0 for
    all t (zero weights, zero biases, zero h0) and contribute nothing to real outputs.
    """
    H = params["layers"][0]["w_hh"].shape[1]
    Hp = _round_up(H, lane)
    prepared = []
    for l, p in enumerate(params["layers"]):
        w_ih, w_hh = p["w_ih"], p["w_hh"]
        b_ih, b_hh = p["b_ih"], p["b_hh"]
        d_in = w_ih.shape[1]
        in_rows = d_in if l == 0 else Hp      # hidden inputs arrive padded to Hp
        wih_t = jnp.zeros((in_rows, 3 * Hp), jnp.float32)
        whh_t = jnp.zeros((Hp, 3 * Hp), jnp.float32)
        bx = jnp.zeros((1, 3 * Hp), jnp.float32)
        bhn = jnp.zeros((1, 3 * Hp), jnp.float32)
        for g in range(3):
            wih_t = wih_t.at[:d_in, g * Hp:g * Hp + H].set(w_ih[g * H:(g + 1) * H, :].T)
            whh_t = whh_t.at[:H, g * Hp:g * Hp + H].set(w_hh[g * H:(g + 1) * H, :].T)
        # Fold b_ih + b_hh for the r/z gates into the hoisted projection bias;
        # keep b_hn separate because it sits inside r * (h @ W_hn^T + b_hn).
        bx = bx.at[0, 0 * Hp:0 * Hp + H].set(b_ih[0:H] + b_hh[0:H])
        bx = bx.at[0, 1 * Hp:1 * Hp + H].set(b_ih[H:2 * H] + b_hh[H:2 * H])
        bx = bx.at[0, 2 * Hp:2 * Hp + H].set(b_ih[2 * H:3 * H])
        bhn = bhn.at[0, 2 * Hp:2 * Hp + H].set(b_hh[2 * H:3 * H])
        prepared.append({
            "wih_t": wih_t.astype(param_dtype),
            "whh_t": whh_t.astype(param_dtype),
            "bx": bx,
            "bhn": bhn,
        })
    C = params["fc_w"].shape[0]
    Cp = _round_up(C, lane)
    fc_w_t = jnp.zeros((Hp, Cp), jnp.float32).at[:H, :C].set(params["fc_w"].T)
    fc_b = jnp.zeros((1, Cp), jnp.float32).at[0, :C].set(params["fc_b"])
    return prepared, fc_w_t.astype(param_dtype), fc_b, Hp, Cp


# ---------------------------------------------------------------------------
# Public forward (matches PyTorch GRU module semantics)
# ---------------------------------------------------------------------------

@jax.jit
def gru_forward(params, x):
    """x: (B, T, D) batch-first, like the PyTorch module. Returns (B, num_classes)."""
    B, T, D = x.shape
    C = params["fc_w"].shape[0]
    layers, fc_w_t, fc_b, Hp, Cp = _prepare_kernel_params(params)

    # Pad batch up to the 8-sublane granularity so every tile is sublane-dense.
    Bp = max(8, _round_up(B, 8))
    x_tm = jnp.transpose(x, (1, 0, 2)).astype(jnp.float32)    # (T, B, D) time-major
    if Bp != B:
        x_tm = jnp.pad(x_tm, ((0, 0), (0, Bp - B), (0, 0)))
    x_flat = x_tm.reshape(T * Bp, D)                          # flatten for hoisted matmul

    out = _fused_gru_fc(x_flat, layers, fc_w_t, fc_b, T=T, B=Bp, Hp=Hp)
    return out[:B, :C]


# ---------------------------------------------------------------------------
# Init (PyTorch layout) and pure-JAX reference
# ---------------------------------------------------------------------------

def init_gru_params(key, input_size, hidden_size, num_layers, num_classes):
    """Deterministic init mimicking PyTorch's U(-1/sqrt(H), 1/sqrt(H)); PyTorch layout."""
    params = {"layers": []}
    k = 1.0 / float(hidden_size) ** 0.5
    for l in range(num_layers):
        in_sz = input_size if l == 0 else hidden_size
        key, k1, k2, k3, k4 = jax.random.split(key, 5)
        params["layers"].append({
            "w_ih": jax.random.uniform(k1, (3 * hidden_size, in_sz), jnp.float32, -k, k),
            "w_hh": jax.random.uniform(k2, (3 * hidden_size, hidden_size), jnp.float32, -k, k),
            "b_ih": jax.random.uniform(k3, (3 * hidden_size,), jnp.float32, -k, k),
            "b_hh": jax.random.uniform(k4, (3 * hidden_size,), jnp.float32, -k, k),
        })
    key, k1, k2 = jax.random.split(key, 3)
    params["fc_w"] = jax.random.uniform(k1, (num_classes, hidden_size), jnp.float32, -k, k)
    params["fc_b"] = jax.random.uniform(k2, (num_classes,), jnp.float32, -k, k)
    return params


def gru_reference(params, x):
    B, T, D = x.shape
    seq = x.astype(jnp.float32)
    for p in params["layers"]:
        H = p["w_hh"].shape[1]
        h = jnp.zeros((B, H), jnp.float32)
        outs = []
        for t in range(T):
            gx = seq[:, t, :] @ p["w_ih"].T + p["b_ih"]
            gh = h @ p["w_hh"].T + p["b_hh"]
            r = jax.nn.sigmoid(gx[:, :H] + gh[:, :H])
            z = jax.nn.sigmoid(gx[:, H:2 * H] + gh[:, H:2 * H])
            n = jnp.tanh(gx[:, 2 * H:] + r * gh[:, 2 * H:])
            h = (1.0 - z) * n + z * h
            outs.append(h)
        seq = jnp.stack(outs, axis=1)
    return seq[:, -1, :] @ params["fc_w"].T + params["fc_b"]


# ---------------------------------------------------------------------------
# Main
# ---------------------------------------------------------------------------

if __name__ == "__main__":
    B, T = 2, 8
    input_size, hidden_size, num_layers, num_classes = 16, 32, 2, 10

    key = jax.random.PRNGKey(0)
    key, xkey = jax.random.split(key)
    x = jax.random.normal(xkey, (B, T, input_size), jnp.float32)

    params = init_gru_params(key, input_size, hidden_size, num_layers, num_classes)

    out = gru_forward(params, x)
    out = jax.block_until_ready(out)

    ref = gru_reference(params, x)
    assert out.shape == (B, num_classes)
    max_err = float(jnp.max(jnp.abs(out - ref)))
    assert jnp.allclose(out, ref, atol=1e-4, rtol=1e-4), \
        f"mismatch vs pure-JAX reference (max abs err {max_err})"

    print("KERNEL_OK")
</pallas_src>

<mosaic_0001>
module attributes {stable_mosaic.version = 11 : i64} {
  func.func @_fused_gru_fc_kernel(%arg0: i32, %arg1: memref<64x16xf32, #tpu.memory_space<vmem>>, %arg2: memref<16x384xf32, #tpu.memory_space<vmem>>, %arg3: memref<128x384xf32, #tpu.memory_space<vmem>>, %arg4: memref<1x384xf32, #tpu.memory_space<vmem>>, %arg5: memref<1x384xf32, #tpu.memory_space<vmem>>, %arg6: memref<128x384xf32, #tpu.memory_space<vmem>>, %arg7: memref<128x384xf32, #tpu.memory_space<vmem>>, %arg8: memref<1x384xf32, #tpu.memory_space<vmem>>, %arg9: memref<1x384xf32, #tpu.memory_space<vmem>>, %arg10: memref<128x128xf32, #tpu.memory_space<vmem>>, %arg11: memref<1x128xf32, #tpu.memory_space<vmem>>, %arg12: memref<8x128xf32, #tpu.memory_space<vmem>>, %arg13: memref<64x128xf32, #tpu.memory_space<vmem>>, %arg14: memref<64x384xf32, #tpu.memory_space<vmem>>) attributes {dimension_semantics = [#tpu.dimension_semantics<arbitrary>], iteration_bounds = array<i64: 1>, scalar_prefetch = 0 : i64, scratch_operands = 2 : i64, tpu.core_type = #tpu.core_type<tc>, window_params = [{pipeline_mode = #tpu.pipeline_mode<synchronous>, transform_indices = @transform_0, window_bounds = array<i64: 64, 16>}, {pipeline_mode = #tpu.pipeline_mode<synchronous>, transform_indices = @transform_1, window_bounds = array<i64: 16, 384>}, {pipeline_mode = #tpu.pipeline_mode<synchronous>, transform_indices = @transform_2, window_bounds = array<i64: 128, 384>}, {pipeline_mode = #tpu.pipeline_mode<synchronous>, transform_indices = @transform_3, window_bounds = array<i64: 1, 384>}, {pipeline_mode = #tpu.pipeline_mode<synchronous>, transform_indices = @transform_4, window_bounds = array<i64: 1, 384>}, {pipeline_mode = #tpu.pipeline_mode<synchronous>, transform_indices = @transform_5, window_bounds = array<i64: 128, 384>}, {pipeline_mode = #tpu.pipeline_mode<synchronous>, transform_indices = @transform_6, window_bounds = array<i64: 128, 384>}, {pipeline_mode = #tpu.pipeline_mode<synchronous>, transform_indices = @transform_7, window_bounds = array<i64: 1, 384>}, {pipeline_mode = #tpu.pipeline_mode<synchronous>, transform_indices = @transform_8, window_bounds = array<i64: 1, 384>}, {pipeline_mode = #tpu.pipeline_mode<synchronous>, transform_indices = @transform_9, window_bounds = array<i64: 128, 128>}, {pipeline_mode = #tpu.pipeline_mode<synchronous>, transform_indices = @transform_10, window_bounds = array<i64: 1, 128>}, {pipeline_mode = #tpu.pipeline_mode<synchronous>, transform_indices = @transform_11, window_bounds = array<i64: 8, 128>}]} {
    %c0 = arith.constant 0 : index
    %c0_0 = arith.constant 0 : index
    %0 = vector.load %arg1[%c0, %c0_0] : memref<64x16xf32, #tpu.memory_space<vmem>>, vector<64x16xf32>
    %c0_1 = arith.constant 0 : index
    %c0_2 = arith.constant 0 : index
    %1 = vector.load %arg2[%c0_1, %c0_2] : memref<16x384xf32, #tpu.memory_space<vmem>>, vector<16x384xf32>
    %cst = arith.constant dense<0.000000e+00> : vector<64x384xf32>
    %2 = tpu.matmul %0, %1, %cst {dimension_numbers = #tpu.dot_dimension_numbers<[1], [0], [0], [1], [0, 0, 1, 1], [], []>} : vector<64x16xf32>, vector<16x384xf32>, vector<64x384xf32> -> vector<64x384xf32>
    %c0_3 = arith.constant 0 : index
    %c0_4 = arith.constant 0 : index
    %3 = vector.load %arg4[%c0_3, %c0_4] : memref<1x384xf32, #tpu.memory_space<vmem>>, vector<1x384xf32>
    %4 = vector.broadcast %3 : vector<1x384xf32> to vector<64x384xf32>
    %5 = arith.addf %2, %4 : vector<64x384xf32>
    %c0_5 = arith.constant 0 : index
    %c0_6 = arith.constant 0 : index
    %6 = vector.load %arg14[%c0_5, %c0_6] : memref<64x384xf32, #tpu.memory_space<vmem>>, vector<64x384xf32>
    tpu.vector_store %arg14[%c0_5, %c0_6], %5 {strides = array<i32>} : memref<64x384xf32, #tpu.memory_space<vmem>>, vector<64x384xf32>,
    %c0_7 = arith.constant 0 : index
    %c0_8 = arith.constant 0 : index
    %7 = vector.load %arg3[%c0_7, %c0_8] : memref<128x384xf32, #tpu.memory_space<vmem>>, vector<128x384xf32>
    %c0_9 = arith.constant 0 : index
    %c0_10 = arith.constant 0 : index
    %8 = vector.load %arg5[%c0_9, %c0_10] : memref<1x384xf32, #tpu.memory_space<vmem>>, vector<1x384xf32>
    %cst_11 = arith.constant 0.000000e+00 : f32
    %9 = vector.broadcast %cst_11 : f32 to vector<8x128xf32>
    %c0_i32 = arith.constant 0 : i32
    %c8_i32 = arith.constant 8 : i32
    %10 = arith.muli %c0_i32, %c8_i32 : i32
    %11 = tpu.assume_multiple %10, 8 : i32
    %12 = arith.index_cast %11 : i32 to index
    %c0_12 = arith.constant 0 : index
    %13 = vector.load %arg14[%12, %c0_12] : memref<64x384xf32, #tpu.memory_space<vmem>>, vector<8x384xf32>
    %cst_13 = arith.constant dense<0.000000e+00> : vector<8x384xf32>
    %14 = tpu.matmul %9, %7, %cst_13 {dimension_numbers = #tpu.dot_dimension_numbers<[1], [0], [0], [1], [0, 0, 1, 1], [], []>} : vector<8x128xf32>, vector<128x384xf32>, vector<8x384xf32> -> vector<8x384xf32>
    %15 = vector.broadcast %8 : vector<1x384xf32> to vector<8x384xf32>
    %16 = arith.addf %14, %15 : vector<8x384xf32>
    %17 = vector.extract_strided_slice %13 {offsets = [0, 0], sizes = [8, 128], strides = [1, 1]} : vector<8x384xf32> to vector<8x128xf32>
    %18 = vector.extract_strided_slice %16 {offsets = [0, 0], sizes = [8, 128], strides = [1, 1]} : vector<8x384xf32> to vector<8x128xf32>
    %19 = arith.addf %17, %18 : vector<8x128xf32>
    %20 = arith.negf %19 : vector<8x128xf32>
    %21 = math.exp %20 : vector<8x128xf32>
    %cst_14 = arith.constant 1.000000e+00 : f32
    %22 = vector.broadcast %cst_14 : f32 to vector<8x128xf32>
    %23 = arith.addf %22, %21 : vector<8x128xf32>
    %24 = arith.divf %22, %23 : vector<8x128xf32>
    %25 = vector.extract_strided_slice %13 {offsets = [0, 128], sizes = [8, 128], strides = [1, 1]} : vector<8x384xf32> to vector<8x128xf32>
    %26 = vector.extract_strided_slice %16 {offsets = [0, 128], sizes = [8, 128], strides = [1, 1]} : vector<8x384xf32> to vector<8x128xf32>
    %27 = arith.addf %25, %26 : vector<8x128xf32>
    %28 = arith.negf %27 : vector<8x128xf32>
    %29 = math.exp %28 : vector<8x128xf32>
    %cst_15 = arith.constant 1.000000e+00 : f32
    %30 = vector.broadcast %cst_15 : f32 to vector<8x128xf32>
    %31 = arith.addf %30, %29 : vector<8x128xf32>
    %32 = arith.divf %30, %31 : vector<8x128xf32>
    %33 = vector.extract_strided_slice %13 {offsets = [0, 256], sizes = [8, 128], strides = [1, 1]} : vector<8x384xf32> to vector<8x128xf32>
    %34 = vector.extract_strided_slice %16 {offsets = [0, 256], sizes = [8, 128], strides = [1, 1]} : vector<8x384xf32> to vector<8x128xf32>
    %35 = arith.mulf %24, %34 : vector<8x128xf32>
    %36 = arith.addf %33, %35 : vector<8x128xf32>
    %37 = math.tanh %36 : vector<8x128xf32>
    %cst_16 = arith.constant 1.000000e+00 : f32
    %38 = vector.broadcast %cst_16 : f32 to vector<8x128xf32>
    %39 = arith.subf %38, %32 : vector<8x128xf32>
    %40 = arith.mulf %39, %37 : vector<8x128xf32>
    %41 = arith.mulf %32, %9 : vector<8x128xf32>
    %42 = arith.addf %40, %41 : vector<8x128xf32>
    %43 = arith.index_cast %11 : i32 to index
    %c0_17 = arith.constant 0 : index
    %44 = vector.load %arg13[%43, %c0_17] : memref<64x128xf32, #tpu.memory_space<vmem>>, vector<8x128xf32>
    tpu.vector_store %arg13[%43, %c0_17], %42 {strides = array<i32>} : memref<64x128xf32, #tpu.memory_space<vmem>>, vector<8x128xf32>,
    %c1_i32 = arith.constant 1 : i32
    %c8_i32_18 = arith.constant 8 : i32
    %45 = arith.muli %c1_i32, %c8_i32_18 : i32
    %46 = tpu.assume_multiple %45, 8 : i32
    %47 = arith.index_cast %46 : i32 to index
    %c0_19 = arith.constant 0 : index
    %48 = vector.load %arg14[%47, %c0_19] : memref<64x384xf32, #tpu.memory_space<vmem>>, vector<8x384xf32>
    %cst_20 = arith.constant dense<0.000000e+00> : vector<8x384xf32>
    %49 = tpu.matmul %42, %7, %cst_20 {dimension_numbers = #tpu.dot_dimension_numbers<[1], [0], [0], [1], [0, 0, 1, 1], [], []>} : vector<8x128xf32>, vector<128x384xf32>, vector<8x384xf32> -> vector<8x384xf32>
    %50 = vector.broadcast %8 : vector<1x384xf32> to vector<8x384xf32>
    %51 = arith.addf %49, %50 : vector<8x384xf32>
    %52 = vector.extract_strided_slice %48 {offsets = [0, 0], sizes = [8, 128], strides = [1, 1]} : vector<8x384xf32> to vector<8x128xf32>
    %53 = vector.extract_strided_slice %51 {offsets = [0, 0], sizes = [8, 128], strides = [1, 1]} : vector<8x384xf32> to vector<8x128xf32>
    %54 = arith.addf %52, %53 : vector<8x128xf32>
    %55 = arith.negf %54 : vector<8x128xf32>
    %56 = math.exp %55 : vector<8x128xf32>
    %cst_21 = arith.constant 1.000000e+00 : f32
    %57 = vector.broadcast %cst_21 : f32 to vector<8x128xf32>
    %58 = arith.addf %57, %56 : vector<8x128xf32>
    %59 = arith.divf %57, %58 : vector<8x128xf32>
    %60 = vector.extract_strided_slice %48 {offsets = [0, 128], sizes = [8, 128], strides = [1, 1]} : vector<8x384xf32> to vector<8x128xf32>
    %61 = vector.extract_strided_slice %51 {offsets = [0, 128], sizes = [8, 128], strides = [1, 1]} : vector<8x384xf32> to vector<8x128xf32>
    %62 = arith.addf %60, %61 : vector<8x128xf32>
    %63 = arith.negf %62 : vector<8x128xf32>
    %64 = math.exp %63 : vector<8x128xf32>
    %cst_22 = arith.constant 1.000000e+00 : f32
    %65 = vector.broadcast %cst_22 : f32 to vector<8x128xf32>
    %66 = arith.addf %65, %64 : vector<8x128xf32>
    %67 = arith.divf %65, %66 : vector<8x128xf32>
    %68 = vector.extract_strided_slice %48 {offsets = [0, 256], sizes = [8, 128], strides = [1, 1]} : vector<8x384xf32> to vector<8x128xf32>
    %69 = vector.extract_strided_slice %51 {offsets = [0, 256], sizes = [8, 128], strides = [1, 1]} : vector<8x384xf32> to vector<8x128xf32>
    %70 = arith.mulf %59, %69 : vector<8x128xf32>
    %71 = arith.addf %68, %70 : vector<8x128xf32>
    %72 = math.tanh %71 : vector<8x128xf32>
    %cst_23 = arith.constant 1.000000e+00 : f32
    %73 = vector.broadcast %cst_23 : f32 to vector<8x128xf32>
    %74 = arith.subf %73, %67 : vector<8x128xf32>
    %75 = arith.mulf %74, %72 : vector<8x128xf32>
    %76 = arith.mulf %67, %42 : vector<8x128xf32>
    %77 = arith.addf %75, %76 : vector<8x128xf32>
    %78 = arith.index_cast %46 : i32 to index
    %c0_24 = arith.constant 0 : index
    %79 = vector.load %arg13[%78, %c0_24] : memref<64x128xf32, #tpu.memory_space<vmem>>, vector<8x128xf32>
    tpu.vector_store %arg13[%78, %c0_24], %77 {strides = array<i32>} : memref<64x128xf32, #tpu.memory_space<vmem>>, vector<8x128xf32>,
    %c2_i32 = arith.constant 2 : i32
    %c8_i32_25 = arith.constant 8 : i32
    %80 = arith.muli %c2_i32, %c8_i32_25 : i32
    %81 = tpu.assume_multiple %80, 8 : i32
    %82 = arith.index_cast %81 : i32 to index
    %c0_26 = arith.constant 0 : index
    %83 = vector.load %arg14[%82, %c0_26] : memref<64x384xf32, #tpu.memory_space<vmem>>, vector<8x384xf32>
    %cst_27 = arith.constant dense<0.000000e+00> : vector<8x384xf32>
    %84 = tpu.matmul %77, %7, %cst_27 {dimension_numbers = #tpu.dot_dimension_numbers<[1], [0], [0], [1], [0, 0, 1, 1], [], []>} : vector<8x128xf32>, vector<128x384xf32>, vector<8x384xf32> -> vector<8x384xf32>
    %85 = vector.broadcast %8 : vector<1x384xf32> to vector<8x384xf32>
    %86 = arith.addf %84, %85 : vector<8x384xf32>
    %87 = vector.extract_strided_slice %83 {offsets = [0, 0], sizes = [8, 128], strides = [1, 1]} : vector<8x384xf32> to vector<8x128xf32>
    %88 = vector.extract_strided_slice %86 {offsets = [0, 0], sizes = [8, 128], strides = [1, 1]} : vector<8x384xf32> to vector<8x128xf32>
    %89 = arith.addf %87, %88 : vector<8x128xf32>
    %90 = arith.negf %89 : vector<8x128xf32>
    %91 = math.exp %90 : vector<8x128xf32>
    %cst_28 = arith.constant 1.000000e+00 : f32
    %92 = vector.broadcast %cst_28 : f32 to vector<8x128xf32>
    %93 = arith.addf %92, %91 : vector<8x128xf32>
    %94 = arith.divf %92, %93 : vector<8x128xf32>
    %95 = vector.extract_strided_slice %83 {offsets = [0, 128], sizes = [8, 128], strides = [1, 1]} : vector<8x384xf32> to vector<8x128xf32>
    %96 = vector.extract_strided_slice %86 {offsets = [0, 128], sizes = [8, 128], strides = [1, 1]} : vector<8x384xf32> to vector<8x128xf32>
    %97 = arith.addf %95, %96 : vector<8x128xf32>
    %98 = arith.negf %97 : vector<8x128xf32>
    %99 = math.exp %98 : vector<8x128xf32>
    %cst_29 = arith.constant 1.000000e+00 : f32
    %100 = vector.broadcast %cst_29 : f32 to vector<8x128xf32>
    %101 = arith.addf %100, %99 : vector<8x128xf32>
    %102 = arith.divf %100, %101 : vector<8x128xf32>
    %103 = vector.extract_strided_slice %83 {offsets = [0, 256], sizes = [8, 128], strides = [1, 1]} : vector<8x384xf32> to vector<8x128xf32>
    %104 = vector.extract_strided_slice %86 {offsets = [0, 256], sizes = [8, 128], strides = [1, 1]} : vector<8x384xf32> to vector<8x128xf32>
    %105 = arith.mulf %94, %104 : vector<8x128xf32>
    %106 = arith.addf %103, %105 : vector<8x128xf32>
    %107 = math.tanh %106 : vector<8x128xf32>
    %cst_30 = arith.constant 1.000000e+00 : f32
    %108 = vector.broadcast %cst_30 : f32 to vector<8x128xf32>
    %109 = arith.subf %108, %102 : vector<8x128xf32>
    %110 = arith.mulf %109, %107 : vector<8x128xf32>
    %111 = arith.mulf %102, %77 : vector<8x128xf32>
    %112 = arith.addf %110, %111 : vector<8x128xf32>
    %113 = arith.index_cast %81 : i32 to index
    %c0_31 = arith.constant 0 : index
    %114 = vector.load %arg13[%113, %c0_31] : memref<64x128xf32, #tpu.memory_space<vmem>>, vector<8x128xf32>
    tpu.vector_store %arg13[%113, %c0_31], %112 {strides = array<i32>} : memref<64x128xf32, #tpu.memory_space<vmem>>, vector<8x128xf32>,
    %c3_i32 = arith.constant 3 : i32
    %c8_i32_32 = arith.constant 8 : i32
    %115 = arith.muli %c3_i32, %c8_i32_32 : i32
    %116 = tpu.assume_multiple %115, 8 : i32
    %117 = arith.index_cast %116 : i32 to index
    %c0_33 = arith.constant 0 : index
    %118 = vector.load %arg14[%117, %c0_33] : memref<64x384xf32, #tpu.memory_space<vmem>>, vector<8x384xf32>
    %cst_34 = arith.constant dense<0.000000e+00> : vector<8x384xf32>
    %119 = tpu.matmul %112, %7, %cst_34 {dimension_numbers = #tpu.dot_dimension_numbers<[1], [0], [0], [1], [0, 0, 1, 1], [], []>} : vector<8x128xf32>, vector<128x384xf32>, vector<8x384xf32> -> vector<8x384xf32>
    %120 = vector.broadcast %8 : vector<1x384xf32> to vector<8x384xf32>
    %121 = arith.addf %119, %120 : vector<8x384xf32>
    %122 = vector.extract_strided_slice %118 {offsets = [0, 0], sizes = [8, 128], strides = [1, 1]} : vector<8x384xf32> to vector<8x128xf32>
    %123 = vector.extract_strided_slice %121 {offsets = [0, 0], sizes = [8, 128], strides = [1, 1]} : vector<8x384xf32> to vector<8x128xf32>
    %124 = arith.addf %122, %123 : vector<8x128xf32>
    %125 = arith.negf %124 : vector<8x128xf32>
    %126 = math.exp %125 : vector<8x128xf32>
    %cst_35 = arith.constant 1.000000e+00 : f32
    %127 = vector.broadcast %cst_35 : f32 to vector<8x128xf32>
    %128 = arith.addf %127, %126 : vector<8x128xf32>
    %129 = arith.divf %127, %128 : vector<8x128xf32>
    %130 = vector.extract_strided_slice %118 {offsets = [0, 128], sizes = [8, 128], strides = [1, 1]} : vector<8x384xf32> to vector<8x128xf32>
    %131 = vector.extract_strided_slice %121 {offsets = [0, 128], sizes = [8, 128], strides = [1, 1]} : vector<8x384xf32> to vector<8x128xf32>
    %132 = arith.addf %130, %131 : vector<8x128xf32>
    %133 = arith.negf %132 : vector<8x128xf32>
    %134 = math.exp %133 : vector<8x128xf32>
    %cst_36 = arith.constant 1.000000e+00 : f32
    %135 = vector.broadcast %cst_36 : f32 to vector<8x128xf32>
    %136 = arith.addf %135, %134 : vector<8x128xf32>
    %137 = arith.divf %135, %136 : vector<8x128xf32>
    %138 = vector.extract_strided_slice %118 {offsets = [0, 256], sizes = [8, 128], strides = [1, 1]} : vector<8x384xf32> to vector<8x128xf32>
    %139 = vector.extract_strided_slice %121 {offsets = [0, 256], sizes = [8, 128], strides = [1, 1]} : vector<8x384xf32> to vector<8x128xf32>
    %140 = arith.mulf %129, %139 : vector<8x128xf32>
    %141 = arith.addf %138, %140 : vector<8x128xf32>
    %142 = math.tanh %141 : vector<8x128xf32>
    %cst_37 = arith.constant 1.000000e+00 : f32
    %143 = vector.broadcast %cst_37 : f32 to vector<8x128xf32>
    %144 = arith.subf %143, %137 : vector<8x128xf32>
    %145 = arith.mulf %144, %142 : vector<8x128xf32>
    %146 = arith.mulf %137, %112 : vector<8x128xf32>
    %147 = arith.addf %145, %146 : vector<8x128xf32>
    %148 = arith.index_cast %116 : i32 to index
    %c0_38 = arith.constant 0 : index
    %149 = vector.load %arg13[%148, %c0_38] : memref<64x128xf32, #tpu.memory_space<vmem>>, vector<8x128xf32>
    tpu.vector_store %arg13[%148, %c0_38], %147 {strides = array<i32>} : memref<64x128xf32, #tpu.memory_space<vmem>>, vector<8x128xf32>,
    %c4_i32 = arith.constant 4 : i32
    %c8_i32_39 = arith.constant 8 : i32
    %150 = arith.muli %c4_i32, %c8_i32_39 : i32
    %151 = tpu.assume_multiple %150, 8 : i32
    %152 = arith.index_cast %151 : i32 to index
    %c0_40 = arith.constant 0 : index
    %153 = vector.load %arg14[%152, %c0_40] : memref<64x384xf32, #tpu.memory_space<vmem>>, vector<8x384xf32>
    %cst_41 = arith.constant dense<0.000000e+00> : vector<8x384xf32>
    %154 = tpu.matmul %147, %7, %cst_41 {dimension_numbers = #tpu.dot_dimension_numbers<[1], [0], [0], [1], [0, 0, 1, 1], [], []>} : vector<8x128xf32>, vector<128x384xf32>, vector<8x384xf32> -> vector<8x384xf32>
    %155 = vector.broadcast %8 : vector<1x384xf32> to vector<8x384xf32>
    %156 = arith.addf %154, %155 : vector<8x384xf32>
    %157 = vector.extract_strided_slice %153 {offsets = [0, 0], sizes = [8, 128], strides = [1, 1]} : vector<8x384xf32> to vector<8x128xf32>
    %158 = vector.extract_strided_slice %156 {offsets = [0, 0], sizes = [8, 128], strides = [1, 1]} : vector<8x384xf32> to vector<8x128xf32>
    %159 = arith.addf %157, %158 : vector<8x128xf32>
    %160 = arith.negf %159 : vector<8x128xf32>
    %161 = math.exp %160 : vector<8x128xf32>
    %cst_42 = arith.constant 1.000000e+00 : f32
    %162 = vector.broadcast %cst_42 : f32 to vector<8x128xf32>
    %163 = arith.addf %162, %161 : vector<8x128xf32>
    %164 = arith.divf %162, %163 : vector<8x128xf32>
    %165 = vector.extract_strided_slice %153 {offsets = [0, 128], sizes = [8, 128], strides = [1, 1]} : vector<8x384xf32> to vector<8x128xf32>
    %166 = vector.extract_strided_slice %156 {offsets = [0, 128], sizes = [8, 128], strides = [1, 1]} : vector<8x384xf32> to vector<8x128xf32>
    %167 = arith.addf %165, %166 : vector<8x128xf32>
    %168 = arith.negf %167 : vector<8x128xf32>
    %169 = math.exp %168 : vector<8x128xf32>
    %cst_43 = arith.constant 1.000000e+00 : f32
    %170 = vector.broadcast %cst_43 : f32 to vector<8x128xf32>
    %171 = arith.addf %170, %169 : vector<8x128xf32>
    %172 = arith.divf %170, %171 : vector<8x128xf32>
    %173 = vector.extract_strided_slice %153 {offsets = [0, 256], sizes = [8, 128], strides = [1, 1]} : vector<8x384xf32> to vector<8x128xf32>
    %174 = vector.extract_strided_slice %156 {offsets = [0, 256], sizes = [8, 128], strides = [1, 1]} : vector<8x384xf32> to vector<8x128xf32>
    %175 = arith.mulf %164, %174 : vector<8x128xf32>
    %176 = arith.addf %173, %175 : vector<8x128xf32>
    %177 = math.tanh %176 : vector<8x128xf32>
    %cst_44 = arith.constant 1.000000e+00 : f32
    %178 = vector.broadcast %cst_44 : f32 to vector<8x128xf32>
    %179 = arith.subf %178, %172 : vector<8x128xf32>
    %180 = arith.mulf %179, %177 : vector<8x128xf32>
    %181 = arith.mulf %172, %147 : vector<8x128xf32>
    %182 = arith.addf %180, %181 : vector<8x128xf32>
    %183 = arith.index_cast %151 : i32 to index
    %c0_45 = arith.constant 0 : index
    %184 = vector.load %arg13[%183, %c0_45] : memref<64x128xf32, #tpu.memory_space<vmem>>, vector<8x128xf32>
    tpu.vector_store %arg13[%183, %c0_45], %182 {strides = array<i32>} : memref<64x128xf32, #tpu.memory_space<vmem>>, vector<8x128xf32>,
    %c5_i32 = arith.constant 5 : i32
    %c8_i32_46 = arith.constant 8 : i32
    %185 = arith.muli %c5_i32, %c8_i32_46 : i32
    %186 = tpu.assume_multiple %185, 8 : i32
    %187 = arith.index_cast %186 : i32 to index
    %c0_47 = arith.constant 0 : index
    %188 = vector.load %arg14[%187, %c0_47] : memref<64x384xf32, #tpu.memory_space<vmem>>, vector<8x384xf32>
    %cst_48 = arith.constant dense<0.000000e+00> : vector<8x384xf32>
    %189 = tpu.matmul %182, %7, %cst_48 {dimension_numbers = #tpu.dot_dimension_numbers<[1], [0], [0], [1], [0, 0, 1, 1], [], []>} : vector<8x128xf32>, vector<128x384xf32>, vector<8x384xf32> -> vector<8x384xf32>
    %190 = vector.broadcast %8 : vector<1x384xf32> to vector<8x384xf32>
    %191 = arith.addf %189, %190 : vector<8x384xf32>
    %192 = vector.extract_strided_slice %188 {offsets = [0, 0], sizes = [8, 128], strides = [1, 1]} : vector<8x384xf32> to vector<8x128xf32>
    %193 = vector.extract_strided_slice %191 {offsets = [0, 0], sizes = [8, 128], strides = [1, 1]} : vector<8x384xf32> to vector<8x128xf32>
    %194 = arith.addf %192, %193 : vector<8x128xf32>
    %195 = arith.negf %194 : vector<8x128xf32>
    %196 = math.exp %195 : vector<8x128xf32>
    %cst_49 = arith.constant 1.000000e+00 : f32
    %197 = vector.broadcast %cst_49 : f32 to vector<8x128xf32>
    %198 = arith.addf %197, %196 : vector<8x128xf32>
    %199 = arith.divf %197, %198 : vector<8x128xf32>
    %200 = vector.extract_strided_slice %188 {offsets = [0, 128], sizes = [8, 128], strides = [1, 1]} : vector<8x384xf32> to vector<8x128xf32>
    %201 = vector.extract_strided_slice %191 {offsets = [0, 128], sizes = [8, 128], strides = [1, 1]} : vector<8x384xf32> to vector<8x128xf32>
    %202 = arith.addf %200, %201 : vector<8x128xf32>
    %203 = arith.negf %202 : vector<8x128xf32>
    %204 = math.exp %203 : vector<8x128xf32>
    %cst_50 = arith.constant 1.000000e+00 : f32
    %205 = vector.broadcast %cst_50 : f32 to vector<8x128xf32>
    %206 = arith.addf %205, %204 : vector<8x128xf32>
    %207 = arith.divf %205, %206 : vector<8x128xf32>
    %208 = vector.extract_strided_slice %188 {offsets = [0, 256], sizes = [8, 128], strides = [1, 1]} : vector<8x384xf32> to vector<8x128xf32>
    %209 = vector.extract_strided_slice %191 {offsets = [0, 256], sizes = [8, 128], strides = [1, 1]} : vector<8x384xf32> to vector<8x128xf32>
    %210 = arith.mulf %199, %209 : vector<8x128xf32>
    %211 = arith.addf %208, %210 : vector<8x128xf32>
    %212 = math.tanh %211 : vector<8x128xf32>
    %cst_51 = arith.constant 1.000000e+00 : f32
    %213 = vector.broadcast %cst_51 : f32 to vector<8x128xf32>
    %214 = arith.subf %213, %207 : vector<8x128xf32>
    %215 = arith.mulf %214, %212 : vector<8x128xf32>
    %216 = arith.mulf %207, %182 : vector<8x128xf32>
    %217 = arith.addf %215, %216 : vector<8x128xf32>
    %218 = arith.index_cast %186 : i32 to index
    %c0_52 = arith.constant 0 : index
    %219 = vector.load %arg13[%218, %c0_52] : memref<64x128xf32, #tpu.memory_space<vmem>>, vector<8x128xf32>
    tpu.vector_store %arg13[%218, %c0_52], %217 {strides = array<i32>} : memref<64x128xf32, #tpu.memory_space<vmem>>, vector<8x128xf32>,
    %c6_i32 = arith.constant 6 : i32
    %c8_i32_53 = arith.constant 8 : i32
    %220 = arith.muli %c6_i32, %c8_i32_53 : i32
    %221 = tpu.assume_multiple %220, 8 : i32
    %222 = arith.index_cast %221 : i32 to index
    %c0_54 = arith.constant 0 : index
    %223 = vector.load %arg14[%222, %c0_54] : memref<64x384xf32, #tpu.memory_space<vmem>>, vector<8x384xf32>
    %cst_55 = arith.constant dense<0.000000e+00> : vector<8x384xf32>
    %224 = tpu.matmul %217, %7, %cst_55 {dimension_numbers = #tpu.dot_dimension_numbers<[1], [0], [0], [1], [0, 0, 1, 1], [], []>} : vector<8x128xf32>, vector<128x384xf32>, vector<8x384xf32> -> vector<8x384xf32>
    %225 = vector.broadcast %8 : vector<1x384xf32> to vector<8x384xf32>
    %226 = arith.addf %224, %225 : vector<8x384xf32>
    %227 = vector.extract_strided_slice %223 {offsets = [0, 0], sizes = [8, 128], strides = [1, 1]} : vector<8x384xf32> to vector<8x128xf32>
    %228 = vector.extract_strided_slice %226 {offsets = [0, 0], sizes = [8, 128], strides = [1, 1]} : vector<8x384xf32> to vector<8x128xf32>
    %229 = arith.addf %227, %228 : vector<8x128xf32>
    %230 = arith.negf %229 : vector<8x128xf32>
    %231 = math.exp %230 : vector<8x128xf32>
    %cst_56 = arith.constant 1.000000e+00 : f32
    %232 = vector.broadcast %cst_56 : f32 to vector<8x128xf32>
    %233 = arith.addf %232, %231 : vector<8x128xf32>
    %234 = arith.divf %232, %233 : vector<8x128xf32>
    %235 = vector.extract_strided_slice %223 {offsets = [0, 128], sizes = [8, 128], strides = [1, 1]} : vector<8x384xf32> to vector<8x128xf32>
    %236 = vector.extract_strided_slice %226 {offsets = [0, 128], sizes = [8, 128], strides = [1, 1]} : vector<8x384xf32> to vector<8x128xf32>
    %237 = arith.addf %235, %236 : vector<8x128xf32>
    %238 = arith.negf %237 : vector<8x128xf32>
    %239 = math.exp %238 : vector<8x128xf32>
    %cst_57 = arith.constant 1.000000e+00 : f32
    %240 = vector.broadcast %cst_57 : f32 to vector<8x128xf32>
    %241 = arith.addf %240, %239 : vector<8x128xf32>
    %242 = arith.divf %240, %241 : vector<8x128xf32>
    %243 = vector.extract_strided_slice %223 {offsets = [0, 256], sizes = [8, 128], strides = [1, 1]} : vector<8x384xf32> to vector<8x128xf32>
    %244 = vector.extract_strided_slice %226 {offsets = [0, 256], sizes = [8, 128], strides = [1, 1]} : vector<8x384xf32> to vector<8x128xf32>
    %245 = arith.mulf %234, %244 : vector<8x128xf32>
    %246 = arith.addf %243, %245 : vector<8x128xf32>
    %247 = math.tanh %246 : vector<8x128xf32>
    %cst_58 = arith.constant 1.000000e+00 : f32
    %248 = vector.broadcast %cst_58 : f32 to vector<8x128xf32>
    %249 = arith.subf %248, %242 : vector<8x128xf32>
    %250 = arith.mulf %249, %247 : vector<8x128xf32>
    %251 = arith.mulf %242, %217 : vector<8x128xf32>
    %252 = arith.addf %250, %251 : vector<8x128xf32>
    %253 = arith.index_cast %221 : i32 to index
    %c0_59 = arith.constant 0 : index
    %254 = vector.load %arg13[%253, %c0_59] : memref<64x128xf32, #tpu.memory_space<vmem>>, vector<8x128xf32>
    tpu.vector_store %arg13[%253, %c0_59], %252 {strides = array<i32>} : memref<64x128xf32, #tpu.memory_space<vmem>>, vector<8x128xf32>,
    %c7_i32 = arith.constant 7 : i32
    %c8_i32_60 = arith.constant 8 : i32
    %255 = arith.muli %c7_i32, %c8_i32_60 : i32
    %256 = tpu.assume_multiple %255, 8 : i32
    %257 = arith.index_cast %256 : i32 to index
    %c0_61 = arith.constant 0 : index
    %258 = vector.load %arg14[%257, %c0_61] : memref<64x384xf32, #tpu.memory_space<vmem>>, vector<8x384xf32>
    %cst_62 = arith.constant dense<0.000000e+00> : vector<8x384xf32>
    %259 = tpu.matmul %252, %7, %cst_62 {dimension_numbers = #tpu.dot_dimension_numbers<[1], [0], [0], [1], [0, 0, 1, 1], [], []>} : vector<8x128xf32>, vector<128x384xf32>, vector<8x384xf32> -> vector<8x384xf32>
    %260 = vector.broadcast %8 : vector<1x384xf32> to vector<8x384xf32>
    %261 = arith.addf %259, %260 : vector<8x384xf32>
    %262 = vector.extract_strided_slice %258 {offsets = [0, 0], sizes = [8, 128], strides = [1, 1]} : vector<8x384xf32> to vector<8x128xf32>
    %263 = vector.extract_strided_slice %261 {offsets = [0, 0], sizes = [8, 128], strides = [1, 1]} : vector<8x384xf32> to vector<8x128xf32>
    %264 = arith.addf %262, %263 : vector<8x128xf32>
    %265 = arith.negf %264 : vector<8x128xf32>
    %266 = math.exp %265 : vector<8x128xf32>
    %cst_63 = arith.constant 1.000000e+00 : f32
    %267 = vector.broadcast %cst_63 : f32 to vector<8x128xf32>
    %268 = arith.addf %267, %266 : vector<8x128xf32>
    %269 = arith.divf %267, %268 : vector<8x128xf32>
    %270 = vector.extract_strided_slice %258 {offsets = [0, 128], sizes = [8, 128], strides = [1, 1]} : vector<8x384xf32> to vector<8x128xf32>
    %271 = vector.extract_strided_slice %261 {offsets = [0, 128], sizes = [8, 128], strides = [1, 1]} : vector<8x384xf32> to vector<8x128xf32>
    %272 = arith.addf %270, %271 : vector<8x128xf32>
    %273 = arith.negf %272 : vector<8x128xf32>
    %274 = math.exp %273 : vector<8x128xf32>
    %cst_64 = arith.constant 1.000000e+00 : f32
    %275 = vector.broadcast %cst_64 : f32 to vector<8x128xf32>
    %276 = arith.addf %275, %274 : vector<8x128xf32>
    %277 = arith.divf %275, %276 : vector<8x128xf32>
    %278 = vector.extract_strided_slice %258 {offsets = [0, 256], sizes = [8, 128], strides = [1, 1]} : vector<8x384xf32> to vector<8x128xf32>
    %279 = vector.extract_strided_slice %261 {offsets = [0, 256], sizes = [8, 128], strides = [1, 1]} : vector<8x384xf32> to vector<8x128xf32>
    %280 = arith.mulf %269, %279 : vector<8x128xf32>
    %281 = arith.addf %278, %280 : vector<8x128xf32>
    %282 = math.tanh %281 : vector<8x128xf32>
    %cst_65 = arith.constant 1.000000e+00 : f32
    %283 = vector.broadcast %cst_65 : f32 to vector<8x128xf32>
    %284 = arith.subf %283, %277 : vector<8x128xf32>
    %285 = arith.mulf %284, %282 : vector<8x128xf32>
    %286 = arith.mulf %277, %252 : vector<8x128xf32>
    %287 = arith.addf %285, %286 : vector<8x128xf32>
    %288 = arith.index_cast %256 : i32 to index
    %c0_66 = arith.constant 0 : index
    %289 = vector.load %arg13[%288, %c0_66] : memref<64x128xf32, #tpu.memory_space<vmem>>, vector<8x128xf32>
    tpu.vector_store %arg13[%288, %c0_66], %287 {strides = array<i32>} : memref<64x128xf32, #tpu.memory_space<vmem>>, vector<8x128xf32>,
    %c8_i32_67 = arith.constant 8 : i32
    %c0_68 = arith.constant 0 : index
    %c0_69 = arith.constant 0 : index
    %290 = vector.load %arg13[%c0_68, %c0_69] : memref<64x128xf32, #tpu.memory_space<vmem>>, vector<64x128xf32>
    %c0_70 = arith.constant 0 : index
    %c0_71 = arith.constant 0 : index
    %291 = vector.load %arg6[%c0_70, %c0_71] : memref<128x384xf32, #tpu.memory_space<vmem>>, vector<128x384xf32>
    %cst_72 = arith.constant dense<0.000000e+00> : vector<64x384xf32>
    %292 = tpu.matmul %290, %291, %cst_72 {dimension_numbers = #tpu.dot_dimension_numbers<[1], [0], [0], [1], [0, 0, 1, 1], [], []>} : vector<64x128xf32>, vector<128x384xf32>, vector<64x384xf32> -> vector<64x384xf32>
    %c0_73 = arith.constant 0 : index
    %c0_74 = arith.constant 0 : index
    %293 = vector.load %arg8[%c0_73, %c0_74] : memref<1x384xf32, #tpu.memory_space<vmem>>, vector<1x384xf32>
    %294 = vector.broadcast %293 : vector<1x384xf32> to vector<64x384xf32>
    %295 = arith.addf %292, %294 : vector<64x384xf32>
    %c0_75 = arith.constant 0 : index
    %c0_76 = arith.constant 0 : index
    %296 = vector.load %arg14[%c0_75, %c0_76] : memref<64x384xf32, #tpu.memory_space<vmem>>, vector<64x384xf32>
    tpu.vector_store %arg14[%c0_75, %c0_76], %295 {strides = array<i32>} : memref<64x384xf32, #tpu.memory_space<vmem>>, vector<64x384xf32>,
    %c0_77 = arith.constant 0 : index
    %c0_78 = arith.constant 0 : index
    %297 = vector.load %arg7[%c0_77, %c0_78] : memref<128x384xf32, #tpu.memory_space<vmem>>, vector<128x384xf32>
    %c0_79 = arith.constant 0 : index
    %c0_80 = arith.constant 0 : index
    %298 = vector.load %arg9[%c0_79, %c0_80] : memref<1x384xf32, #tpu.memory_space<vmem>>, vector<1x384xf32>
    %cst_81 = arith.constant 0.000000e+00 : f32
    %299 = vector.broadcast %cst_81 : f32 to vector<8x128xf32>
    %c0_i32_82 = arith.constant 0 : i32
    %c8_i32_83 = arith.constant 8 : i32
    %300 = arith.muli %c0_i32_82, %c8_i32_83 : i32
    %301 = tpu.assume_multiple %300, 8 : i32
    %302 = arith.index_cast %301 : i32 to index
    %c0_84 = arith.constant 0 : index
    %303 = vector.load %arg14[%302, %c0_84] : memref<64x384xf32, #tpu.memory_space<vmem>>, vector<8x384xf32>
    %cst_85 = arith.constant dense<0.000000e+00> : vector<8x384xf32>
    %304 = tpu.matmul %299, %297, %cst_85 {dimension_numbers = #tpu.dot_dimension_numbers<[1], [0], [0], [1], [0, 0, 1, 1], [], []>} : vector<8x128xf32>, vector<128x384xf32>, vector<8x384xf32> -> vector<8x384xf32>
    %305 = vector.broadcast %298 : vector<1x384xf32> to vector<8x384xf32>
    %306 = arith.addf %304, %305 : vector<8x384xf32>
    %307 = vector.extract_strided_slice %303 {offsets = [0, 0], sizes = [8, 128], strides = [1, 1]} : vector<8x384xf32> to vector<8x128xf32>
    %308 = vector.extract_strided_slice %306 {offsets = [0, 0], sizes = [8, 128], strides = [1, 1]} : vector<8x384xf32> to vector<8x128xf32>
    %309 = arith.addf %307, %308 : vector<8x128xf32>
    %310 = arith.negf %309 : vector<8x128xf32>
    %311 = math.exp %310 : vector<8x128xf32>
    %cst_86 = arith.constant 1.000000e+00 : f32
    %312 = vector.broadcast %cst_86 : f32 to vector<8x128xf32>
    %313 = arith.addf %312, %311 : vector<8x128xf32>
    %314 = arith.divf %312, %313 : vector<8x128xf32>
    %315 = vector.extract_strided_slice %303 {offsets = [0, 128], sizes = [8, 128], strides = [1, 1]} : vector<8x384xf32> to vector<8x128xf32>
    %316 = vector.extract_strided_slice %306 {offsets = [0, 128], sizes = [8, 128], strides = [1, 1]} : vector<8x384xf32> to vector<8x128xf32>
    %317 = arith.addf %315, %316 : vector<8x128xf32>
    %318 = arith.negf %317 : vector<8x128xf32>
    %319 = math.exp %318 : vector<8x128xf32>
    %cst_87 = arith.constant 1.000000e+00 : f32
    %320 = vector.broadcast %cst_87 : f32 to vector<8x128xf32>
    %321 = arith.addf %320, %319 : vector<8x128xf32>
    %322 = arith.divf %320, %321 : vector<8x128xf32>
    %323 = vector.extract_strided_slice %303 {offsets = [0, 256], sizes = [8, 128], strides = [1, 1]} : vector<8x384xf32> to vector<8x128xf32>
    %324 = vector.extract_strided_slice %306 {offsets = [0, 256], sizes = [8, 128], strides = [1, 1]} : vector<8x384xf32> to vector<8x128xf32>
    %325 = arith.mulf %314, %324 : vector<8x128xf32>
    %326 = arith.addf %323, %325 : vector<8x128xf32>
    %327 = math.tanh %326 : vector<8x128xf32>
    %cst_88 = arith.constant 1.000000e+00 : f32
    %328 = vector.broadcast %cst_88 : f32 to vector<8x128xf32>
    %329 = arith.subf %328, %322 : vector<8x128xf32>
    %330 = arith.mulf %329, %327 : vector<8x128xf32>
    %331 = arith.mulf %322, %299 : vector<8x128xf32>
    %332 = arith.addf %330, %331 : vector<8x128xf32>
    %c1_i32_89 = arith.constant 1 : i32
    %c8_i32_90 = arith.constant 8 : i32
    %333 = arith.muli %c1_i32_89, %c8_i32_90 : i32
    %334 = tpu.assume_multiple %333, 8 : i32
    %335 = arith.index_cast %334 : i32 to index
    %c0_91 = arith.constant 0 : index
    %336 = vector.load %arg14[%335, %c0_91] : memref<64x384xf32, #tpu.memory_space<vmem>>, vector<8x384xf32>
    %cst_92 = arith.constant dense<0.000000e+00> : vector<8x384xf32>
    %337 = tpu.matmul %332, %297, %cst_92 {dimension_numbers = #tpu.dot_dimension_numbers<[1], [0], [0], [1], [0, 0, 1, 1], [], []>} : vector<8x128xf32>, vector<128x384xf32>, vector<8x384xf32> -> vector<8x384xf32>
    %338 = vector.broadcast %298 : vector<1x384xf32> to vector<8x384xf32>
    %339 = arith.addf %337, %338 : vector<8x384xf32>
    %340 = vector.extract_strided_slice %336 {offsets = [0, 0], sizes = [8, 128], strides = [1, 1]} : vector<8x384xf32> to vector<8x128xf32>
    %341 = vector.extract_strided_slice %339 {offsets = [0, 0], sizes = [8, 128], strides = [1, 1]} : vector<8x384xf32> to vector<8x128xf32>
    %342 = arith.addf %340, %341 : vector<8x128xf32>
    %343 = arith.negf %342 : vector<8x128xf32>
    %344 = math.exp %343 : vector<8x128xf32>
    %cst_93 = arith.constant 1.000000e+00 : f32
    %345 = vector.broadcast %cst_93 : f32 to vector<8x128xf32>
    %346 = arith.addf %345, %344 : vector<8x128xf32>
    %347 = arith.divf %345, %346 : vector<8x128xf32>
    %348 = vector.extract_strided_slice %336 {offsets = [0, 128], sizes = [8, 128], strides = [1, 1]} : vector<8x384xf32> to vector<8x128xf32>
    %349 = vector.extract_strided_slice %339 {offsets = [0, 128], sizes = [8, 128], strides = [1, 1]} : vector<8x384xf32> to vector<8x128xf32>
    %350 = arith.addf %348, %349 : vector<8x128xf32>
    %351 = arith.negf %350 : vector<8x128xf32>
    %352 = math.exp %351 : vector<8x128xf32>
    %cst_94 = arith.constant 1.000000e+00 : f32
    %353 = vector.broadcast %cst_94 : f32 to vector<8x128xf32>
    %354 = arith.addf %353, %352 : vector<8x128xf32>
    %355 = arith.divf %353, %354 : vector<8x128xf32>
    %356 = vector.extract_strided_slice %336 {offsets = [0, 256], sizes = [8, 128], strides = [1, 1]} : vector<8x384xf32> to vector<8x128xf32>
    %357 = vector.extract_strided_slice %339 {offsets = [0, 256], sizes = [8, 128], strides = [1, 1]} : vector<8x384xf32> to vector<8x128xf32>
    %358 = arith.mulf %347, %357 : vector<8x128xf32>
    %359 = arith.addf %356, %358 : vector<8x128xf32>
    %360 = math.tanh %359 : vector<8x128xf32>
    %cst_95 = arith.constant 1.000000e+00 : f32
    %361 = vector.broadcast %cst_95 : f32 to vector<8x128xf32>
    %362 = arith.subf %361, %355 : vector<8x128xf32>
    %363 = arith.mulf %362, %360 : vector<8x128xf32>
    %364 = arith.mulf %355, %332 : vector<8x128xf32>
    %365 = arith.addf %363, %364 : vector<8x128xf32>
    %c2_i32_96 = arith.constant 2 : i32
    %c8_i32_97 = arith.constant 8 : i32
    %366 = arith.muli %c2_i32_96, %c8_i32_97 : i32
    %367 = tpu.assume_multiple %366, 8 : i32
    %368 = arith.index_cast %367 : i32 to index
    %c0_98 = arith.constant 0 : index
    %369 = vector.load %arg14[%368, %c0_98] : memref<64x384xf32, #tpu.memory_space<vmem>>, vector<8x384xf32>
    %cst_99 = arith.constant dense<0.000000e+00> : vector<8x384xf32>
    %370 = tpu.matmul %365, %297, %cst_99 {dimension_numbers = #tpu.dot_dimension_numbers<[1], [0], [0], [1], [0, 0, 1, 1], [], []>} : vector<8x128xf32>, vector<128x384xf32>, vector<8x384xf32> -> vector<8x384xf32>
    %371 = vector.broadcast %298 : vector<1x384xf32> to vector<8x384xf32>
    %372 = arith.addf %370, %371 : vector<8x384xf32>
    %373 = vector.extract_strided_slice %369 {offsets = [0, 0], sizes = [8, 128], strides = [1, 1]} : vector<8x384xf32> to vector<8x128xf32>
    %374 = vector.extract_strided_slice %372 {offsets = [0, 0], sizes = [8, 128], strides = [1, 1]} : vector<8x384xf32> to vector<8x128xf32>
    %375 = arith.addf %373, %374 : vector<8x128xf32>
    %376 = arith.negf %375 : vector<8x128xf32>
    %377 = math.exp %376 : vector<8x128xf32>
    %cst_100 = arith.constant 1.000000e+00 : f32
    %378 = vector.broadcast %cst_100 : f32 to vector<8x128xf32>
    %379 = arith.addf %378, %377 : vector<8x128xf32>
    %380 = arith.divf %378, %379 : vector<8x128xf32>
    %381 = vector.extract_strided_slice %369 {offsets = [0, 128], sizes = [8, 128], strides = [1, 1]} : vector<8x384xf32> to vector<8x128xf32>
    %382 = vector.extract_strided_slice %372 {offsets = [0, 128], sizes = [8, 128], strides = [1, 1]} : vector<8x384xf32> to vector<8x128xf32>
    %383 = arith.addf %381, %382 : vector<8x128xf32>
    %384 = arith.negf %383 : vector<8x128xf32>
    %385 = math.exp %384 : vector<8x128xf32>
    %cst_101 = arith.constant 1.000000e+00 : f32
    %386 = vector.broadcast %cst_101 : f32 to vector<8x128xf32>
    %387 = arith.addf %386, %385 : vector<8x128xf32>
    %388 = arith.divf %386, %387 : vector<8x128xf32>
    %389 = vector.extract_strided_slice %369 {offsets = [0, 256], sizes = [8, 128], strides = [1, 1]} : vector<8x384xf32> to vector<8x128xf32>
    %390 = vector.extract_strided_slice %372 {offsets = [0, 256], sizes = [8, 128], strides = [1, 1]} : vector<8x384xf32> to vector<8x128xf32>
    %391 = arith.mulf %380, %390 : vector<8x128xf32>
    %392 = arith.addf %389, %391 : vector<8x128xf32>
    %393 = math.tanh %392 : vector<8x128xf32>
    %cst_102 = arith.constant 1.000000e+00 : f32
    %394 = vector.broadcast %cst_102 : f32 to vector<8x128xf32>
    %395 = arith.subf %394, %388 : vector<8x128xf32>
    %396 = arith.mulf %395, %393 : vector<8x128xf32>
    %397 = arith.mulf %388, %365 : vector<8x128xf32>
    %398 = arith.addf %396, %397 : vector<8x128xf32>
    %c3_i32_103 = arith.constant 3 : i32
    %c8_i32_104 = arith.constant 8 : i32
    %399 = arith.muli %c3_i32_103, %c8_i32_104 : i32
    %400 = tpu.assume_multiple %399, 8 : i32
    %401 = arith.index_cast %400 : i32 to index
    %c0_105 = arith.constant 0 : index
    %402 = vector.load %arg14[%401, %c0_105] : memref<64x384xf32, #tpu.memory_space<vmem>>, vector<8x384xf32>
    %cst_106 = arith.constant dense<0.000000e+00> : vector<8x384xf32>
    %403 = tpu.matmul %398, %297, %cst_106 {dimension_numbers = #tpu.dot_dimension_numbers<[1], [0], [0], [1], [0, 0, 1, 1], [], []>} : vector<8x128xf32>, vector<128x384xf32>, vector<8x384xf32> -> vector<8x384xf32>
    %404 = vector.broadcast %298 : vector<1x384xf32> to vector<8x384xf32>
    %405 = arith.addf %403, %404 : vector<8x384xf32>
    %406 = vector.extract_strided_slice %402 {offsets = [0, 0], sizes = [8, 128], strides = [1, 1]} : vector<8x384xf32> to vector<8x128xf32>
    %407 = vector.extract_strided_slice %405 {offsets = [0, 0], sizes = [8, 128], strides = [1, 1]} : vector<8x384xf32> to vector<8x128xf32>
    %408 = arith.addf %406, %407 : vector<8x128xf32>
    %409 = arith.negf %408 : vector<8x128xf32>
    %410 = math.exp %409 : vector<8x128xf32>
    %cst_107 = arith.constant 1.000000e+00 : f32
    %411 = vector.broadcast %cst_107 : f32 to vector<8x128xf32>
    %412 = arith.addf %411, %410 : vector<8x128xf32>
    %413 = arith.divf %411, %412 : vector<8x128xf32>
    %414 = vector.extract_strided_slice %402 {offsets = [0, 128], sizes = [8, 128], strides = [1, 1]} : vector<8x384xf32> to vector<8x128xf32>
    %415 = vector.extract_strided_slice %405 {offsets = [0, 128], sizes = [8, 128], strides = [1, 1]} : vector<8x384xf32> to vector<8x128xf32>
    %416 = arith.addf %414, %415 : vector<8x128xf32>
    %417 = arith.negf %416 : vector<8x128xf32>
    %418 = math.exp %417 : vector<8x128xf32>
    %cst_108 = arith.constant 1.000000e+00 : f32
    %419 = vector.broadcast %cst_108 : f32 to vector<8x128xf32>
    %420 = arith.addf %419, %418 : vector<8x128xf32>
    %421 = arith.divf %419, %420 : vector<8x128xf32>
    %422 = vector.extract_strided_slice %402 {offsets = [0, 256], sizes = [8, 128], strides = [1, 1]} : vector<8x384xf32> to vector<8x128xf32>
    %423 = vector.extract_strided_slice %405 {offsets = [0, 256], sizes = [8, 128], strides = [1, 1]} : vector<8x384xf32> to vector<8x128xf32>
    %424 = arith.mulf %413, %423 : vector<8x128xf32>
    %425 = arith.addf %422, %424 : vector<8x128xf32>
    %426 = math.tanh %425 : vector<8x128xf32>
    %cst_109 = arith.constant 1.000000e+00 : f32
    %427 = vector.broadcast %cst_109 : f32 to vector<8x128xf32>
    %428 = arith.subf %427, %421 : vector<8x128xf32>
    %429 = arith.mulf %428, %426 : vector<8x128xf32>
    %430 = arith.mulf %421, %398 : vector<8x128xf32>
    %431 = arith.addf %429, %430 : vector<8x128xf32>
    %c4_i32_110 = arith.constant 4 : i32
    %c8_i32_111 = arith.constant 8 : i32
    %432 = arith.muli %c4_i32_110, %c8_i32_111 : i32
    %433 = tpu.assume_multiple %432, 8 : i32
    %434 = arith.index_cast %433 : i32 to index
    %c0_112 = arith.constant 0 : index
    %435 = vector.load %arg14[%434, %c0_112] : memref<64x384xf32, #tpu.memory_space<vmem>>, vector<8x384xf32>
    %cst_113 = arith.constant dense<0.000000e+00> : vector<8x384xf32>
    %436 = tpu.matmul %431, %297, %cst_113 {dimension_numbers = #tpu.dot_dimension_numbers<[1], [0], [0], [1], [0, 0, 1, 1], [], []>} : vector<8x128xf32>, vector<128x384xf32>, vector<8x384xf32> -> vector<8x384xf32>
    %437 = vector.broadcast %298 : vector<1x384xf32> to vector<8x384xf32>
    %438 = arith.addf %436, %437 : vector<8x384xf32>
    %439 = vector.extract_strided_slice %435 {offsets = [0, 0], sizes = [8, 128], strides = [1, 1]} : vector<8x384xf32> to vector<8x128xf32>
    %440 = vector.extract_strided_slice %438 {offsets = [0, 0], sizes = [8, 128], strides = [1, 1]} : vector<8x384xf32> to vector<8x128xf32>
    %441 = arith.addf %439, %440 : vector<8x128xf32>
    %442 = arith.negf %441 : vector<8x128xf32>
    %443 = math.exp %442 : vector<8x128xf32>
    %cst_114 = arith.constant 1.000000e+00 : f32
    %444 = vector.broadcast %cst_114 : f32 to vector<8x128xf32>
    %445 = arith.addf %444, %443 : vector<8x128xf32>
    %446 = arith.divf %444, %445 : vector<8x128xf32>
    %447 = vector.extract_strided_slice %435 {offsets = [0, 128], sizes = [8, 128], strides = [1, 1]} : vector<8x384xf32> to vector<8x128xf32>
    %448 = vector.extract_strided_slice %438 {offsets = [0, 128], sizes = [8, 128], strides = [1, 1]} : vector<8x384xf32> to vector<8x128xf32>
    %449 = arith.addf %447, %448 : vector<8x128xf32>
    %450 = arith.negf %449 : vector<8x128xf32>
    %451 = math.exp %450 : vector<8x128xf32>
    %cst_115 = arith.constant 1.000000e+00 : f32
    %452 = vector.broadcast %cst_115 : f32 to vector<8x128xf32>
    %453 = arith.addf %452, %451 : vector<8x128xf32>
    %454 = arith.divf %452, %453 : vector<8x128xf32>
    %455 = vector.extract_strided_slice %435 {offsets = [0, 256], sizes = [8, 128], strides = [1, 1]} : vector<8x384xf32> to vector<8x128xf32>
    %456 = vector.extract_strided_slice %438 {offsets = [0, 256], sizes = [8, 128], strides = [1, 1]} : vector<8x384xf32> to vector<8x128xf32>
    %457 = arith.mulf %446, %456 : vector<8x128xf32>
    %458 = arith.addf %455, %457 : vector<8x128xf32>
    %459 = math.tanh %458 : vector<8x128xf32>
    %cst_116 = arith.constant 1.000000e+00 : f32
    %460 = vector.broadcast %cst_116 : f32 to vector<8x128xf32>
    %461 = arith.subf %460, %454 : vector<8x128xf32>
    %462 = arith.mulf %461, %459 : vector<8x128xf32>
    %463 = arith.mulf %454, %431 : vector<8x128xf32>
    %464 = arith.addf %462, %463 : vector<8x128xf32>
    %c5_i32_117 = arith.constant 5 : i32
    %c8_i32_118 = arith.constant 8 : i32
    %465 = arith.muli %c5_i32_117, %c8_i32_118 : i32
    %466 = tpu.assume_multiple %465, 8 : i32
    %467 = arith.index_cast %466 : i32 to index
    %c0_119 = arith.constant 0 : index
    %468 = vector.load %arg14[%467, %c0_119] : memref<64x384xf32, #tpu.memory_space<vmem>>, vector<8x384xf32>
    %cst_120 = arith.constant dense<0.000000e+00> : vector<8x384xf32>
    %469 = tpu.matmul %464, %297, %cst_120 {dimension_numbers = #tpu.dot_dimension_numbers<[1], [0], [0], [1], [0, 0, 1, 1], [], []>} : vector<8x128xf32>, vector<128x384xf32>, vector<8x384xf32> -> vector<8x384xf32>
    %470 = vector.broadcast %298 : vector<1x384xf32> to vector<8x384xf32>
    %471 = arith.addf %469, %470 : vector<8x384xf32>
    %472 = vector.extract_strided_slice %468 {offsets = [0, 0], sizes = [8, 128], strides = [1, 1]} : vector<8x384xf32> to vector<8x128xf32>
    %473 = vector.extract_strided_slice %471 {offsets = [0, 0], sizes = [8, 128], strides = [1, 1]} : vector<8x384xf32> to vector<8x128xf32>
    %474 = arith.addf %472, %473 : vector<8x128xf32>
    %475 = arith.negf %474 : vector<8x128xf32>
    %476 = math.exp %475 : vector<8x128xf32>
    %cst_121 = arith.constant 1.000000e+00 : f32
    %477 = vector.broadcast %cst_121 : f32 to vector<8x128xf32>
    %478 = arith.addf %477, %476 : vector<8x128xf32>
    %479 = arith.divf %477, %478 : vector<8x128xf32>
    %480 = vector.extract_strided_slice %468 {offsets = [0, 128], sizes = [8, 128], strides = [1, 1]} : vector<8x384xf32> to vector<8x128xf32>
    %481 = vector.extract_strided_slice %471 {offsets = [0, 128], sizes = [8, 128], strides = [1, 1]} : vector<8x384xf32> to vector<8x128xf32>
    %482 = arith.addf %480, %481 : vector<8x128xf32>
    %483 = arith.negf %482 : vector<8x128xf32>
    %484 = math.exp %483 : vector<8x128xf32>
    %cst_122 = arith.constant 1.000000e+00 : f32
    %485 = vector.broadcast %cst_122 : f32 to vector<8x128xf32>
    %486 = arith.addf %485, %484 : vector<8x128xf32>
    %487 = arith.divf %485, %486 : vector<8x128xf32>
    %488 = vector.extract_strided_slice %468 {offsets = [0, 256], sizes = [8, 128], strides = [1, 1]} : vector<8x384xf32> to vector<8x128xf32>
    %489 = vector.extract_strided_slice %471 {offsets = [0, 256], sizes = [8, 128], strides = [1, 1]} : vector<8x384xf32> to vector<8x128xf32>
    %490 = arith.mulf %479, %489 : vector<8x128xf32>
    %491 = arith.addf %488, %490 : vector<8x128xf32>
    %492 = math.tanh %491 : vector<8x128xf32>
    %cst_123 = arith.constant 1.000000e+00 : f32
    %493 = vector.broadcast %cst_123 : f32 to vector<8x128xf32>
    %494 = arith.subf %493, %487 : vector<8x128xf32>
    %495 = arith.mulf %494, %492 : vector<8x128xf32>
    %496 = arith.mulf %487, %464 : vector<8x128xf32>
    %497 = arith.addf %495, %496 : vector<8x128xf32>
    %c6_i32_124 = arith.constant 6 : i32
    %c8_i32_125 = arith.constant 8 : i32
    %498 = arith.muli %c6_i32_124, %c8_i32_125 : i32
    %499 = tpu.assume_multiple %498, 8 : i32
    %500 = arith.index_cast %499 : i32 to index
    %c0_126 = arith.constant 0 : index
    %501 = vector.load %arg14[%500, %c0_126] : memref<64x384xf32, #tpu.memory_space<vmem>>, vector<8x384xf32>
    %cst_127 = arith.constant dense<0.000000e+00> : vector<8x384xf32>
    %502 = tpu.matmul %497, %297, %cst_127 {dimension_numbers = #tpu.dot_dimension_numbers<[1], [0], [0], [1], [0, 0, 1, 1], [], []>} : vector<8x128xf32>, vector<128x384xf32>, vector<8x384xf32> -> vector<8x384xf32>
    %503 = vector.broadcast %298 : vector<1x384xf32> to vector<8x384xf32>
    %504 = arith.addf %502, %503 : vector<8x384xf32>
    %505 = vector.extract_strided_slice %501 {offsets = [0, 0], sizes = [8, 128], strides = [1, 1]} : vector<8x384xf32> to vector<8x128xf32>
    %506 = vector.extract_strided_slice %504 {offsets = [0, 0], sizes = [8, 128], strides = [1, 1]} : vector<8x384xf32> to vector<8x128xf32>
    %507 = arith.addf %505, %506 : vector<8x128xf32>
    %508 = arith.negf %507 : vector<8x128xf32>
    %509 = math.exp %508 : vector<8x128xf32>
    %cst_128 = arith.constant 1.000000e+00 : f32
    %510 = vector.broadcast %cst_128 : f32 to vector<8x128xf32>
    %511 = arith.addf %510, %509 : vector<8x128xf32>
    %512 = arith.divf %510, %511 : vector<8x128xf32>
    %513 = vector.extract_strided_slice %501 {offsets = [0, 128], sizes = [8, 128], strides = [1, 1]} : vector<8x384xf32> to vector<8x128xf32>
    %514 = vector.extract_strided_slice %504 {offsets = [0, 128], sizes = [8, 128], strides = [1, 1]} : vector<8x384xf32> to vector<8x128xf32>
    %515 = arith.addf %513, %514 : vector<8x128xf32>
    %516 = arith.negf %515 : vector<8x128xf32>
    %517 = math.exp %516 : vector<8x128xf32>
    %cst_129 = arith.constant 1.000000e+00 : f32
    %518 = vector.broadcast %cst_129 : f32 to vector<8x128xf32>
    %519 = arith.addf %518, %517 : vector<8x128xf32>
    %520 = arith.divf %518, %519 : vector<8x128xf32>
    %521 = vector.extract_strided_slice %501 {offsets = [0, 256], sizes = [8, 128], strides = [1, 1]} : vector<8x384xf32> to vector<8x128xf32>
    %522 = vector.extract_strided_slice %504 {offsets = [0, 256], sizes = [8, 128], strides = [1, 1]} : vector<8x384xf32> to vector<8x128xf32>
    %523 = arith.mulf %512, %522 : vector<8x128xf32>
    %524 = arith.addf %521, %523 : vector<8x128xf32>
    %525 = math.tanh %524 : vector<8x128xf32>
    %cst_130 = arith.constant 1.000000e+00 : f32
    %526 = vector.broadcast %cst_130 : f32 to vector<8x128xf32>
    %527 = arith.subf %526, %520 : vector<8x128xf32>
    %528 = arith.mulf %527, %525 : vector<8x128xf32>
    %529 = arith.mulf %520, %497 : vector<8x128xf32>
    %530 = arith.addf %528, %529 : vector<8x128xf32>
    %c7_i32_131 = arith.constant 7 : i32
    %c8_i32_132 = arith.constant 8 : i32
    %531 = arith.muli %c7_i32_131, %c8_i32_132 : i32
    %532 = tpu.assume_multiple %531, 8 : i32
    %533 = arith.index_cast %532 : i32 to index
    %c0_133 = arith.constant 0 : index
    %534 = vector.load %arg14[%533, %c0_133] : memref<64x384xf32, #tpu.memory_space<vmem>>, vector<8x384xf32>
    %cst_134 = arith.constant dense<0.000000e+00> : vector<8x384xf32>
    %535 = tpu.matmul %530, %297, %cst_134 {dimension_numbers = #tpu.dot_dimension_numbers<[1], [0], [0], [1], [0, 0, 1, 1], [], []>} : vector<8x128xf32>, vector<128x384xf32>, vector<8x384xf32> -> vector<8x384xf32>
    %536 = vector.broadcast %298 : vector<1x384xf32> to vector<8x384xf32>
    %537 = arith.addf %535, %536 : vector<8x384xf32>
    %538 = vector.extract_strided_slice %534 {offsets = [0, 0], sizes = [8, 128], strides = [1, 1]} : vector<8x384xf32> to vector<8x128xf32>
    %539 = vector.extract_strided_slice %537 {offsets = [0, 0], sizes = [8, 128], strides = [1, 1]} : vector<8x384xf32> to vector<8x128xf32>
    %540 = arith.addf %538, %539 : vector<8x128xf32>
    %541 = arith.negf %540 : vector<8x128xf32>
    %542 = math.exp %541 : vector<8x128xf32>
    %cst_135 = arith.constant 1.000000e+00 : f32
    %543 = vector.broadcast %cst_135 : f32 to vector<8x128xf32>
    %544 = arith.addf %543, %542 : vector<8x128xf32>
    %545 = arith.divf %543, %544 : vector<8x128xf32>
    %546 = vector.extract_strided_slice %534 {offsets = [0, 128], sizes = [8, 128], strides = [1, 1]} : vector<8x384xf32> to vector<8x128xf32>
    %547 = vector.extract_strided_slice %537 {offsets = [0, 128], sizes = [8, 128], strides = [1, 1]} : vector<8x384xf32> to vector<8x128xf32>
    %548 = arith.addf %546, %547 : vector<8x128xf32>
    %549 = arith.negf %548 : vector<8x128xf32>
    %550 = math.exp %549 : vector<8x128xf32>
    %cst_136 = arith.constant 1.000000e+00 : f32
    %551 = vector.broadcast %cst_136 : f32 to vector<8x128xf32>
    %552 = arith.addf %551, %550 : vector<8x128xf32>
    %553 = arith.divf %551, %552 : vector<8x128xf32>
    %554 = vector.extract_strided_slice %534 {offsets = [0, 256], sizes = [8, 128], strides = [1, 1]} : vector<8x384xf32> to vector<8x128xf32>
    %555 = vector.extract_strided_slice %537 {offsets = [0, 256], sizes = [8, 128], strides = [1, 1]} : vector<8x384xf32> to vector<8x128xf32>
    %556 = arith.mulf %545, %555 : vector<8x128xf32>
    %557 = arith.addf %554, %556 : vector<8x128xf32>
    %558 = math.tanh %557 : vector<8x128xf32>
    %cst_137 = arith.constant 1.000000e+00 : f32
    %559 = vector.broadcast %cst_137 : f32 to vector<8x128xf32>
    %560 = arith.subf %559, %553 : vector<8x128xf32>
    %561 = arith.mulf %560, %558 : vector<8x128xf32>
    %562 = arith.mulf %553, %530 : vector<8x128xf32>
    %563 = arith.addf %561, %562 : vector<8x128xf32>
    %c8_i32_138 = arith.constant 8 : i32
    %c0_139 = arith.constant 0 : index
    %c0_140 = arith.constant 0 : index
    %564 = vector.load %arg10[%c0_139, %c0_140] : memref<128x128xf32, #tpu.memory_space<vmem>>, vector<128x128xf32>
    %cst_141 = arith.constant dense<0.000000e+00> : vector<8x128xf32>
    %565 = tpu.matmul %563, %564, %cst_141 {dimension_numbers = #tpu.dot_dimension_numbers<[1], [0], [0], [1], [0, 0, 1, 1], [], []>} : vector<8x128xf32>, vector<128x128xf32>, vector<8x128xf32> -> vector<8x128xf32>
    %c0_142 = arith.constant 0 : index
    %c0_143 = arith.constant 0 : index
    %566 = vector.load %arg11[%c0_142, %c0_143] : memref<1x128xf32, #tpu.memory_space<vmem>>, vector<1x128xf32>
    %567 = vector.broadcast %566 : vector<1x128xf32> to vector<8x128xf32>
    %568 = arith.addf %565, %567 : vector<8x128xf32>
    %c0_144 = arith.constant 0 : index
    %c0_145 = arith.constant 0 : index
    %569 = vector.load %arg12[%c0_144, %c0_145] : memref<8x128xf32, #tpu.memory_space<vmem>>, vector<8x128xf32>
    tpu.vector_store %arg12[%c0_144, %c0_145], %568 {strides = array<i32>} : memref<8x128xf32, #tpu.memory_space<vmem>>, vector<8x128xf32>,
    return
  }
  func.func @transform_0(%arg0: i32) -> (i32, i32) {
    %c0_i32 = arith.constant 0 : i32
    %c0_i32_0 = arith.constant 0 : i32
    %c0_i32_1 = arith.constant 0 : i32
    return %c0_i32, %c0_i32_0 : i32, i32
  }
  func.func @transform_1(%arg0: i32) -> (i32, i32) {
    %c0_i32 = arith.constant 0 : i32
    %c0_i32_0 = arith.constant 0 : i32
    %c0_i32_1 = arith.constant 0 : i32
    return %c0_i32, %c0_i32_0 : i32, i32
  }
  func.func @transform_2(%arg0: i32) -> (i32, i32) {
    %c0_i32 = arith.constant 0 : i32
    %c0_i32_0 = arith.constant 0 : i32
    %c0_i32_1 = arith.constant 0 : i32
    return %c0_i32, %c0_i32_0 : i32, i32
  }
  func.func @transform_3(%arg0: i32) -> (i32, i32) {
    %c0_i32 = arith.constant 0 : i32
    %c0_i32_0 = arith.constant 0 : i32
    %c0_i32_1 = arith.constant 0 : i32
    return %c0_i32, %c0_i32_0 : i32, i32
  }
  func.func @transform_4(%arg0: i32) -> (i32, i32) {
    %c0_i32 = arith.constant 0 : i32
    %c0_i32_0 = arith.constant 0 : i32
    %c0_i32_1 = arith.constant 0 : i32
    return %c0_i32, %c0_i32_0 : i32, i32
  }
  func.func @transform_5(%arg0: i32) -> (i32, i32) {
    %c0_i32 = arith.constant 0 : i32
    %c0_i32_0 = arith.constant 0 : i32
    %c0_i32_1 = arith.constant 0 : i32
    return %c0_i32, %c0_i32_0 : i32, i32
  }
  func.func @transform_6(%arg0: i32) -> (i32, i32) {
    %c0_i32 = arith.constant 0 : i32
    %c0_i32_0 = arith.constant 0 : i32
    %c0_i32_1 = arith.constant 0 : i32
    return %c0_i32, %c0_i32_0 : i32, i32
  }
  func.func @transform_7(%arg0: i32) -> (i32, i32) {
    %c0_i32 = arith.constant 0 : i32
    %c0_i32_0 = arith.constant 0 : i32
    %c0_i32_1 = arith.constant 0 : i32
    return %c0_i32, %c0_i32_0 : i32, i32
  }
  func.func @transform_8(%arg0: i32) -> (i32, i32) {
    %c0_i32 = arith.constant 0 : i32
    %c0_i32_0 = arith.constant 0 : i32
    %c0_i32_1 = arith.constant 0 : i32
    return %c0_i32, %c0_i32_0 : i32, i32
  }
  func.func @transform_9(%arg0: i32) -> (i32, i32) {
    %c0_i32 = arith.constant 0 : i32
    %c0_i32_0 = arith.constant 0 : i32
    %c0_i32_1 = arith.constant 0 : i32
    return %c0_i32, %c0_i32_0 : i32, i32
  }
  func.func @transform_10(%arg0: i32) -> (i32, i32) {
    %c0_i32 = arith.constant 0 : i32
    %c0_i32_0 = arith.constant 0 : i32
    %c0_i32_1 = arith.constant 0 : i32
    return %c0_i32, %c0_i32_0 : i32, i32
  }
  func.func @transform_11(%arg0: i32) -> (i32, i32) {
    %c0_i32 = arith.constant 0 : i32
    %c0_i32_0 = arith.constant 0 : i32
    %c0_i32_1 = arith.constant 0 : i32
    return %c0_i32, %c0_i32_0 : i32, i32
  }
}

</mosaic_0001>

<llo_original>
// kernel: gru_forward.1
$region0: #{gru_forward.1}
  #allocation0 [shape = 'u32[]', space=smem, size = 0x4, offset = 0x4, fixed_abs, tag = 'smem constant byte address 0x4 - core index']
  #allocation1 [shape = 'u32[144,128]{1,0:T(1,128)}', space=vmem, size = 0x12000, scoped, tag = 'internal scratch']
  #allocation2 [shape = 'f32[64,128]{1,0:T(8,128)}', space=vmem, size = 0x8000, scoped, tag = 'scratch operand']
  #allocation3 [shape = 'f32[64,384]{1,0:T(8,128)}', space=vmem, size = 0x18000, scoped, tag = 'scratch operand']
  %s0 = inlined_call_operand.vmem [shape: f32[64,16], index: 0, kind: input, shape index: {}]
  %s1 = inlined_call_operand.vmem [shape: f32[16,384], index: 1, kind: input, shape index: {}]
  %s2 = inlined_call_operand.vmem [shape: f32[128,384], index: 2, kind: input, shape index: {}]
  %s3 = inlined_call_operand.vmem [shape: f32[1,384], index: 3, kind: input, shape index: {}]
  %s4 = inlined_call_operand.vmem [shape: f32[1,384], index: 4, kind: input, shape index: {}]
  %s5 = inlined_call_operand.vmem [shape: f32[128,384], index: 5, kind: input, shape index: {}]
  %s6 = inlined_call_operand.vmem [shape: f32[128,384], index: 6, kind: input, shape index: {}]
  %s7 = inlined_call_operand.vmem [shape: f32[1,384], index: 7, kind: input, shape index: {}]
  %s8 = inlined_call_operand.vmem [shape: f32[1,384], index: 8, kind: input, shape index: {}]
  %s9 = inlined_call_operand.vmem [shape: f32[128,128], index: 9, kind: input, shape index: {}]
  %s10 = inlined_call_operand.vmem [shape: f32[1,128], index: 10, kind: input, shape index: {}]
  %s11 = inlined_call_operand.vmem [shape: f32[8,128], index: 11, kind: output, shape index: {}]
  %s12 = sld [smem:[#allocation0]]
  $region54: #{gru_forward.1} parent=0
    _
  %s14 = ssub.s32 1, %s12
  %s15 = scalar_select 0, %s14, %s12
  // Predicated region
  $region2: #{gru_forward.1} parent=0 // pred_check
    _
  $region3: #{gru_forward.1} parent=0 // pred_check_branch
    %17 = sbr.rel (0) target = $region5
  $region4: #{gru_forward.1} parent=0 // pred_region
    _
  $region5: #{gru_forward.1} parent=0 // pred_fallthru
    _
  // Predicated region
  $region6: #{gru_forward.1} parent=0 // pred_check
    _
  $region7: #{gru_forward.1} parent=0 // pred_check_branch
    %19 = sbr.rel (0) target = $region9
  $region8: #{gru_forward.1} parent=0 // pred_region
    _
  $region9: #{gru_forward.1} parent=0 // pred_fallthru
    _
  // Predicated region
  $region10: #{gru_forward.1} parent=0 // pred_check
    _
  $region11: #{gru_forward.1} parent=0 // pred_check_branch
    %21 = sbr.rel (0) target = $region13
  $region12: #{gru_forward.1} parent=0 // pred_region
    _
  $region13: #{gru_forward.1} parent=0 // pred_fallthru
    _
  // Predicated region
  $region14: #{gru_forward.1} parent=0 // pred_check
    _
  $region15: #{gru_forward.1} parent=0 // pred_check_branch
    %23 = sbr.rel (0) target = $region17
  $region16: #{gru_forward.1} parent=0 // pred_region
    _
  $region17: #{gru_forward.1} parent=0 // pred_fallthru
    _
  // Predicated region
  $region18: #{gru_forward.1} parent=0 // pred_check
    _
  $region19: #{gru_forward.1} parent=0 // pred_check_branch
    %25 = sbr.rel (0) target = $region21
  $region20: #{gru_forward.1} parent=0 // pred_region
    _
  $region21: #{gru_forward.1} parent=0 // pred_fallthru
    _
  // Predicated region
  $region22: #{gru_forward.1} parent=0 // pred_check
    _
  $region23: #{gru_forward.1} parent=0 // pred_check_branch
    %27 = sbr.rel (0) target = $region25
  $region24: #{gru_forward.1} parent=0 // pred_region
    _
  $region25: #{gru_forward.1} parent=0 // pred_fallthru
    _
  // Predicated region
  $region26: #{gru_forward.1} parent=0 // pred_check
    _
  $region27: #{gru_forward.1} parent=0 // pred_check_branch
    %29 = sbr.rel (0) target = $region29
  $region28: #{gru_forward.1} parent=0 // pred_region
    _
  $region29: #{gru_forward.1} parent=0 // pred_fallthru
    _
  // Predicated region
  $region30: #{gru_forward.1} parent=0 // pred_check
    _
  $region31: #{gru_forward.1} parent=0 // pred_check_branch
    %31 = sbr.rel (0) target = $region33
  $region32: #{gru_forward.1} parent=0 // pred_region
    _
  $region33: #{gru_forward.1} parent=0 // pred_fallthru
    _
  // Predicated region
  $region34: #{gru_forward.1} parent=0 // pred_check
    _
  $region35: #{gru_forward.1} parent=0 // pred_check_branch
    %33 = sbr.rel (0) target = $region37
  $region36: #{gru_forward.1} parent=0 // pred_region
    _
  $region37: #{gru_forward.1} parent=0 // pred_fallthru
    _
  // Predicated region
  $region38: #{gru_forward.1} parent=0 // pred_check
    _
  $region39: #{gru_forward.1} parent=0 // pred_check_branch
    %35 = sbr.rel (0) target = $region41
  $region40: #{gru_forward.1} parent=0 // pred_region
    _
  $region41: #{gru_forward.1} parent=0 // pred_fallthru
    _
  // Predicated region
  $region42: #{gru_forward.1} parent=0 // pred_check
    _
  $region43: #{gru_forward.1} parent=0 // pred_check_branch
    %37 = sbr.rel (0) target = $region45
  $region44: #{gru_forward.1} parent=0 // pred_region
    _
  $region45: #{gru_forward.1} parent=0 // pred_fallthru
    _
  %v38 = vld [vmem:[%s0] sm:$0xff]
  %v39 = vld [vmem:[%s0 + $0x8] sm:$0xff]
  %v40 = vld [vmem:[%s0 + $0x10] sm:$0xff]
  %v41 = vld [vmem:[%s0 + $0x18] sm:$0xff]
  %v42 = vld [vmem:[%s0 + $0x20] sm:$0xff]
  %v43 = vld [vmem:[%s0 + $0x28] sm:$0xff]
  %v44 = vld [vmem:[%s0 + $0x30] sm:$0xff]
  %v45 = vld [vmem:[%s0 + $0x38] sm:$0xff]
  %v46 = vld [vmem:[%s1] sm:$0xff]
  %v47 = vld [vmem:[%s1 + $0x8] sm:$0xff]
  %v48 = vld [vmem:[%s1 + $0x10] sm:$0xff]
  %v49 = vld [vmem:[%s1 + $0x18] sm:$0xff]
  %v50 = vld [vmem:[%s1 + $0x20] sm:$0xff]
  %v51 = vld [vmem:[%s1 + $0x28] sm:$0xff]
  %v52 = vld [vmem:[%s3] sm:$0x7]
  %v54 = vlaneseq
  %v55 = vshrl.u32 %v54, 7
  %v56 = vsub.s32 0, %v55
  %v57 = vrot.slane %v52, %v56
  %v58 = vlaneseq
  %v59 = vshrl.u32 %v58, 7
  %v60 = vsub.s32 1, %v59
  %v61 = vrot.slane %v52, %v60
  %v62 = vlaneseq
  %v63 = vshrl.u32 %v62, 7
  %v64 = vsub.s32 2, %v63
  %v65 = vrot.slane %v52, %v64
  %vm69 = vcmask 130048
  %v71 = vsel %vm69, %v38, 0
  %v74 = vsel %vm69, %v39, 0
  %v77 = vsel %vm69, %v40, 0
  %v80 = vsel %vm69, %v41, 0
  %v83 = vsel %vm69, %v42, 0
  %v86 = vsel %vm69, %v43, 0
  %v89 = vsel %vm69, %v44, 0
  %v92 = vsel %vm69, %v45, 0
  %94 = vmatprep.subr.mxu0 %v47
  %95 = vmatpush1.msra.mxu0 %v46
  %96 = vmatprep.subr.mxu0 %v50
  %97 = vmatpush1.msra.mxu0 %v49
  %98 = vmatprep.subr.mxu0 0.0
  %99 = vmatpush1.msra.mxu0 0.0
  %100 = vmatprep.subr.mxu0 0.0
  %101 = vmatpush1.msra.mxu0 0.0
  %102 = vmatprep.subr.mxu0 0.0
  %103 = vmatpush1.msra.mxu0 0.0
  %104 = vmatprep.subr.mxu0 0.0
  %105 = vmatpush1.msra.mxu0 0.0
  %106 = vmatprep.subr.mxu0 0.0
  %107 = vmatpush1.msra.mxu0 0.0
  %108 = vmatprep.subr.mxu0 0.0
  %109 = vmatpush1.msra.mxu0 0.0
  %110 = vmatprep.subr.mxu0 0.0
  %111 = vmatpush1.msra.mxu0 0.0
  %112 = vmatprep.subr.mxu0 0.0
  %113 = vmatpush1.msra.mxu0 0.0
  %114 = vmatprep.subr.mxu0 0.0
  %115 = vmatpush1.msra.mxu0 0.0
  %116 = vmatprep.subr.mxu0 0.0
  %117 = vmatpush1.msra.mxu0 0.0
  %118 = vmatprep.subr.mxu0 0.0
  %119 = vmatpush1.msra.mxu0 0.0
  %120 = vmatprep.subr.mxu0 0.0
  %121 = vmatpush1.msra.mxu0 0.0
  %122 = vmatprep.subr.mxu0 0.0
  %123 = vmatpush1.msra.mxu0 0.0
  %124 = vmatprep.subr.mxu0 0.0
  %125 = vmatpush1.msra.mxu0 0.0
  %126 = vmatprep.subr.mxu0 0.0
  %127 = vmatpush1.msra.mxu0 0.0
  %128 = vmatprep.subr.mxu0 0.0
  %129 = vmatpush1.msra.mxu0 0.0
  %130 = vmatprep.subr.mxu0 0.0
  %131 = vmatpush1.msra.mxu0 0.0
  %132 = vmatprep.subr.mxu0 0.0
  %133 = vmatpush1.msra.mxu0 0.0
  %134 = vmatprep.subr.mxu0 0.0
  %135 = vmatpush1.msra.mxu0 0.0
  %136 = vmatprep.subr.mxu0 0.0
  %137 = vmatpush1.msra.mxu0 0.0
  %138 = vmatprep.subr.mxu0 0.0
  %139 = vmatpush1.msra.mxu0 0.0
  %140 = vmatprep.subr.mxu0 0.0
  %141 = vmatpush1.msra.mxu0 0.0
  %142 = vmatprep.subr.mxu0 0.0
  %143 = vmatpush1.msra.mxu0 0.0
  %144 = vmatprep.subr.mxu0 0.0
  %145 = vmatpush1.msra.mxu0 0.0
  %146 = vmatprep.subr.mxu0 0.0
  %147 = vmatpush1.msra.mxu0 0.0
  %148 = vmatprep.subr.mxu0 0.0
  %149 = vmatpush1.msra.mxu0 0.0
  %150 = vmatprep.subr.mxu0 0.0
  %151 = vmatpush1.msra.mxu0 0.0
  %152 = vmatprep.subr.mxu0 0.0
  %153 = vmatpush1.msra.mxu0 0.0
  %154 = vmatprep.subr.mxu0 0.0
  %155 = vmatpush1.msra.mxu0 0.0
  %156 = vmatprep.subr.mxu0 0.0
  %157 = vmatpush1.msra.mxu0 0.0
  %158 = vmatprep.mubr.f32.mxu0 0.0
  %159 = vmatmul.mubr.f32.gmra.mrb[0].mxu0 %v71
  %v160 = vpop.f32.mrb[0].mxu0
  %v161 = vadd.f32 %v57, %v160
  %v162 = vpop.f32.mrb[0].mxu0
  %v163 = vadd.f32 %v61, %v162
  %164 = vmatprep.mubr.f32.mxu0 0.0
  %165 = vmatmul.mubr.f32.gmra.mrb[0].mxu0 %v74
  %v166 = vpop.f32.mrb[0].mxu0
  %v167 = vadd.f32 %v57, %v166
  %v168 = vpop.f32.mrb[0].mxu0
  %v169 = vadd.f32 %v61, %v168
  %170 = vmatprep.mubr.f32.mxu0 0.0
  %171 = vmatmul.mubr.f32.gmra.mrb[0].mxu0 %v77
  %v172 = vpop.f32.mrb[0].mxu0
  %v173 = vadd.f32 %v57, %v172
  %v174 = vpop.f32.mrb[0].mxu0
  %v175 = vadd.f32 %v61, %v174
  %176 = vmatprep.mubr.f32.mxu0 0.0
  %177 = vmatmul.mubr.f32.gmra.mrb[0].mxu0 %v80
  %v178 = vpop.f32.mrb[0].mxu0
  %v179 = vadd.f32 %v57, %v178
  %v180 = vpop.f32.mrb[0].mxu0
  %v181 = vadd.f32 %v61, %v180
  %182 = vmatprep.mubr.f32.mxu0 0.0
  %183 = vmatmul.mubr.f32.gmra.mrb[0].mxu0 %v83
  %v184 = vpop.f32.mrb[0].mxu0
  %v185 = vadd.f32 %v57, %v184
  %v186 = vpop.f32.mrb[0].mxu0
  %v187 = vadd.f32 %v61, %v186
  %188 = vmatprep.mubr.f32.mxu0 0.0
  %189 = vmatmul.mubr.f32.gmra.mrb[0].mxu0 %v86
  %v190 = vpop.f32.mrb[0].mxu0
  %v191 = vadd.f32 %v57, %v190
  %v192 = vpop.f32.mrb[0].mxu0
  %v193 = vadd.f32 %v61, %v192
  %194 = vmatprep.mubr.f32.mxu0 0.0
  %195 = vmatmul.mubr.f32.gmra.mrb[0].mxu0 %v89
  %v196 = vpop.f32.mrb[0].mxu0
  %v197 = vadd.f32 %v57, %v196
  %v198 = vpop.f32.mrb[0].mxu0
  %v199 = vadd.f32 %v61, %v198
  %200 = vmatprep.mubr.f32.mxu0 0.0
  %201 = vmatmul.mubr.f32.gmra.mrb[0].mxu0 %v92
  %v202 = vpop.f32.mrb[0].mxu0
  %v203 = vadd.f32 %v57, %v202
  %v204 = vpop.f32.mrb[0].mxu0
  %v205 = vadd.f32 %v61, %v204
  %206 = vdwg.mxu0
  %207 = vmatprep.subr.mxu0 0.0
  %208 = vmatpush1.msra.mxu0 %v48
  %209 = vmatprep.subr.mxu0 0.0
  %210 = vmatpush1.msra.mxu0 %v51
  %211 = vmatprep.subr.mxu0 0.0
  %212 = vmatpush1.msra.mxu0 0.0
  %213 = vmatprep.subr.mxu0 0.0
  %214 = vmatpush1.msra.mxu0 0.0
  %215 = vmatprep.subr.mxu0 0.0
  %216 = vmatpush1.msra.mxu0 0.0
  %217 = vmatprep.subr.mxu0 0.0
  %218 = vmatpush1.msra.mxu0 0.0
  %219 = vmatprep.subr.mxu0 0.0
  %220 = vmatpush1.msra.mxu0 0.0
  %221 = vmatprep.subr.mxu0 0.0
  %222 = vmatpush1.msra.mxu0 0.0
  %223 = vmatprep.subr.mxu0 0.0
  %224 = vmatpush1.msra.mxu0 0.0
  %225 = vmatprep.subr.mxu0 0.0
  %226 = vmatpush1.msra.mxu0 0.0
  %227 = vmatprep.subr.mxu0 0.0
  %228 = vmatpush1.msra.mxu0 0.0
  %229 = vmatprep.subr.mxu0 0.0
  %230 = vmatpush1.msra.mxu0 0.0
  %231 = vmatprep.subr.mxu0 0.0
  %232 = vmatpush1.msra.mxu0 0.0
  %233 = vmatprep.subr.mxu0 0.0
  %234 = vmatpush1.msra.mxu0 0.0
  %235 = vmatprep.subr.mxu0 0.0
  %236 = vmatpush1.msra.mxu0 0.0
  %237 = vmatprep.subr.mxu0 0.0
  %238 = vmatpush1.msra.mxu0 0.0
  %239 = vmatprep.subr.mxu0 0.0
  %240 = vmatpush1.msra.mxu0 0.0
  %241 = vmatprep.subr.mxu0 0.0
  %242 = vmatpush1.msra.mxu0 0.0
  %243 = vmatprep.subr.mxu0 0.0
  %244 = vmatpush1.msra.mxu0 0.0
  %245 = vmatprep.subr.mxu0 0.0
  %246 = vmatpush1.msra.mxu0 0.0
  %247 = vmatprep.subr.mxu0 0.0
  %248 = vmatpush1.msra.mxu0 0.0
  %249 = vmatprep.subr.mxu0 0.0
  %250 = vmatpush1.msra.mxu0 0.0
  %251 = vmatprep.subr.mxu0 0.0
  %252 = vmatpush1.msra.mxu0 0.0
  %253 = vmatprep.subr.mxu0 0.0
  %254 = vmatpush1.msra.mxu0 0.0
  %255 = vmatprep.subr.mxu0 0.0
  %256 = vmatpush1.msra.mxu0 0.0
  %257 = vmatprep.subr.mxu0 0.0
  %258 = vmatpush1.msra.mxu0 0.0
  %259 = vmatprep.subr.mxu0 0.0
  %260 = vmatpush1.msra.mxu0 0.0
  %261 = vmatprep.subr.mxu0 0.0
  %262 = vmatpush1.msra.mxu0 0.0
  %263 = vmatprep.subr.mxu0 0.0
  %264 = vmatpush1.msra.mxu0 0.0
  %265 = vmatprep.subr.mxu0 0.0
  %266 = vmatpush1.msra.mxu0 0.0
  %267 = vmatprep.subr.mxu0 0.0
  %268 = vmatpush1.msra.mxu0 0.0
  %269 = vmatprep.subr.mxu0 0.0
  %270 = vmatpush1.msra.mxu0 0.0
  %271 = vmatprep.mubr.f32.mxu0 0.0
  %272 = vmatmul.mubr.f32.gmra.mrb[0].mxu0 %v71
  %v273 = vpop.f32.mrb[0].mxu0
  %v274 = vadd.f32 %v65, %v273
  %v275 = vpop.f32.mrb[0].mxu0
  %276 = vmatprep.mubr.f32.mxu0 0.0
  %277 = vmatmul.mubr.f32.gmra.mrb[0].mxu0 %v74
  %v278 = vpop.f32.mrb[0].mxu0
  %v279 = vadd.f32 %v65, %v278
  %v280 = vpop.f32.mrb[0].mxu0
  %281 = vmatprep.mubr.f32.mxu0 0.0
  %282 = vmatmul.mubr.f32.gmra.mrb[0].mxu0 %v77
  %v283 = vpop.f32.mrb[0].mxu0
  %v284 = vadd.f32 %v65, %v283
  %v285 = vpop.f32.mrb[0].mxu0
  %286 = vmatprep.mubr.f32.mxu0 0.0
  %287 = vmatmul.mubr.f32.gmra.mrb[0].mxu0 %v80
  %v288 = vpop.f32.mrb[0].mxu0
  %v289 = vadd.f32 %v65, %v288
  %v290 = vpop.f32.mrb[0].mxu0
  %291 = vmatprep.mubr.f32.mxu0 0.0
  %292 = vmatmul.mubr.f32.gmra.mrb[0].mxu0 %v83
  %v293 = vpop.f32.mrb[0].mxu0
  %v294 = vadd.f32 %v65, %v293
  %v295 = vpop.f32.mrb[0].mxu0
  %296 = vmatprep.mubr.f32.mxu0 0.0
  %297 = vmatmul.mubr.f32.gmra.mrb[0].mxu0 %v86
  %v298 = vpop.f32.mrb[0].mxu0
  %v299 = vadd.f32 %v65, %v298
  %v300 = vpop.f32.mrb[0].mxu0
  %301 = vmatprep.mubr.f32.mxu0 0.0
  %302 = vmatmul.mubr.f32.gmra.mrb[0].mxu0 %v89
  %v303 = vpop.f32.mrb[0].mxu0
  %v304 = vadd.f32 %v65, %v303
  %v305 = vpop.f32.mrb[0].mxu0
  %306 = vmatprep.mubr.f32.mxu0 0.0
  %307 = vmatmul.mubr.f32.gmra.mrb[0].mxu0 %v92
  %v308 = vpop.f32.mrb[0].mxu0
  %v309 = vadd.f32 %v65, %v308
  %v310 = vpop.f32.mrb[0].mxu0
  %311 = vdwg.mxu0
  %312 = vst [vmem:[#allocation3] sm:$0xff] %v161
  %313 = vst [vmem:[#allocation3 + $0x8] sm:$0xff] %v163
  %314 = vst [vmem:[#allocation3 + $0x10] sm:$0xff] %v274
  %315 = vst [vmem:[#allocation3 + $0x18] sm:$0xff] %v167
  %316 = vst [vmem:[#allocation3 + $0x20] sm:$0xff] %v169
  %317 = vst [vmem:[#allocation3 + $0x28] sm:$0xff] %v279
  %318 = vst [vmem:[#allocation3 + $0x30] sm:$0xff] %v173
  %319 = vst [vmem:[#allocation3 + $0x38] sm:$0xff] %v175
  %320 = vst [vmem:[#allocation3 + $0x40] sm:$0xff] %v284
  %321 = vst [vmem:[#allocation3 + $0x48] sm:$0xff] %v179
  %322 = vst [vmem:[#allocation3 + $0x50] sm:$0xff] %v181
  %323 = vst [vmem:[#allocation3 + $0x58] sm:$0xff] %v289
  %324 = vst [vmem:[#allocation3 + $0x60] sm:$0xff] %v185
  %325 = vst [vmem:[#allocation3 + $0x68] sm:$0xff] %v187
  %326 = vst [vmem:[#allocation3 + $0x70] sm:$0xff] %v294
  %327 = vst [vmem:[#allocation3 + $0x78] sm:$0xff] %v191
  %328 = vst [vmem:[#allocation3 + $0x80] sm:$0xff] %v193
  %329 = vst [vmem:[#allocation3 + $0x88] sm:$0xff] %v299
  %330 = vst [vmem:[#allocation3 + $0x90] sm:$0xff] %v197
  %331 = vst [vmem:[#allocation3 + $0x98] sm:$0xff] %v199
  %332 = vst [vmem:[#allocation3 + $0xa0] sm:$0xff] %v304
  %333 = vst [vmem:[#allocation3 + $0xa8] sm:$0xff] %v203
  %334 = vst [vmem:[#allocation3 + $0xb0] sm:$0xff] %v205
  %335 = vst [vmem:[#allocation3 + $0xb8] sm:$0xff] %v309
  %v336 = vld [vmem:[%s2] sm:$0xff]
  %v337 = vld [vmem:[%s2 + $0x8] sm:$0xff]
  %v338 = vld [vmem:[%s2 + $0x10] sm:$0xff]
  %v339 = vld [vmem:[%s2 + $0x18] sm:$0xff]
  %v340 = vld [vmem:[%s2 + $0x20] sm:$0xff]
  %v341 = vld [vmem:[%s2 + $0x28] sm:$0xff]
  %v342 = vld [vmem:[%s2 + $0x30] sm:$0xff]
  %v343 = vld [vmem:[%s2 + $0x38] sm:$0xff]
  %v344 = vld [vmem:[%s2 + $0x40] sm:$0xff]
  %v345 = vld [vmem:[%s2 + $0x48] sm:$0xff]
  %v346 = vld [vmem:[%s2 + $0x50] sm:$0xff]
  %v347 = vld [vmem:[%s2 + $0x58] sm:$0xff]
  %v348 = vld [vmem:[%s2 + $0x60] sm:$0xff]
  %v349 = vld [vmem:[%s2 + $0x68] sm:$0xff]
  %v350 = vld [vmem:[%s2 + $0x70] sm:$0xff]
  %v351 = vld [vmem:[%s2 + $0x78] sm:$0xff]
  %v352 = vld [vmem:[%s2 + $0x80] sm:$0xff]
  %v353 = vld [vmem:[%s2 + $0x88] sm:$0xff]
  %v354 = vld [vmem:[%s2 + $0x90] sm:$0xff]
  %v355 = vld [vmem:[%s2 + $0x98] sm:$0xff]
  %v356 = vld [vmem:[%s2 + $0xa0] sm:$0xff]
  %v357 = vld [vmem:[%s2 + $0xa8] sm:$0xff]
  %v358 = vld [vmem:[%s2 + $0xb0] sm:$0xff]
  %v359 = vld [vmem:[%s2 + $0xb8] sm:$0xff]
  %v360 = vld [vmem:[%s2 + $0xc0] sm:$0xff]
  %v361 = vld [vmem:[%s2 + $0xc8] sm:$0xff]
  %v362 = vld [vmem:[%s2 + $0xd0] sm:$0xff]
  %v363 = vld [vmem:[%s2 + $0xd8] sm:$0xff]
  %v364 = vld [vmem:[%s2 + $0xe0] sm:$0xff]
  %v365 = vld [vmem:[%s2 + $0xe8] sm:$0xff]
  %v366 = vld [vmem:[%s2 + $0xf0] sm:$0xff]
  %v367 = vld [vmem:[%s2 + $0xf8] sm:$0xff]
  %v368 = vld [vmem:[%s2 + $0x100] sm:$0xff]
  %v369 = vld [vmem:[%s2 + $0x108] sm:$0xff]
  %v370 = vld [vmem:[%s2 + $0x110] sm:$0xff]
  %v371 = vld [vmem:[%s2 + $0x118] sm:$0xff]
  %v372 = vld [vmem:[%s2 + $0x120] sm:$0xff]
  %v373 = vld [vmem:[%s2 + $0x128] sm:$0xff]
  %v374 = vld [vmem:[%s2 + $0x130] sm:$0xff]
  %v375 = vld [vmem:[%s2 + $0x138] sm:$0xff]
  %v376 = vld [vmem:[%s2 + $0x140] sm:$0xff]
  %v377 = vld [vmem:[%s2 + $0x148] sm:$0xff]
  %v378 = vld [vmem:[%s2 + $0x150] sm:$0xff]
  %v379 = vld [vmem:[%s2 + $0x158] sm:$0xff]
  %v380 = vld [vmem:[%s2 + $0x160] sm:$0xff]
  %v381 = vld [vmem:[%s2 + $0x168] sm:$0xff]
  %v382 = vld [vmem:[%s2 + $0x170] sm:$0xff]
  %v383 = vld [vmem:[%s2 + $0x178] sm:$0xff]
  %v384 = vld [vmem:[%s4] sm:$0x7]
  %s385 = smul.u32 0, 3
  %s386 = smul.addr %s385, 8
  %s387 = scalar_lea.vmem [#allocation3], %s386
  %v388 = vld [vmem:[%s387] sm:$0xff]
  %v389 = vld [vmem:[%s387 + $0x8] sm:$0xff]
  %v390 = vld [vmem:[%s387 + $0x10] sm:$0xff]
  %v392 = vlaneseq
  %v393 = vshrl.u32 %v392, 7
  %v394 = vsub.s32 0, %v393
  %v395 = vrot.slane %v384, %v394
  %v396 = vlaneseq
  %v397 = vshrl.u32 %v396, 7
  %v398 = vsub.s32 1, %v397
  %v399 = vrot.slane %v384, %v398
  %v400 = vlaneseq
  %v401 = vshrl.u32 %v400, 7
  %v402 = vsub.s32 2, %v401
  %v403 = vrot.slane %v384, %v402
  %407 = vmatprep.subr.mxu0 %v337
  %408 = vmatpush1.msra.mxu0 %v336
  %409 = vmatprep.subr.mxu0 %v340
  %410 = vmatpush1.msra.mxu0 %v339
  %411 = vmatprep.subr.mxu0 %v343
  %412 = vmatpush1.msra.mxu0 %v342
  %413 = vmatprep.subr.mxu0 %v346
  %414 = vmatpush1.msra.mxu0 %v345
  %415 = vmatprep.subr.mxu0 %v349
  %416 = vmatpush1.msra.mxu0 %v348
  %417 = vmatprep.subr.mxu0 %v352
  %418 = vmatpush1.msra.mxu0 %v351
  %419 = vmatprep.subr.mxu0 %v355
  %420 = vmatpush1.msra.mxu0 %v354
  %421 = vmatprep.subr.mxu0 %v358
  %422 = vmatpush1.msra.mxu0 %v357
  %423 = vmatprep.subr.mxu0 %v361
  %424 = vmatpush1.msra.mxu0 %v360
  %425 = vmatprep.subr.mxu0 %v364
  %426 = vmatpush1.msra.mxu0 %v363
  %427 = vmatprep.subr.mxu0 %v367
  %428 = vmatpush1.msra.mxu0 %v366
  %429 = vmatprep.subr.mxu0 %v370
  %430 = vmatpush1.msra.mxu0 %v369
  %431 = vmatprep.subr.mxu0 %v373
  %432 = vmatpush1.msra.mxu0 %v372
  %433 = vmatprep.subr.mxu0 %v376
  %434 = vmatpush1.msra.mxu0 %v375
  %435 = vmatprep.subr.mxu0 %v379
  %436 = vmatpush1.msra.mxu0 %v378
  %437 = vmatprep.subr.mxu0 %v382
  %438 = vmatpush1.msra.mxu0 %v381
  %439 = vmatprep.subr.mxu0 0.0
  %440 = vmatpush1.msra.mxu0 0.0
  %441 = vmatprep.subr.mxu0 0.0
  %442 = vmatpush1.msra.mxu0 0.0
  %443 = vmatprep.subr.mxu0 0.0
  %444 = vmatpush1.msra.mxu0 0.0
  %445 = vmatprep.subr.mxu0 0.0
  %446 = vmatpush1.msra.mxu0 0.0
  %447 = vmatprep.subr.mxu0 0.0
  %448 = vmatpush1.msra.mxu0 0.0
  %449 = vmatprep.subr.mxu0 0.0
  %450 = vmatpush1.msra.mxu0 0.0
  %451 = vmatprep.subr.mxu0 0.0
  %452 = vmatpush1.msra.mxu0 0.0
  %453 = vmatprep.subr.mxu0 0.0
  %454 = vmatpush1.msra.mxu0 0.0
  %455 = vmatprep.subr.mxu0 0.0
  %456 = vmatpush1.msra.mxu0 0.0
  %457 = vmatprep.subr.mxu0 0.0
  %458 = vmatpush1.msra.mxu0 0.0
  %459 = vmatprep.subr.mxu0 0.0
  %460 = vmatpush1.msra.mxu0 0.0
  %461 = vmatprep.subr.mxu0 0.0
  %462 = vmatpush1.msra.mxu0 0.0
  %463 = vmatprep.subr.mxu0 0.0
  %464 = vmatpush1.msra.mxu0 0.0
  %465 = vmatprep.subr.mxu0 0.0
  %466 = vmatpush1.msra.mxu0 0.0
  %467 = vmatprep.subr.mxu0 0.0
  %468 = vmatpush1.msra.mxu0 0.0
  %469 = vmatprep.subr.mxu0 0.0
  %470 = vmatpush1.msra.mxu0 0.0
  %471 = vmatprep.mubr.f32.mxu0 0.0
  %472 = vmatmul.mubr.f32.gmra.mrb[0].mxu0 0.0
  %v473 = vpop.f32.mrb[0].mxu0
  %v474 = vadd.f32 %v395, %v473
  %v475 = vpop.f32.mrb[0].mxu0
  %v476 = vadd.f32 %v399, %v475
  %477 = vdwg.mxu0
  %478 = vmatprep.subr.mxu0 0.0
  %479 = vmatpush1.msra.mxu0 %v338
  %480 = vmatprep.subr.mxu0 0.0
  %481 = vmatpush1.msra.mxu0 %v341
  %482 = vmatprep.subr.mxu0 0.0
  %483 = vmatpush1.msra.mxu0 %v344
  %484 = vmatprep.subr.mxu0 0.0
  %485 = vmatpush1.msra.mxu0 %v347
  %486 = vmatprep.subr.mxu0 0.0
  %487 = vmatpush1.msra.mxu0 %v350
  %488 = vmatprep.subr.mxu0 0.0
  %489 = vmatpush1.msra.mxu0 %v353
  %490 = vmatprep.subr.mxu0 0.0
  %491 = vmatpush1.msra.mxu0 %v356
  %492 = vmatprep.subr.mxu0 0.0
  %493 = vmatpush1.msra.mxu0 %v359
  %494 = vmatprep.subr.mxu0 0.0
  %495 = vmatpush1.msra.mxu0 %v362
  %496 = vmatprep.subr.mxu0 0.0
  %497 = vmatpush1.msra.mxu0 %v365
  %498 = vmatprep.subr.mxu0 0.0
  %499 = vmatpush1.msra.mxu0 %v368
  %500 = vmatprep.subr.mxu0 0.0
  %501 = vmatpush1.msra.mxu0 %v371
  %502 = vmatprep.subr.mxu0 0.0
  %503 = vmatpush1.msra.mxu0 %v374
  %504 = vmatprep.subr.mxu0 0.0
  %505 = vmatpush1.msra.mxu0 %v377
  %506 = vmatprep.subr.mxu0 0.0
  %507 = vmatpush1.msra.mxu0 %v380
  %508 = vmatprep.subr.mxu0 0.0
  %509 = vmatpush1.msra.mxu0 %v383
  %510 = vmatprep.subr.mxu0 0.0
  %511 = vmatpush1.msra.mxu0 0.0
  %512 = vmatprep.subr.mxu0 0.0
  %513 = vmatpush1.msra.mxu0 0.0
  %514 = vmatprep.subr.mxu0 0.0
  %515 = vmatpush1.msra.mxu0 0.0
  %516 = vmatprep.subr.mxu0 0.0
  %517 = vmatpush1.msra.mxu0 0.0
  %518 = vmatprep.subr.mxu0 0.0
  %519 = vmatpush1.msra.mxu0 0.0
  %520 = vmatprep.subr.mxu0 0.0
  %521 = vmatpush1.msra.mxu0 0.0
  %522 = vmatprep.subr.mxu0 0.0
  %523 = vmatpush1.msra.mxu0 0.0
  %524 = vmatprep.subr.mxu0 0.0
  %525 = vmatpush1.msra.mxu0 0.0
  %526 = vmatprep.subr.mxu0 0.0
  %527 = vmatpush1.msra.mxu0 0.0
  %528 = vmatprep.subr.mxu0 0.0
  %529 = vmatpush1.msra.mxu0 0.0
  %530 = vmatprep.subr.mxu0 0.0
  %531 = vmatpush1.msra.mxu0 0.0
  %532 = vmatprep.subr.mxu0 0.0
  %533 = vmatpush1.msra.mxu0 0.0
  %534 = vmatprep.subr.mxu0 0.0
  %535 = vmatpush1.msra.mxu0 0.0
  %536 = vmatprep.subr.mxu0 0.0
  %537 = vmatpush1.msra.mxu0 0.0
  %538 = vmatprep.subr.mxu0 0.0
  %539 = vmatpush1.msra.mxu0 0.0
  %540 = vmatprep.subr.mxu0 0.0
  %541 = vmatpush1.msra.mxu0 0.0
  %542 = vmatprep.mubr.f32.mxu0 0.0
  %543 = vmatmul.mubr.f32.gmra.mrb[0].mxu0 0.0
  %v544 = vpop.f32.mrb[0].mxu0
  %v545 = vadd.f32 %v403, %v544
  %v546 = vpop.f32.mrb[0].mxu0
  %547 = vdwg.mxu0
  %v548 = vadd.f32 %v388, %v474
  %v549 = vxor.u32 %v548, 2147483648
  %v550 = vmul.f32 %v549, 1.442695
  %v551 = vpow.pop %v550
  %v552 = vadd.f32 %v551, 1.0
  %v553 = vrcp.pop %v552
  %v554 = vmul.f32 1.0, %v553
  %v555 = vadd.f32 %v389, %v476
  %v556 = vxor.u32 %v555, 2147483648
  %v557 = vmul.f32 %v556, 1.442695
  %v558 = vpow.pop %v557
  %v559 = vadd.f32 %v558, 1.0
  %v560 = vrcp.pop %v559
  %v561 = vmul.f32 1.0, %v560
  %v562 = vmul.f32 %v554, %v545
  %v563 = vadd.f32 %v390, %v562
  %v564 = vtanh.pop %v563
  %v565 = vsub.f32 1.0, %v561
  %v566 = vmul.f32 %v565, %v564
  %v567 = vmul.f32 %v561, 0.0
  %v568 = vadd.f32 %v566, %v567
  %569 = vst [vmem:[#allocation2] sm:$0xff] %v568
  %s570 = smul.u32 1, 3
  %s571 = smul.addr %s570, 8
  %s572 = scalar_lea.vmem [#allocation3], %s571
  %v573 = vld [vmem:[%s572] sm:$0xff]
  %v574 = vld [vmem:[%s572 + $0x8] sm:$0xff]
  %v575 = vld [vmem:[%s572 + $0x10] sm:$0xff]
  %576 = vmatprep.subr.mxu0 %v337
  %577 = vmatpush1.msra.mxu0 %v336
  %578 = vmatprep.subr.mxu0 %v340
  %579 = vmatpush1.msra.mxu0 %v339
  %580 = vmatprep.subr.mxu0 %v343
  %581 = vmatpush1.msra.mxu0 %v342
  %582 = vmatprep.subr.mxu0 %v346
  %583 = vmatpush1.msra.mxu0 %v345
  %584 = vmatprep.subr.mxu0 %v349
  %585 = vmatpush1.msra.mxu0 %v348
  %586 = vmatprep.subr.mxu0 %v352
  %587 = vmatpush1.msra.mxu0 %v351
  %588 = vmatprep.subr.mxu0 %v355
  %589 = vmatpush1.msra.mxu0 %v354
  %590 = vmatprep.subr.mxu0 %v358
  %591 = vmatpush1.msra.mxu0 %v357
  %592 = vmatprep.subr.mxu0 %v361
  %593 = vmatpush1.msra.mxu0 %v360
  %594 = vmatprep.subr.mxu0 %v364
  %595 = vmatpush1.msra.mxu0 %v363
  %596 = vmatprep.subr.mxu0 %v367
  %597 = vmatpush1.msra.mxu0 %v366
  %598 = vmatprep.subr.mxu0 %v370
  %599 = vmatpush1.msra.mxu0 %v369
  %600 = vmatprep.subr.mxu0 %v373
  %601 = vmatpush1.msra.mxu0 %v372
  %602 = vmatprep.subr.mxu0 %v376
  %603 = vmatpush1.msra.mxu0 %v375
  %604 = vmatprep.subr.mxu0 %v379
  %605 = vmatpush1.msra.mxu0 %v378
  %606 = vmatprep.subr.mxu0 %v382
  %607 = vmatpush1.msra.mxu0 %v381
  %608 = vmatprep.subr.mxu0 0.0
  %609 = vmatpush1.msra.mxu0 0.0
  %610 = vmatprep.subr.mxu0 0.0
  %611 = vmatpush1.msra.mxu0 0.0
  %612 = vmatprep.subr.mxu0 0.0
  %613 = vmatpush1.msra.mxu0 0.0
  %614 = vmatprep.subr.mxu0 0.0
  %615 = vmatpush1.msra.mxu0 0.0
  %616 = vmatprep.subr.mxu0 0.0
  %617 = vmatpush1.msra.mxu0 0.0
  %618 = vmatprep.subr.mxu0 0.0
  %619 = vmatpush1.msra.mxu0 0.0
  %620 = vmatprep.subr.mxu0 0.0
  %621 = vmatpush1.msra.mxu0 0.0
  %622 = vmatprep.subr.mxu0 0.0
  %623 = vmatpush1.msra.mxu0 0.0
  %624 = vmatprep.subr.mxu0 0.0
  %625 = vmatpush1.msra.mxu0 0.0
  %626 = vmatprep.subr.mxu0 0.0
  %627 = vmatpush1.msra.mxu0 0.0
  %628 = vmatprep.subr.mxu0 0.0
  %629 = vmatpush1.msra.mxu0 0.0
  %630 = vmatprep.subr.mxu0 0.0
  %631 = vmatpush1.msra.mxu0 0.0
  %632 = vmatprep.subr.mxu0 0.0
  %633 = vmatpush1.msra.mxu0 0.0
  %634 = vmatprep.subr.mxu0 0.0
  %635 = vmatpush1.msra.mxu0 0.0
  %636 = vmatprep.subr.mxu0 0.0
  %637 = vmatpush1.msra.mxu0 0.0
  %638 = vmatprep.subr.mxu0 0.0
  %639 = vmatpush1.msra.mxu0 0.0
  %640 = vmatprep.mubr.f32.mxu0 0.0
  %641 = vmatmul.mubr.f32.gmra.mrb[0].mxu0 %v568
  %v642 = vpop.f32.mrb[0].mxu0
  %v643 = vadd.f32 %v395, %v642
  %v644 = vpop.f32.mrb[0].mxu0
  %v645 = vadd.f32 %v399, %v644
  %646 = vdwg.mxu0
  %647 = vmatprep.subr.mxu0 0.0
  %648 = vmatpush1.msra.mxu0 %v338
  %649 = vmatprep.subr.mxu0 0.0
  %650 = vmatpush1.msra.mxu0 %v341
  %651 = vmatprep.subr.mxu0 0.0
  %652 = vmatpush1.msra.mxu0 %v344
  %653 = vmatprep.subr.mxu0 0.0
  %654 = vmatpush1.msra.mxu0 %v347
  %655 = vmatprep.subr.mxu0 0.0
  %656 = vmatpush1.msra.mxu0 %v350
  %657 = vmatprep.subr.mxu0 0.0
  %658 = vmatpush1.msra.mxu0 %v353
  %659 = vmatprep.subr.mxu0 0.0
  %660 = vmatpush1.msra.mxu0 %v356
  %661 = vmatprep.subr.mxu0 0.0
  %662 = vmatpush1.msra.mxu0 %v359
  %663 = vmatprep.subr.mxu0 0.0
  %664 = vmatpush1.msra.mxu0 %v362
  %665 = vmatprep.subr.mxu0 0.0
  %666 = vmatpush1.msra.mxu0 %v365
  %667 = vmatprep.subr.mxu0 0.0
  %668 = vmatpush1.msra.mxu0 %v368
  %669 = vmatprep.subr.mxu0 0.0
  %670 = vmatpush1.msra.mxu0 %v371
  %671 = vmatprep.subr.mxu0 0.0
  %672 = vmatpush1.msra.mxu0 %v374
  %673 = vmatprep.subr.mxu0 0.0
  %674 = vmatpush1.msra.mxu0 %v377
  %675 = vmatprep.subr.mxu0 0.0
  %676 = vmatpush1.msra.mxu0 %v380
  %677 = vmatprep.subr.mxu0 0.0
  %678 = vmatpush1.msra.mxu0 %v383
  %679 = vmatprep.subr.mxu0 0.0
  %680 = vmatpush1.msra.mxu0 0.0
  %681 = vmatprep.subr.mxu0 0.0
  %682 = vmatpush1.msra.mxu0 0.0
  %683 = vmatprep.subr.mxu0 0.0
  %684 = vmatpush1.msra.mxu0 0.0
  %685 = vmatprep.subr.mxu0 0.0
  %686 = vmatpush1.msra.mxu0 0.0
  %687 = vmatprep.subr.mxu0 0.0
  %688 = vmatpush1.msra.mxu0 0.0
  %689 = vmatprep.subr.mxu0 0.0
  %690 = vmatpush1.msra.mxu0 0.0
  %691 = vmatprep.subr.mxu0 0.0
  %692 = vmatpush1.msra.mxu0 0.0
  %693 = vmatprep.subr.mxu0 0.0
  %694 = vmatpush1.msra.mxu0 0.0
  %695 = vmatprep.subr.mxu0 0.0
  %696 = vmatpush1.msra.mxu0 0.0
  %697 = vmatprep.subr.mxu0 0.0
  %698 = vmatpush1.msra.mxu0 0.0
  %699 = vmatprep.subr.mxu0 0.0
  %700 = vmatpush1.msra.mxu0 0.0
  %701 = vmatprep.subr.mxu0 0.0
  %702 = vmatpush1.msra.mxu0 0.0
  %703 = vmatprep.subr.mxu0 0.0
  %704 = vmatpush1.msra.mxu0 0.0
  %705 = vmatprep.subr.mxu0 0.0
  %706 = vmatpush1.msra.mxu0 0.0
  %707 = vmatprep.subr.mxu0 0.0
  %708 = vmatpush1.msra.mxu0 0.0
  %709 = vmatprep.subr.mxu0 0.0
  %710 = vmatpush1.msra.mxu0 0.0
  %711 = vmatprep.mubr.f32.mxu0 0.0
  %712 = vmatmul.mubr.f32.gmra.mrb[0].mxu0 %v568
  %v713 = vpop.f32.mrb[0].mxu0
  %v714 = vadd.f32 %v403, %v713
  %v715 = vpop.f32.mrb[0].mxu0
  %716 = vdwg.mxu0
  %v717 = vadd.f32 %v573, %v643
  %v718 = vxor.u32 %v717, 2147483648
  %v719 = vmul.f32 %v718, 1.442695
  %v720 = vpow.pop %v719
  %v721 = vadd.f32 %v720, 1.0
  %v722 = vrcp.pop %v721
  %v723 = vmul.f32 1.0, %v722
  %v724 = vadd.f32 %v574, %v645
  %v725 = vxor.u32 %v724, 2147483648
  %v726 = vmul.f32 %v725, 1.442695
  %v727 = vpow.pop %v726
  %v728 = vadd.f32 %v727, 1.0
  %v729 = vrcp.pop %v728
  %v730 = vmul.f32 1.0, %v729
  %v731 = vmul.f32 %v723, %v714
  %v732 = vadd.f32 %v575, %v731
  %v733 = vtanh.pop %v732
  %v734 = vsub.f32 1.0, %v730
  %v735 = vmul.f32 %v734, %v733
  %v736 = vmul.f32 %v730, %v568
  %v737 = vadd.f32 %v735, %v736
  %s738 = scalar_lea.vmem [#allocation2], 8
  %739 = vst [vmem:[%s738] sm:$0xff] %v737
  %s740 = smul.u32 2, 3
  %s741 = smul.addr %s740, 8
  %s742 = scalar_lea.vmem [#allocation3], %s741
  %v743 = vld [vmem:[%s742] sm:$0xff]
  %v744 = vld [vmem:[%s742 + $0x8] sm:$0xff]
  %v745 = vld [vmem:[%s742 + $0x10] sm:$0xff]
  %746 = vmatprep.subr.mxu0 %v337
  %747 = vmatpush1.msra.mxu0 %v336
  %748 = vmatprep.subr.mxu0 %v340
  %749 = vmatpush1.msra.mxu0 %v339
  %750 = vmatprep.subr.mxu0 %v343
  %751 = vmatpush1.msra.mxu0 %v342
  %752 = vmatprep.subr.mxu0 %v346
  %753 = vmatpush1.msra.mxu0 %v345
  %754 = vmatprep.subr.mxu0 %v349
  %755 = vmatpush1.msra.mxu0 %v348
  %756 = vmatprep.subr.mxu0 %v352
  %757 = vmatpush1.msra.mxu0 %v351
  %758 = vmatprep.subr.mxu0 %v355
  %759 = vmatpush1.msra.mxu0 %v354
  %760 = vmatprep.subr.mxu0 %v358
  %761 = vmatpush1.msra.mxu0 %v357
  %762 = vmatprep.subr.mxu0 %v361
  %763 = vmatpush1.msra.mxu0 %v360
  %764 = vmatprep.subr.mxu0 %v364
  %765 = vmatpush1.msra.mxu0 %v363
  %766 = vmatprep.subr.mxu0 %v367
  %767 = vmatpush1.msra.mxu0 %v366
  %768 = vmatprep.subr.mxu0 %v370
  %769 = vmatpush1.msra.mxu0 %v369
  %770 = vmatprep.subr.mxu0 %v373
  %771 = vmatpush1.msra.mxu0 %v372
  %772 = vmatprep.subr.mxu0 %v376
  %773 = vmatpush1.msra.mxu0 %v375
  %774 = vmatprep.subr.mxu0 %v379
  %775 = vmatpush1.msra.mxu0 %v378
  %776 = vmatprep.subr.mxu0 %v382
  %777 = vmatpush1.msra.mxu0 %v381
  %778 = vmatprep.subr.mxu0 0.0
  %779 = vmatpush1.msra.mxu0 0.0
  %780 = vmatprep.subr.mxu0 0.0
  %781 = vmatpush1.msra.mxu0 0.0
  %782 = vmatprep.subr.mxu0 0.0
  %783 = vmatpush1.msra.mxu0 0.0
  %784 = vmatprep.subr.mxu0 0.0
  %785 = vmatpush1.msra.mxu0 0.0
  %786 = vmatprep.subr.mxu0 0.0
  %787 = vmatpush1.msra.mxu0 0.0
  %788 = vmatprep.subr.mxu0 0.0
  %789 = vmatpush1.msra.mxu0 0.0
  %790 = vmatprep.subr.mxu0 0.0
  %791 = vmatpush1.msra.mxu0 0.0
  %792 = vmatprep.subr.mxu0 0.0
  %793 = vmatpush1.msra.mxu0 0.0
  %794 = vmatprep.subr.mxu0 0.0
  %795 = vmatpush1.msra.mxu0 0.0
  %796 = vmatprep.subr.mxu0 0.0
  %797 = vmatpush1.msra.mxu0 0.0
  %798 = vmatprep.subr.mxu0 0.0
  %799 = vmatpush1.msra.mxu0 0.0
  %800 = vmatprep.subr.mxu0 0.0
  %801 = vmatpush1.msra.mxu0 0.0
  %802 = vmatprep.subr.mxu0 0.0
  %803 = vmatpush1.msra.mxu0 0.0
  %804 = vmatprep.subr.mxu0 0.0
  %805 = vmatpush1.msra.mxu0 0.0
  %806 = vmatprep.subr.mxu0 0.0
  %807 = vmatpush1.msra.mxu0 0.0
  %808 = vmatprep.subr.mxu0 0.0
  %809 = vmatpush1.msra.mxu0 0.0
  %810 = vmatprep.mubr.f32.mxu0 0.0
  %811 = vmatmul.mubr.f32.gmra.mrb[0].mxu0 %v737
  %v812 = vpop.f32.mrb[0].mxu0
  %v813 = vadd.f32 %v395, %v812
  %v814 = vpop.f32.mrb[0].mxu0
  %v815 = vadd.f32 %v399, %v814
  %816 = vdwg.mxu0
  %817 = vmatprep.subr.mxu0 0.0
  %818 = vmatpush1.msra.mxu0 %v338
  %819 = vmatprep.subr.mxu0 0.0
  %820 = vmatpush1.msra.mxu0 %v341
  %821 = vmatprep.subr.mxu0 0.0
  %822 = vmatpush1.msra.mxu0 %v344
  %823 = vmatprep.subr.mxu0 0.0
  %824 = vmatpush1.msra.mxu0 %v347
  %825 = vmatprep.subr.mxu0 0.0
  %826 = vmatpush1.msra.mxu0 %v350
  %827 = vmatprep.subr.mxu0 0.0
  %828 = vmatpush1.msra.mxu0 %v353
  %829 = vmatprep.subr.mxu0 0.0
  %830 = vmatpush1.msra.mxu0 %v356
  %831 = vmatprep.subr.mxu0 0.0
  %832 = vmatpush1.msra.mxu0 %v359
  %833 = vmatprep.subr.mxu0 0.0
  %834 = vmatpush1.msra.mxu0 %v362
  %835 = vmatprep.subr.mxu0 0.0
  %836 = vmatpush1.msra.mxu0 %v365
  %837 = vmatprep.subr.mxu0 0.0
  %838 = vmatpush1.msra.mxu0 %v368
  %839 = vmatprep.subr.mxu0 0.0
  %840 = vmatpush1.msra.mxu0 %v371
  %841 = vmatprep.subr.mxu0 0.0
  %842 = vmatpush1.msra.mxu0 %v374
  %843 = vmatprep.subr.mxu0 0.0
  %844 = vmatpush1.msra.mxu0 %v377
  %845 = vmatprep.subr.mxu0 0.0
  %846 = vmatpush1.msra.mxu0 %v380
  %847 = vmatprep.subr.mxu0 0.0
  %848 = vmatpush1.msra.mxu0 %v383
  %849 = vmatprep.subr.mxu0 0.0
  %850 = vmatpush1.msra.mxu0 0.0
  %851 = vmatprep.subr.mxu0 0.0
  %852 = vmatpush1.msra.mxu0 0.0
  %853 = vmatprep.subr.mxu0 0.0
  %854 = vmatpush1.msra.mxu0 0.0
  %855 = vmatprep.subr.mxu0 0.0
  %856 = vmatpush1.msra.mxu0 0.0
  %857 = vmatprep.subr.mxu0 0.0
  %858 = vmatpush1.msra.mxu0 0.0
  %859 = vmatprep.subr.mxu0 0.0
  %860 = vmatpush1.msra.mxu0 0.0
  %861 = vmatprep.subr.mxu0 0.0
  %862 = vmatpush1.msra.mxu0 0.0
  %863 = vmatprep.subr.mxu0 0.0
  %864 = vmatpush1.msra.mxu0 0.0
  %865 = vmatprep.subr.mxu0 0.0
  %866 = vmatpush1.msra.mxu0 0.0
  %867 = vmatprep.subr.mxu0 0.0
  %868 = vmatpush1.msra.mxu0 0.0
  %869 = vmatprep.subr.mxu0 0.0
  %870 = vmatpush1.msra.mxu0 0.0
  %871 = vmatprep.subr.mxu0 0.0
  %872 = vmatpush1.msra.mxu0 0.0
  %873 = vmatprep.subr.mxu0 0.0
  %874 = vmatpush1.msra.mxu0 0.0
  %875 = vmatprep.subr.mxu0 0.0
  %876 = vmatpush1.msra.mxu0 0.0
  %877 = vmatprep.subr.mxu0 0.0
  %878 = vmatpush1.msra.mxu0 0.0
  %879 = vmatprep.subr.mxu0 0.0
  %880 = vmatpush1.msra.mxu0 0.0
  %881 = vmatprep.mubr.f32.mxu0 0.0
  %882 = vmatmul.mubr.f32.gmra.mrb[0].mxu0 %v737
  %v883 = vpop.f32.mrb[0].mxu0
  %v884 = vadd.f32 %v403, %v883
  %v885 = vpop.f32.mrb[0].mxu0
  %886 = vdwg.mxu0
  %v887 = vadd.f32 %v743, %v813
  %v888 = vxor.u32 %v887, 2147483648
  %v889 = vmul.f32 %v888, 1.442695
  %v890 = vpow.pop %v889
  %v891 = vadd.f32 %v890, 1.0
  %v892 = vrcp.pop %v891
  %v893 = vmul.f32 1.0, %v892
  %v894 = vadd.f32 %v744, %v815
  %v895 = vxor.u32 %v894, 2147483648
  %v896 = vmul.f32 %v895, 1.442695
  %v897 = vpow.pop %v896
  %v898 = vadd.f32 %v897, 1.0
  %v899 = vrcp.pop %v898
  %v900 = vmul.f32 1.0, %v899
  %v901 = vmul.f32 %v893, %v884
  %v902 = vadd.f32 %v745, %v901
  %v903 = vtanh.pop %v902
  %v904 = vsub.f32 1.0, %v900
  %v905 = vmul.f32 %v904, %v903
  %v906 = vmul.f32 %v900, %v737
  %v907 = vadd.f32 %v905, %v906
  %s908 = scalar_lea.vmem [#allocation2], 16
  %909 = vst [vmem:[%s908] sm:$0xff] %v907
  %s910 = smul.u32 3, 3
  %s911 = smul.addr %s910, 8
  %s912 = scalar_lea.vmem [#allocation3], %s911
  %v913 = vld [vmem:[%s912] sm:$0xff]
  %v914 = vld [vmem:[%s912 + $0x8] sm:$0xff]
  %v915 = vld [vmem:[%s912 + $0x10] sm:$0xff]
  %916 = vmatprep.subr.mxu0 %v337
  %917 = vmatpush1.msra.mxu0 %v336
  %918 = vmatprep.subr.mxu0 %v340
  %919 = vmatpush1.msra.mxu0 %v339
  %920 = vmatprep.subr.mxu0 %v343
  %921 = vmatpush1.msra.mxu0 %v342
  %922 = vmatprep.subr.mxu0 %v346
  %923 = vmatpush1.msra.mxu0 %v345
  %924 = vmatprep.subr.mxu0 %v349
  %925 = vmatpush1.msra.mxu0 %v348
  %926 = vmatprep.subr.mxu0 %v352
  %927 = vmatpush1.msra.mxu0 %v351
  %928 = vmatprep.subr.mxu0 %v355
  %929 = vmatpush1.msra.mxu0 %v354
  %930 = vmatprep.subr.mxu0 %v358
  %931 = vmatpush1.msra.mxu0 %v357
  %932 = vmatprep.subr.mxu0 %v361
  %933 = vmatpush1.msra.mxu0 %v360
  %934 = vmatprep.subr.mxu0 %v364
  %935 = vmatpush1.msra.mxu0 %v363
  %936 = vmatprep.subr.mxu0 %v367
  %937 = vmatpush1.msra.mxu0 %v366
  %938 = vmatprep.subr.mxu0 %v370
  %939 = vmatpush1.msra.mxu0 %v369
  %940 = vmatprep.subr.mxu0 %v373
  %941 = vmatpush1.msra.mxu0 %v372
  %942 = vmatprep.subr.mxu0 %v376
  %943 = vmatpush1.msra.mxu0 %v375
  %944 = vmatprep.subr.mxu0 %v379
  %945 = vmatpush1.msra.mxu0 %v378
  %946 = vmatprep.subr.mxu0 %v382
  %947 = vmatpush1.msra.mxu0 %v381
  %948 = vmatprep.subr.mxu0 0.0
  %949 = vmatpush1.msra.mxu0 0.0
  %950 = vmatprep.subr.mxu0 0.0
  %951 = vmatpush1.msra.mxu0 0.0
  %952 = vmatprep.subr.mxu0 0.0
  %953 = vmatpush1.msra.mxu0 0.0
  %954 = vmatprep.subr.mxu0 0.0
  %955 = vmatpush1.msra.mxu0 0.0
  %956 = vmatprep.subr.mxu0 0.0
  %957 = vmatpush1.msra.mxu0 0.0
  %958 = vmatprep.subr.mxu0 0.0
  %959 = vmatpush1.msra.mxu0 0.0
  %960 = vmatprep.subr.mxu0 0.0
  %961 = vmatpush1.msra.mxu0 0.0
  %962 = vmatprep.subr.mxu0 0.0
  %963 = vmatpush1.msra.mxu0 0.0
  %964 = vmatprep.subr.mxu0 0.0
  %965 = vmatpush1.msra.mxu0 0.0
  %966 = vmatprep.subr.mxu0 0.0
  %967 = vmatpush1.msra.mxu0 0.0
  %968 = vmatprep.subr.mxu0 0.0
  %969 = vmatpush1.msra.mxu0 0.0
  %970 = vmatprep.subr.mxu0 0.0
  %971 = vmatpush1.msra.mxu0 0.0
  %972 = vmatprep.subr.mxu0 0.0
  %973 = vmatpush1.msra.mxu0 0.0
  %974 = vmatprep.subr.mxu0 0.0
  %975 = vmatpush1.msra.mxu0 0.0
  %976 = vmatprep.subr.mxu0 0.0
  %977 = vmatpush1.msra.mxu0 0.0
  %978 = vmatprep.subr.mxu0 0.0
  %979 = vmatpush1.msra.mxu0 0.0
  %980 = vmatprep.mubr.f32.mxu0 0.0
  %981 = vmatmul.mubr.f32.gmra.mrb[0].mxu0 %v907
  %v982 = vpop.f32.mrb[0].mxu0
  %v983 = vadd.f32 %v395, %v982
  %v984 = vpop.f32.mrb[0].mxu0
  %v985 = vadd.f32 %v399, %v984
  %986 = vdwg.mxu0
  %987 = vmatprep.subr.mxu0 0.0
  %988 = vmatpush1.msra.mxu0 %v338
  %989 = vmatprep.subr.mxu0 0.0
  %990 = vmatpush1.msra.mxu0 %v341
  %991 = vmatprep.subr.mxu0 0.0
  %992 = vmatpush1.msra.mxu0 %v344
  %993 = vmatprep.subr.mxu0 0.0
  %994 = vmatpush1.msra.mxu0 %v347
  %995 = vmatprep.subr.mxu0 0.0
  %996 = vmatpush1.msra.mxu0 %v350
  %997 = vmatprep.subr.mxu0 0.0
  %998 = vmatpush1.msra.mxu0 %v353
  %999 = vmatprep.subr.mxu0 0.0
  %1000 = vmatpush1.msra.mxu0 %v356
  %1001 = vmatprep.subr.mxu0 0.0
  %1002 = vmatpush1.msra.mxu0 %v359
  %1003 = vmatprep.subr.mxu0 0.0
  %1004 = vmatpush1.msra.mxu0 %v362
  %1005 = vmatprep.subr.mxu0 0.0
  %1006 = vmatpush1.msra.mxu0 %v365
  %1007 = vmatprep.subr.mxu0 0.0
  %1008 = vmatpush1.msra.mxu0 %v368
  %1009 = vmatprep.subr.mxu0 0.0
  %1010 = vmatpush1.msra.mxu0 %v371
  %1011 = vmatprep.subr.mxu0 0.0
  %1012 = vmatpush1.msra.mxu0 %v374
  %1013 = vmatprep.subr.mxu0 0.0
  %1014 = vmatpush1.msra.mxu0 %v377
  %1015 = vmatprep.subr.mxu0 0.0
  %1016 = vmatpush1.msra.mxu0 %v380
  %1017 = vmatprep.subr.mxu0 0.0
  %1018 = vmatpush1.msra.mxu0 %v383
  %1019 = vmatprep.subr.mxu0 0.0
  %1020 = vmatpush1.msra.mxu0 0.0
  %1021 = vmatprep.subr.mxu0 0.0
  %1022 = vmatpush1.msra.mxu0 0.0
  %1023 = vmatprep.subr.mxu0 0.0
  %1024 = vmatpush1.msra.mxu0 0.0
  %1025 = vmatprep.subr.mxu0 0.0
  %1026 = vmatpush1.msra.mxu0 0.0
  %1027 = vmatprep.subr.mxu0 0.0
  %1028 = vmatpush1.msra.mxu0 0.0
  %1029 = vmatprep.subr.mxu0 0.0
  %1030 = vmatpush1.msra.mxu0 0.0
  %1031 = vmatprep.subr.mxu0 0.0
  %1032 = vmatpush1.msra.mxu0 0.0
  %1033 = vmatprep.subr.mxu0 0.0
  %1034 = vmatpush1.msra.mxu0 0.0
  %1035 = vmatprep.subr.mxu0 0.0
  %1036 = vmatpush1.msra.mxu0 0.0
  %1037 = vmatprep.subr.mxu0 0.0
  %1038 = vmatpush1.msra.mxu0 0.0
  %1039 = vmatprep.subr.mxu0 0.0
  %1040 = vmatpush1.msra.mxu0 0.0
  %1041 = vmatprep.subr.mxu0 0.0
  %1042 = vmatpush1.msra.mxu0 0.0
  %1043 = vmatprep.subr.mxu0 0.0
  %1044 = vmatpush1.msra.mxu0 0.0
  %1045 = vmatprep.subr.mxu0 0.0
  %1046 = vmatpush1.msra.mxu0 0.0
  %1047 = vmatprep.subr.mxu0 0.0
  %1048 = vmatpush1.msra.mxu0 0.0
  %1049 = vmatprep.subr.mxu0 0.0
  %1050 = vmatpush1.msra.mxu0 0.0
  %1051 = vmatprep.mubr.f32.mxu0 0.0
  %1052 = vmatmul.mubr.f32.gmra.mrb[0].mxu0 %v907
  %v1053 = vpop.f32.mrb[0].mxu0
  %v1054 = vadd.f32 %v403, %v1053
  %v1055 = vpop.f32.mrb[0].mxu0
  %1056 = vdwg.mxu0
  %v1057 = vadd.f32 %v913, %v983
  %v1058 = vxor.u32 %v1057, 2147483648
  %v1059 = vmul.f32 %v1058, 1.442695
  %v1060 = vpow.pop %v1059
  %v1061 = vadd.f32 %v1060, 1.0
  %v1062 = vrcp.pop %v1061
  %v1063 = vmul.f32 1.0, %v1062
  %v1064 = vadd.f32 %v914, %v985
  %v1065 = vxor.u32 %v1064, 2147483648
  %v1066 = vmul.f32 %v1065, 1.442695
  %v1067 = vpow.pop %v1066
  %v1068 = vadd.f32 %v1067, 1.0
  %v1069 = vrcp.pop %v1068
  %v1070 = vmul.f32 1.0, %v1069
  %v1071 = vmul.f32 %v1063, %v1054
  %v1072 = vadd.f32 %v915, %v1071
  %v1073 = vtanh.pop %v1072
  %v1074 = vsub.f32 1.0, %v1070
  %v1075 = vmul.f32 %v1074, %v1073
  %v1076 = vmul.f32 %v1070, %v907
  %v1077 = vadd.f32 %v1075, %v1076
  %s1078 = scalar_lea.vmem [#allocation2], 24
  %1079 = vst [vmem:[%s1078] sm:$0xff] %v1077
  %s1080 = smul.u32 4, 3
  %s1081 = smul.addr %s1080, 8
  %s1082 = scalar_lea.vmem [#allocation3], %s1081
  %v1083 = vld [vmem:[%s1082] sm:$0xff]
  %v1084 = vld [vmem:[%s1082 + $0x8] sm:$0xff]
  %v1085 = vld [vmem:[%s1082 + $0x10] sm:$0xff]
  %1086 = vmatprep.subr.mxu0 %v337
  %1087 = vmatpush1.msra.mxu0 %v336
  %1088 = vmatprep.subr.mxu0 %v340
  %1089 = vmatpush1.msra.mxu0 %v339
  %1090 = vmatprep.subr.mxu0 %v343
  %1091 = vmatpush1.msra.mxu0 %v342
  %1092 = vmatprep.subr.mxu0 %v346
  %1093 = vmatpush1.msra.mxu0 %v345
  %1094 = vmatprep.subr.mxu0 %v349
  %1095 = vmatpush1.msra.mxu0 %v348
  %1096 = vmatprep.subr.mxu0 %v352
  %1097 = vmatpush1.msra.mxu0 %v351
  %1098 = vmatprep.subr.mxu0 %v355
  %1099 = vmatpush1.msra.mxu0 %v354
  %1100 = vmatprep.subr.mxu0 %v358
  %1101 = vmatpush1.msra.mxu0 %v357
  %1102 = vmatprep.subr.mxu0 %v361
  %1103 = vmatpush1.msra.mxu0 %v360
  %1104 = vmatprep.subr.mxu0 %v364
  %1105 = vmatpush1.msra.mxu0 %v363
  %1106 = vmatprep.subr.mxu0 %v367
  %1107 = vmatpush1.msra.mxu0 %v366
  %1108 = vmatprep.subr.mxu0 %v370
  %1109 = vmatpush1.msra.mxu0 %v369
  %1110 = vmatprep.subr.mxu0 %v373
  %1111 = vmatpush1.msra.mxu0 %v372
  %1112 = vmatprep.subr.mxu0 %v376
  %1113 = vmatpush1.msra.mxu0 %v375
  %1114 = vmatprep.subr.mxu0 %v379
  %1115 = vmatpush1.msra.mxu0 %v378
  %1116 = vmatprep.subr.mxu0 %v382
  %1117 = vmatpush1.msra.mxu0 %v381
  %1118 = vmatprep.subr.mxu0 0.0
  %1119 = vmatpush1.msra.mxu0 0.0
  %1120 = vmatprep.subr.mxu0 0.0
  %1121 = vmatpush1.msra.mxu0 0.0
  %1122 = vmatprep.subr.mxu0 0.0
  %1123 = vmatpush1.msra.mxu0 0.0
  %1124 = vmatprep.subr.mxu0 0.0
  %1125 = vmatpush1.msra.mxu0 0.0
  %1126 = vmatprep.subr.mxu0 0.0
  %1127 = vmatpush1.msra.mxu0 0.0
  %1128 = vmatprep.subr.mxu0 0.0
  %1129 = vmatpush1.msra.mxu0 0.0
  %1130 = vmatprep.subr.mxu0 0.0
  %1131 = vmatpush1.msra.mxu0 0.0
  %1132 = vmatprep.subr.mxu0 0.0
  %1133 = vmatpush1.msra.mxu0 0.0
  %1134 = vmatprep.subr.mxu0 0.0
  %1135 = vmatpush1.msra.mxu0 0.0
  %1136 = vmatprep.subr.mxu0 0.0
  %1137 = vmatpush1.msra.mxu0 0.0
  %1138 = vmatprep.subr.mxu0 0.0
  %1139 = vmatpush1.msra.mxu0 0.0
  %1140 = vmatprep.subr.mxu0 0.0
  %1141 = vmatpush1.msra.mxu0 0.0
  %1142 = vmatprep.subr.mxu0 0.0
  %1143 = vmatpush1.msra.mxu0 0.0
  %1144 = vmatprep.subr.mxu0 0.0
  %1145 = vmatpush1.msra.mxu0 0.0
  %1146 = vmatprep.subr.mxu0 0.0
  %1147 = vmatpush1.msra.mxu0 0.0
  %1148 = vmatprep.subr.mxu0 0.0
  %1149 = vmatpush1.msra.mxu0 0.0
  %1150 = vmatprep.mubr.f32.mxu0 0.0
  %1151 = vmatmul.mubr.f32.gmra.mrb[0].mxu0 %v1077
  %v1152 = vpop.f32.mrb[0].mxu0
  %v1153 = vadd.f32 %v395, %v1152
  %v1154 = vpop.f32.mrb[0].mxu0
  %v1155 = vadd.f32 %v399, %v1154
  %1156 = vdwg.mxu0
  %1157 = vmatprep.subr.mxu0 0.0
  %1158 = vmatpush1.msra.mxu0 %v338
  %1159 = vmatprep.subr.mxu0 0.0
  %1160 = vmatpush1.msra.mxu0 %v341
  %1161 = vmatprep.subr.mxu0 0.0
  %1162 = vmatpush1.msra.mxu0 %v344
  %1163 = vmatprep.subr.mxu0 0.0
  %1164 = vmatpush1.msra.mxu0 %v347
  %1165 = vmatprep.subr.mxu0 0.0
  %1166 = vmatpush1.msra.mxu0 %v350
  %1167 = vmatprep.subr.mxu0 0.0
  %1168 = vmatpush1.msra.mxu0 %v353
  %1169 = vmatprep.subr.mxu0 0.0
  %1170 = vmatpush1.msra.mxu0 %v356
  %1171 = vmatprep.subr.mxu0 0.0
  %1172 = vmatpush1.msra.mxu0 %v359
  %1173 = vmatprep.subr.mxu0 0.0
  %1174 = vmatpush1.msra.mxu0 %v362
  %1175 = vmatprep.subr.mxu0 0.0
  %1176 = vmatpush1.msra.mxu0 %v365
  %1177 = vmatprep.subr.mxu0 0.0
  %1178 = vmatpush1.msra.mxu0 %v368
  %1179 = vmatprep.subr.mxu0 0.0
  %1180 = vmatpush1.msra.mxu0 %v371
  %1181 = vmatprep.subr.mxu0 0.0
  %1182 = vmatpush1.msra.mxu0 %v374
  %1183 = vmatprep.subr.mxu0 0.0
  %1184 = vmatpush1.msra.mxu0 %v377
  %1185 = vmatprep.subr.mxu0 0.0
  %1186 = vmatpush1.msra.mxu0 %v380
  %1187 = vmatprep.subr.mxu0 0.0
  %1188 = vmatpush1.msra.mxu0 %v383
  %1189 = vmatprep.subr.mxu0 0.0
  %1190 = vmatpush1.msra.mxu0 0.0
  %1191 = vmatprep.subr.mxu0 0.0
  %1192 = vmatpush1.msra.mxu0 0.0
  %1193 = vmatprep.subr.mxu0 0.0
  %1194 = vmatpush1.msra.mxu0 0.0
  %1195 = vmatprep.subr.mxu0 0.0
  %1196 = vmatpush1.msra.mxu0 0.0
  %1197 = vmatprep.subr.mxu0 0.0
  %1198 = vmatpush1.msra.mxu0 0.0
  %1199 = vmatprep.subr.mxu0 0.0
  %1200 = vmatpush1.msra.mxu0 0.0
  %1201 = vmatprep.subr.mxu0 0.0
  %1202 = vmatpush1.msra.mxu0 0.0
  %1203 = vmatprep.subr.mxu0 0.0
  %1204 = vmatpush1.msra.mxu0 0.0
  %1205 = vmatprep.subr.mxu0 0.0
  %1206 = vmatpush1.msra.mxu0 0.0
  %1207 = vmatprep.subr.mxu0 0.0
  %1208 = vmatpush1.msra.mxu0 0.0
  %1209 = vmatprep.subr.mxu0 0.0
  %1210 = vmatpush1.msra.mxu0 0.0
  %1211 = vmatprep.subr.mxu0 0.0
  %1212 = vmatpush1.msra.mxu0 0.0
  %1213 = vmatprep.subr.mxu0 0.0
  %1214 = vmatpush1.msra.mxu0 0.0
  %1215 = vmatprep.subr.mxu0 0.0
  %1216 = vmatpush1.msra.mxu0 0.0
  %1217 = vmatprep.subr.mxu0 0.0
  %1218 = vmatpush1.msra.mxu0 0.0
  %1219 = vmatprep.subr.mxu0 0.0
  %1220 = vmatpush1.msra.mxu0 0.0
  %1221 = vmatprep.mubr.f32.mxu0 0.0
  %1222 = vmatmul.mubr.f32.gmra.mrb[0].mxu0 %v1077
  %v1223 = vpop.f32.mrb[0].mxu0
  %v1224 = vadd.f32 %v403, %v1223
  %v1225 = vpop.f32.mrb[0].mxu0
  %1226 = vdwg.mxu0
  %v1227 = vadd.f32 %v1083, %v1153
  %v1228 = vxor.u32 %v1227, 2147483648
  %v1229 = vmul.f32 %v1228, 1.442695
  %v1230 = vpow.pop %v1229
  %v1231 = vadd.f32 %v1230, 1.0
  %v1232 = vrcp.pop %v1231
  %v1233 = vmul.f32 1.0, %v1232
  %v1234 = vadd.f32 %v1084, %v1155
  %v1235 = vxor.u32 %v1234, 2147483648
  %v1236 = vmul.f32 %v1235, 1.442695
  %v1237 = vpow.pop %v1236
  %v1238 = vadd.f32 %v1237, 1.0
  %v1239 = vrcp.pop %v1238
  %v1240 = vmul.f32 1.0, %v1239
  %v1241 = vmul.f32 %v1233, %v1224
  %v1242 = vadd.f32 %v1085, %v1241
  %v1243 = vtanh.pop %v1242
  %v1244 = vsub.f32 1.0, %v1240
  %v1245 = vmul.f32 %v1244, %v1243
  %v1246 = vmul.f32 %v1240, %v1077
  %v1247 = vadd.f32 %v1245, %v1246
  %s1248 = scalar_lea.vmem [#allocation2], 32
  %1249 = vst [vmem:[%s1248] sm:$0xff] %v1247
  %s1250 = smul.u32 5, 3
  %s1251 = smul.addr %s1250, 8
  %s1252 = scalar_lea.vmem [#allocation3], %s1251
  %v1253 = vld [vmem:[%s1252] sm:$0xff]
  %v1254 = vld [vmem:[%s1252 + $0x8] sm:$0xff]
  %v1255 = vld [vmem:[%s1252 + $0x10] sm:$0xff]
  %1256 = vmatprep.subr.mxu0 %v337
  %1257 = vmatpush1.msra.mxu0 %v336
  %1258 = vmatprep.subr.mxu0 %v340
  %1259 = vmatpush1.msra.mxu0 %v339
  %1260 = vmatprep.subr.mxu0 %v343
  %1261 = vmatpush1.msra.mxu0 %v342
  %1262 = vmatprep.subr.mxu0 %v346
  %1263 = vmatpush1.msra.mxu0 %v345
  %1264 = vmatprep.subr.mxu0 %v349
  %1265 = vmatpush1.msra.mxu0 %v348
  %1266 = vmatprep.subr.mxu0 %v352
  %1267 = vmatpush1.msra.mxu0 %v351
  %1268 = vmatprep.subr.mxu0 %v355
  %1269 = vmatpush1.msra.mxu0 %v354
  %1270 = vmatprep.subr.mxu0 %v358
  %1271 = vmatpush1.msra.mxu0 %v357
  %1272 = vmatprep.subr.mxu0 %v361
  %1273 = vmatpush1.msra.mxu0 %v360
  %1274 = vmatprep.subr.mxu0 %v364
  %1275 = vmatpush1.msra.mxu0 %v363
  %1276 = vmatprep.subr.mxu0 %v367
  %1277 = vmatpush1.msra.mxu0 %v366
  %1278 = vmatprep.subr.mxu0 %v370
  %1279 = vmatpush1.msra.mxu0 %v369
  %1280 = vmatprep.subr.mxu0 %v373
  %1281 = vmatpush1.msra.mxu0 %v372
  %1282 = vmatprep.subr.mxu0 %v376
  %1283 = vmatpush1.msra.mxu0 %v375
  %1284 = vmatprep.subr.mxu0 %v379
  %1285 = vmatpush1.msra.mxu0 %v378
  %1286 = vmatprep.subr.mxu0 %v382
  %1287 = vmatpush1.msra.mxu0 %v381
  %1288 = vmatprep.subr.mxu0 0.0
  %1289 = vmatpush1.msra.mxu0 0.0
  %1290 = vmatprep.subr.mxu0 0.0
  %1291 = vmatpush1.msra.mxu0 0.0
  %1292 = vmatprep.subr.mxu0 0.0
  %1293 = vmatpush1.msra.mxu0 0.0
  %1294 = vmatprep.subr.mxu0 0.0
  %1295 = vmatpush1.msra.mxu0 0.0
  %1296 = vmatprep.subr.mxu0 0.0
  %1297 = vmatpush1.msra.mxu0 0.0
  %1298 = vmatprep.subr.mxu0 0.0
  %1299 = vmatpush1.msra.mxu0 0.0
  %1300 = vmatprep.subr.mxu0 0.0
  %1301 = vmatpush1.msra.mxu0 0.0
  %1302 = vmatprep.subr.mxu0 0.0
  %1303 = vmatpush1.msra.mxu0 0.0
  %1304 = vmatprep.subr.mxu0 0.0
  %1305 = vmatpush1.msra.mxu0 0.0
  %1306 = vmatprep.subr.mxu0 0.0
  %1307 = vmatpush1.msra.mxu0 0.0
  %1308 = vmatprep.subr.mxu0 0.0
  %1309 = vmatpush1.msra.mxu0 0.0
  %1310 = vmatprep.subr.mxu0 0.0
  %1311 = vmatpush1.msra.mxu0 0.0
  %1312 = vmatprep.subr.mxu0 0.0
  %1313 = vmatpush1.msra.mxu0 0.0
  %1314 = vmatprep.subr.mxu0 0.0
  %1315 = vmatpush1.msra.mxu0 0.0
  %1316 = vmatprep.subr.mxu0 0.0
  %1317 = vmatpush1.msra.mxu0 0.0
  %1318 = vmatprep.subr.mxu0 0.0
  %1319 = vmatpush1.msra.mxu0 0.0
  %1320 = vmatprep.mubr.f32.mxu0 0.0
  %1321 = vmatmul.mubr.f32.gmra.mrb[0].mxu0 %v1247
  %v1322 = vpop.f32.mrb[0].mxu0
  %v1323 = vadd.f32 %v395, %v1322
  %v1324 = vpop.f32.mrb[0].mxu0
  %v1325 = vadd.f32 %v399, %v1324
  %1326 = vdwg.mxu0
  %1327 = vmatprep.subr.mxu0 0.0
  %1328 = vmatpush1.msra.mxu0 %v338
  %1329 = vmatprep.subr.mxu0 0.0
  %1330 = vmatpush1.msra.mxu0 %v341
  %1331 = vmatprep.subr.mxu0 0.0
  %1332 = vmatpush1.msra.mxu0 %v344
  %1333 = vmatprep.subr.mxu0 0.0
  %1334 = vmatpush1.msra.mxu0 %v347
  %1335 = vmatprep.subr.mxu0 0.0
  %1336 = vmatpush1.msra.mxu0 %v350
  %1337 = vmatprep.subr.mxu0 0.0
  %1338 = vmatpush1.msra.mxu0 %v353
  %1339 = vmatprep.subr.mxu0 0.0
  %1340 = vmatpush1.msra.mxu0 %v356
  %1341 = vmatprep.subr.mxu0 0.0
  %1342 = vmatpush1.msra.mxu0 %v359
  %1343 = vmatprep.subr.mxu0 0.0
  %1344 = vmatpush1.msra.mxu0 %v362
  %1345 = vmatprep.subr.mxu0 0.0
  %1346 = vmatpush1.msra.mxu0 %v365
  %1347 = vmatprep.subr.mxu0 0.0
  %1348 = vmatpush1.msra.mxu0 %v368
  %1349 = vmatprep.subr.mxu0 0.0
  %1350 = vmatpush1.msra.mxu0 %v371
  %1351 = vmatprep.subr.mxu0 0.0
  %1352 = vmatpush1.msra.mxu0 %v374
  %1353 = vmatprep.subr.mxu0 0.0
  %1354 = vmatpush1.msra.mxu0 %v377
  %1355 = vmatprep.subr.mxu0 0.0
  %1356 = vmatpush1.msra.mxu0 %v380
  %1357 = vmatprep.subr.mxu0 0.0
  %1358 = vmatpush1.msra.mxu0 %v383
  %1359 = vmatprep.subr.mxu0 0.0
  %1360 = vmatpush1.msra.mxu0 0.0
  %1361 = vmatprep.subr.mxu0 0.0
  %1362 = vmatpush1.msra.mxu0 0.0
  %1363 = vmatprep.subr.mxu0 0.0
  %1364 = vmatpush1.msra.mxu0 0.0
  %1365 = vmatprep.subr.mxu0 0.0
  %1366 = vmatpush1.msra.mxu0 0.0
  %1367 = vmatprep.subr.mxu0 0.0
  %1368 = vmatpush1.msra.mxu0 0.0
  %1369 = vmatprep.subr.mxu0 0.0
  %1370 = vmatpush1.msra.mxu0 0.0
  %1371 = vmatprep.subr.mxu0 0.0
  %1372 = vmatpush1.msra.mxu0 0.0
  %1373 = vmatprep.subr.mxu0 0.0
  %1374 = vmatpush1.msra.mxu0 0.0
  %1375 = vmatprep.subr.mxu0 0.0
  %1376 = vmatpush1.msra.mxu0 0.0
  %1377 = vmatprep.subr.mxu0 0.0
  %1378 = vmatpush1.msra.mxu0 0.0
  %1379 = vmatprep.subr.mxu0 0.0
  %1380 = vmatpush1.msra.mxu0 0.0
  %1381 = vmatprep.subr.mxu0 0.0
  %1382 = vmatpush1.msra.mxu0 0.0
  %1383 = vmatprep.subr.mxu0 0.0
  %1384 = vmatpush1.msra.mxu0 0.0
  %1385 = vmatprep.subr.mxu0 0.0
  %1386 = vmatpush1.msra.mxu0 0.0
  %1387 = vmatprep.subr.mxu0 0.0
  %1388 = vmatpush1.msra.mxu0 0.0
  %1389 = vmatprep.subr.mxu0 0.0
  %1390 = vmatpush1.msra.mxu0 0.0
  %1391 = vmatprep.mubr.f32.mxu0 0.0
  %1392 = vmatmul.mubr.f32.gmra.mrb[0].mxu0 %v1247
  %v1393 = vpop.f32.mrb[0].mxu0
  %v1394 = vadd.f32 %v403, %v1393
  %v1395 = vpop.f32.mrb[0].mxu0
  %1396 = vdwg.mxu0
  %v1397 = vadd.f32 %v1253, %v1323
  %v1398 = vxor.u32 %v1397, 2147483648
  %v1399 = vmul.f32 %v1398, 1.442695
  %v1400 = vpow.pop %v1399
  %v1401 = vadd.f32 %v1400, 1.0
  %v1402 = vrcp.pop %v1401
  %v1403 = vmul.f32 1.0, %v1402
  %v1404 = vadd.f32 %v1254, %v1325
  %v1405 = vxor.u32 %v1404, 2147483648
  %v1406 = vmul.f32 %v1405, 1.442695
  %v1407 = vpow.pop %v1406
  %v1408 = vadd.f32 %v1407, 1.0
  %v1409 = vrcp.pop %v1408
  %v1410 = vmul.f32 1.0, %v1409
  %v1411 = vmul.f32 %v1403, %v1394
  %v1412 = vadd.f32 %v1255, %v1411
  %v1413 = vtanh.pop %v1412
  %v1414 = vsub.f32 1.0, %v1410
  %v1415 = vmul.f32 %v1414, %v1413
  %v1416 = vmul.f32 %v1410, %v1247
  %v1417 = vadd.f32 %v1415, %v1416
  %s1418 = scalar_lea.vmem [#allocation2], 40
  %1419 = vst [vmem:[%s1418] sm:$0xff] %v1417
  %s1420 = smul.u32 6, 3
  %s1421 = smul.addr %s1420, 8
  %s1422 = scalar_lea.vmem [#allocation3], %s1421
  %v1423 = vld [vmem:[%s1422] sm:$0xff]
  %v1424 = vld [vmem:[%s1422 + $0x8] sm:$0xff]
  %v1425 = vld [vmem:[%s1422 + $0x10] sm:$0xff]
  %1426 = vmatprep.subr.mxu0 %v337
  %1427 = vmatpush1.msra.mxu0 %v336
  %1428 = vmatprep.subr.mxu0 %v340
  %1429 = vmatpush1.msra.mxu0 %v339
  %1430 = vmatprep.subr.mxu0 %v343
  %1431 = vmatpush1.msra.mxu0 %v342
  %1432 = vmatprep.subr.mxu0 %v346
  %1433 = vmatpush1.msra.mxu0 %v345
  %1434 = vmatprep.subr.mxu0 %v349
  %1435 = vmatpush1.msra.mxu0 %v348
  %1436 = vmatprep.subr.mxu0 %v352
  %1437 = vmatpush1.msra.mxu0 %v351
  %1438 = vmatprep.subr.mxu0 %v355
  %1439 = vmatpush1.msra.mxu0 %v354
  %1440 = vmatprep.subr.mxu0 %v358
  %1441 = vmatpush1.msra.mxu0 %v357
  %1442 = vmatprep.subr.mxu0 %v361
  %1443 = vmatpush1.msra.mxu0 %v360
  %1444 = vmatprep.subr.mxu0 %v364
  %1445 = vmatpush1.msra.mxu0 %v363
  %1446 = vmatprep.subr.mxu0 %v367
  %1447 = vmatpush1.msra.mxu0 %v366
  %1448 = vmatprep.subr.mxu0 %v370
  %1449 = vmatpush1.msra.mxu0 %v369
  %1450 = vmatprep.subr.mxu0 %v373
  %1451 = vmatpush1.msra.mxu0 %v372
  %1452 = vmatprep.subr.mxu0 %v376
  %1453 = vmatpush1.msra.mxu0 %v375
  %1454 = vmatprep.subr.mxu0 %v379
  %1455 = vmatpush1.msra.mxu0 %v378
  %1456 = vmatprep.subr.mxu0 %v382
  %1457 = vmatpush1.msra.mxu0 %v381
  %1458 = vmatprep.subr.mxu0 0.0
  %1459 = vmatpush1.msra.mxu0 0.0
  %1460 = vmatprep.subr.mxu0 0.0
  %1461 = vmatpush1.msra.mxu0 0.0
  %1462 = vmatprep.subr.mxu0 0.0
  %1463 = vmatpush1.msra.mxu0 0.0
  %1464 = vmatprep.subr.mxu0 0.0
  %1465 = vmatpush1.msra.mxu0 0.0
  %1466 = vmatprep.subr.mxu0 0.0
  %1467 = vmatpush1.msra.mxu0 0.0
  %1468 = vmatprep.subr.mxu0 0.0
  %1469 = vmatpush1.msra.mxu0 0.0
  %1470 = vmatprep.subr.mxu0 0.0
  %1471 = vmatpush1.msra.mxu0 0.0
  %1472 = vmatprep.subr.mxu0 0.0
  %1473 = vmatpush1.msra.mxu0 0.0
  %1474 = vmatprep.subr.mxu0 0.0
  %1475 = vmatpush1.msra.mxu0 0.0
  %1476 = vmatprep.subr.mxu0 0.0
  %1477 = vmatpush1.msra.mxu0 0.0
  %1478 = vmatprep.subr.mxu0 0.0
  %1479 = vmatpush1.msra.mxu0 0.0
  %1480 = vmatprep.subr.mxu0 0.0
  %1481 = vmatpush1.msra.mxu0 0.0
  %1482 = vmatprep.subr.mxu0 0.0
  %1483 = vmatpush1.msra.mxu0 0.0
  %1484 = vmatprep.subr.mxu0 0.0
  %1485 = vmatpush1.msra.mxu0 0.0
  %1486 = vmatprep.subr.mxu0 0.0
  %1487 = vmatpush1.msra.mxu0 0.0
  %1488 = vmatprep.subr.mxu0 0.0
  %1489 = vmatpush1.msra.mxu0 0.0
  %1490 = vmatprep.mubr.f32.mxu0 0.0
  %1491 = vmatmul.mubr.f32.gmra.mrb[0].mxu0 %v1417
  %v1492 = vpop.f32.mrb[0].mxu0
  %v1493 = vadd.f32 %v395, %v1492
  %v1494 = vpop.f32.mrb[0].mxu0
  %v1495 = vadd.f32 %v399, %v1494
  %1496 = vdwg.mxu0
  %1497 = vmatprep.subr.mxu0 0.0
  %1498 = vmatpush1.msra.mxu0 %v338
  %1499 = vmatprep.subr.mxu0 0.0
  %1500 = vmatpush1.msra.mxu0 %v341
  %1501 = vmatprep.subr.mxu0 0.0
  %1502 = vmatpush1.msra.mxu0 %v344
  %1503 = vmatprep.subr.mxu0 0.0
  %1504 = vmatpush1.msra.mxu0 %v347
  %1505 = vmatprep.subr.mxu0 0.0
  %1506 = vmatpush1.msra.mxu0 %v350
  %1507 = vmatprep.subr.mxu0 0.0
  %1508 = vmatpush1.msra.mxu0 %v353
  %1509 = vmatprep.subr.mxu0 0.0
  %1510 = vmatpush1.msra.mxu0 %v356
  %1511 = vmatprep.subr.mxu0 0.0
  %1512 = vmatpush1.msra.mxu0 %v359
  %1513 = vmatprep.subr.mxu0 0.0
  %1514 = vmatpush1.msra.mxu0 %v362
  %1515 = vmatprep.subr.mxu0 0.0
  %1516 = vmatpush1.msra.mxu0 %v365
  %1517 = vmatprep.subr.mxu0 0.0
  %1518 = vmatpush1.msra.mxu0 %v368
  %1519 = vmatprep.subr.mxu0 0.0
  %1520 = vmatpush1.msra.mxu0 %v371
  %1521 = vmatprep.subr.mxu0 0.0
  %1522 = vmatpush1.msra.mxu0 %v374
  %1523 = vmatprep.subr.mxu0 0.0
  %1524 = vmatpush1.msra.mxu0 %v377
  %1525 = vmatprep.subr.mxu0 0.0
  %1526 = vmatpush1.msra.mxu0 %v380
  %1527 = vmatprep.subr.mxu0 0.0
  %1528 = vmatpush1.msra.mxu0 %v383
  %1529 = vmatprep.subr.mxu0 0.0
  %1530 = vmatpush1.msra.mxu0 0.0
  %1531 = vmatprep.subr.mxu0 0.0
  %1532 = vmatpush1.msra.mxu0 0.0
  %1533 = vmatprep.subr.mxu0 0.0
  %1534 = vmatpush1.msra.mxu0 0.0
  %1535 = vmatprep.subr.mxu0 0.0
  %1536 = vmatpush1.msra.mxu0 0.0
  %1537 = vmatprep.subr.mxu0 0.0
  %1538 = vmatpush1.msra.mxu0 0.0
  %1539 = vmatprep.subr.mxu0 0.0
  %1540 = vmatpush1.msra.mxu0 0.0
  %1541 = vmatprep.subr.mxu0 0.0
  %1542 = vmatpush1.msra.mxu0 0.0
  %1543 = vmatprep.subr.mxu0 0.0
  %1544 = vmatpush1.msra.mxu0 0.0
  %1545 = vmatprep.subr.mxu0 0.0
  %1546 = vmatpush1.msra.mxu0 0.0
  %1547 = vmatprep.subr.mxu0 0.0
  %1548 = vmatpush1.msra.mxu0 0.0
  %1549 = vmatprep.subr.mxu0 0.0
  %1550 = vmatpush1.msra.mxu0 0.0
  %1551 = vmatprep.subr.mxu0 0.0
  %1552 = vmatpush1.msra.mxu0 0.0
  %1553 = vmatprep.subr.mxu0 0.0
  %1554 = vmatpush1.msra.mxu0 0.0
  %1555 = vmatprep.subr.mxu0 0.0
  %1556 = vmatpush1.msra.mxu0 0.0
  %1557 = vmatprep.subr.mxu0 0.0
  %1558 = vmatpush1.msra.mxu0 0.0
  %1559 = vmatprep.subr.mxu0 0.0
  %1560 = vmatpush1.msra.mxu0 0.0
  %1561 = vmatprep.mubr.f32.mxu0 0.0
  %1562 = vmatmul.mubr.f32.gmra.mrb[0].mxu0 %v1417
  %v1563 = vpop.f32.mrb[0].mxu0
  %v1564 = vadd.f32 %v403, %v1563
  %v1565 = vpop.f32.mrb[0].mxu0
  %1566 = vdwg.mxu0
  %v1567 = vadd.f32 %v1423, %v1493
  %v1568 = vxor.u32 %v1567, 2147483648
  %v1569 = vmul.f32 %v1568, 1.442695
  %v1570 = vpow.pop %v1569
  %v1571 = vadd.f32 %v1570, 1.0
  %v1572 = vrcp.pop %v1571
  %v1573 = vmul.f32 1.0, %v1572
  %v1574 = vadd.f32 %v1424, %v1495
  %v1575 = vxor.u32 %v1574, 2147483648
  %v1576 = vmul.f32 %v1575, 1.442695
  %v1577 = vpow.pop %v1576
  %v1578 = vadd.f32 %v1577, 1.0
  %v1579 = vrcp.pop %v1578
  %v1580 = vmul.f32 1.0, %v1579
  %v1581 = vmul.f32 %v1573, %v1564
  %v1582 = vadd.f32 %v1425, %v1581
  %v1583 = vtanh.pop %v1582
  %v1584 = vsub.f32 1.0, %v1580
  %v1585 = vmul.f32 %v1584, %v1583
  %v1586 = vmul.f32 %v1580, %v1417
  %v1587 = vadd.f32 %v1585, %v1586
  %s1588 = scalar_lea.vmem [#allocation2], 48
  %1589 = vst [vmem:[%s1588] sm:$0xff] %v1587
  %s1590 = smul.u32 7, 3
  %s1591 = smul.addr %s1590, 8
  %s1592 = scalar_lea.vmem [#allocation3], %s1591
  %v1593 = vld [vmem:[%s1592] sm:$0xff]
  %v1594 = vld [vmem:[%s1592 + $0x8] sm:$0xff]
  %v1595 = vld [vmem:[%s1592 + $0x10] sm:$0xff]
  %1596 = vmatprep.subr.mxu0 %v337
  %1597 = vmatpush1.msra.mxu0 %v336
  %1598 = vmatprep.subr.mxu0 %v340
  %1599 = vmatpush1.msra.mxu0 %v339
  %1600 = vmatprep.subr.mxu0 %v343
  %1601 = vmatpush1.msra.mxu0 %v342
  %1602 = vmatprep.subr.mxu0 %v346
  %1603 = vmatpush1.msra.mxu0 %v345
  %1604 = vmatprep.subr.mxu0 %v349
  %1605 = vmatpush1.msra.mxu0 %v348
  %1606 = vmatprep.subr.mxu0 %v352
  %1607 = vmatpush1.msra.mxu0 %v351
  %1608 = vmatprep.subr.mxu0 %v355
  %1609 = vmatpush1.msra.mxu0 %v354
  %1610 = vmatprep.subr.mxu0 %v358
  %1611 = vmatpush1.msra.mxu0 %v357
  %1612 = vmatprep.subr.mxu0 %v361
  %1613 = vmatpush1.msra.mxu0 %v360
  %1614 = vmatprep.subr.mxu0 %v364
  %1615 = vmatpush1.msra.mxu0 %v363
  %1616 = vmatprep.subr.mxu0 %v367
  %1617 = vmatpush1.msra.mxu0 %v366
  %1618 = vmatprep.subr.mxu0 %v370
  %1619 = vmatpush1.msra.mxu0 %v369
  %1620 = vmatprep.subr.mxu0 %v373
  %1621 = vmatpush1.msra.mxu0 %v372
  %1622 = vmatprep.subr.mxu0 %v376
  %1623 = vmatpush1.msra.mxu0 %v375
  %1624 = vmatprep.subr.mxu0 %v379
  %1625 = vmatpush1.msra.mxu0 %v378
  %1626 = vmatprep.subr.mxu0 %v382
  %1627 = vmatpush1.msra.mxu0 %v381
  %1628 = vmatprep.subr.mxu0 0.0
  %1629 = vmatpush1.msra.mxu0 0.0
  %1630 = vmatprep.subr.mxu0 0.0
  %1631 = vmatpush1.msra.mxu0 0.0
  %1632 = vmatprep.subr.mxu0 0.0
  %1633 = vmatpush1.msra.mxu0 0.0
  %1634 = vmatprep.subr.mxu0 0.0
  %1635 = vmatpush1.msra.mxu0 0.0
  %1636 = vmatprep.subr.mxu0 0.0
  %1637 = vmatpush1.msra.mxu0 0.0
  %1638 = vmatprep.subr.mxu0 0.0
  %1639 = vmatpush1.msra.mxu0 0.0
  %1640 = vmatprep.subr.mxu0 0.0
  %1641 = vmatpush1.msra.mxu0 0.0
  %1642 = vmatprep.subr.mxu0 0.0
  %1643 = vmatpush1.msra.mxu0 0.0
  %1644 = vmatprep.subr.mxu0 0.0
  %1645 = vmatpush1.msra.mxu0 0.0
  %1646 = vmatprep.subr.mxu0 0.0
  %1647 = vmatpush1.msra.mxu0 0.0
  %1648 = vmatprep.subr.mxu0 0.0
  %1649 = vmatpush1.msra.mxu0 0.0
  %1650 = vmatprep.subr.mxu0 0.0
  %1651 = vmatpush1.msra.mxu0 0.0
  %1652 = vmatprep.subr.mxu0 0.0
  %1653 = vmatpush1.msra.mxu0 0.0
  %1654 = vmatprep.subr.mxu0 0.0
  %1655 = vmatpush1.msra.mxu0 0.0
  %1656 = vmatprep.subr.mxu0 0.0
  %1657 = vmatpush1.msra.mxu0 0.0
  %1658 = vmatprep.subr.mxu0 0.0
  %1659 = vmatpush1.msra.mxu0 0.0
  %1660 = vmatprep.mubr.f32.mxu0 0.0
  %1661 = vmatmul.mubr.f32.gmra.mrb[0].mxu0 %v1587
  %v1662 = vpop.f32.mrb[0].mxu0
  %v1663 = vadd.f32 %v395, %v1662
  %v1664 = vpop.f32.mrb[0].mxu0
  %v1665 = vadd.f32 %v399, %v1664
  %1666 = vdwg.mxu0
  %1667 = vmatprep.subr.mxu0 0.0
  %1668 = vmatpush1.msra.mxu0 %v338
  %1669 = vmatprep.subr.mxu0 0.0
  %1670 = vmatpush1.msra.mxu0 %v341
  %1671 = vmatprep.subr.mxu0 0.0
  %1672 = vmatpush1.msra.mxu0 %v344
  %1673 = vmatprep.subr.mxu0 0.0
  %1674 = vmatpush1.msra.mxu0 %v347
  %1675 = vmatprep.subr.mxu0 0.0
  %1676 = vmatpush1.msra.mxu0 %v350
  %1677 = vmatprep.subr.mxu0 0.0
  %1678 = vmatpush1.msra.mxu0 %v353
  %1679 = vmatprep.subr.mxu0 0.0
  %1680 = vmatpush1.msra.mxu0 %v356
  %1681 = vmatprep.subr.mxu0 0.0
  %1682 = vmatpush1.msra.mxu0 %v359
  %1683 = vmatprep.subr.mxu0 0.0
  %1684 = vmatpush1.msra.mxu0 %v362
  %1685 = vmatprep.subr.mxu0 0.0
  %1686 = vmatpush1.msra.mxu0 %v365
  %1687 = vmatprep.subr.mxu0 0.0
  %1688 = vmatpush1.msra.mxu0 %v368
  %1689 = vmatprep.subr.mxu0 0.0
  %1690 = vmatpush1.msra.mxu0 %v371
  %1691 = vmatprep.subr.mxu0 0.0
  %1692 = vmatpush1.msra.mxu0 %v374
  %1693 = vmatprep.subr.mxu0 0.0
  %1694 = vmatpush1.msra.mxu0 %v377
  %1695 = vmatprep.subr.mxu0 0.0
  %1696 = vmatpush1.msra.mxu0 %v380
  %1697 = vmatprep.subr.mxu0 0.0
  %1698 = vmatpush1.msra.mxu0 %v383
  %1699 = vmatprep.subr.mxu0 0.0
  %1700 = vmatpush1.msra.mxu0 0.0
  %1701 = vmatprep.subr.mxu0 0.0
  %1702 = vmatpush1.msra.mxu0 0.0
  %1703 = vmatprep.subr.mxu0 0.0
  %1704 = vmatpush1.msra.mxu0 0.0
  %1705 = vmatprep.subr.mxu0 0.0
  %1706 = vmatpush1.msra.mxu0 0.0
  %1707 = vmatprep.subr.mxu0 0.0
  %1708 = vmatpush1.msra.mxu0 0.0
  %1709 = vmatprep.subr.mxu0 0.0
  %1710 = vmatpush1.msra.mxu0 0.0
  %1711 = vmatprep.subr.mxu0 0.0
  %1712 = vmatpush1.msra.mxu0 0.0
  %1713 = vmatprep.subr.mxu0 0.0
  %1714 = vmatpush1.msra.mxu0 0.0
  %1715 = vmatprep.subr.mxu0 0.0
  %1716 = vmatpush1.msra.mxu0 0.0
  %1717 = vmatprep.subr.mxu0 0.0
  %1718 = vmatpush1.msra.mxu0 0.0
  %1719 = vmatprep.subr.mxu0 0.0
  %1720 = vmatpush1.msra.mxu0 0.0
  %1721 = vmatprep.subr.mxu0 0.0
  %1722 = vmatpush1.msra.mxu0 0.0
  %1723 = vmatprep.subr.mxu0 0.0
  %1724 = vmatpush1.msra.mxu0 0.0
  %1725 = vmatprep.subr.mxu0 0.0
  %1726 = vmatpush1.msra.mxu0 0.0
  %1727 = vmatprep.subr.mxu0 0.0
  %1728 = vmatpush1.msra.mxu0 0.0
  %1729 = vmatprep.subr.mxu0 0.0
  %1730 = vmatpush1.msra.mxu0 0.0
  %1731 = vmatprep.mubr.f32.mxu0 0.0
  %1732 = vmatmul.mubr.f32.gmra.mrb[0].mxu0 %v1587
  %v1733 = vpop.f32.mrb[0].mxu0
  %v1734 = vadd.f32 %v403, %v1733
  %v1735 = vpop.f32.mrb[0].mxu0
  %1736 = vdwg.mxu0
  %v1737 = vadd.f32 %v1593, %v1663
  %v1738 = vxor.u32 %v1737, 2147483648
  %v1739 = vmul.f32 %v1738, 1.442695
  %v1740 = vpow.pop %v1739
  %v1741 = vadd.f32 %v1740, 1.0
  %v1742 = vrcp.pop %v1741
  %v1743 = vmul.f32 1.0, %v1742
  %v1744 = vadd.f32 %v1594, %v1665
  %v1745 = vxor.u32 %v1744, 2147483648
  %v1746 = vmul.f32 %v1745, 1.442695
  %v1747 = vpow.pop %v1746
  %v1748 = vadd.f32 %v1747, 1.0
  %v1749 = vrcp.pop %v1748
  %v1750 = vmul.f32 1.0, %v1749
  %v1751 = vmul.f32 %v1743, %v1734
  %v1752 = vadd.f32 %v1595, %v1751
  %v1753 = vtanh.pop %v1752
  %v1754 = vsub.f32 1.0, %v1750
  %v1755 = vmul.f32 %v1754, %v1753
  %v1756 = vmul.f32 %v1750, %v1587
  %v1757 = vadd.f32 %v1755, %v1756
  %s1758 = scalar_lea.vmem [#allocation2], 56
  %1759 = vst [vmem:[%s1758] sm:$0xff] %v1757
  %v1760 = vld [vmem:[#allocation2] sm:$0xff]
  %v1761 = vld [vmem:[#allocation2 + $0x8] sm:$0xff]
  %v1762 = vld [vmem:[#allocation2 + $0x10] sm:$0xff]
  %v1763 = vld [vmem:[#allocation2 + $0x18] sm:$0xff]
  %v1764 = vld [vmem:[#allocation2 + $0x20] sm:$0xff]
  %v1765 = vld [vmem:[#allocation2 + $0x28] sm:$0xff]
  %v1766 = vld [vmem:[#allocation2 + $0x30] sm:$0xff]
  %v1767 = vld [vmem:[#allocation2 + $0x38] sm:$0xff]
  %v1768 = vld [vmem:[%s5] sm:$0xff]
  %v1769 = vld [vmem:[%s5 + $0x8] sm:$0xff]
  %v1770 = vld [vmem:[%s5 + $0x10] sm:$0xff]
  %v1771 = vld [vmem:[%s5 + $0x18] sm:$0xff]
  %v1772 = vld [vmem:[%s5 + $0x20] sm:$0xff]
  %v1773 = vld [vmem:[%s5 + $0x28] sm:$0xff]
  %v1774 = vld [vmem:[%s5 + $0x30] sm:$0xff]
  %v1775 = vld [vmem:[%s5 + $0x38] sm:$0xff]
  %v1776 = vld [vmem:[%s5 + $0x40] sm:$0xff]
  %v1777 = vld [vmem:[%s5 + $0x48] sm:$0xff]
  %v1778 = vld [vmem:[%s5 + $0x50] sm:$0xff]
  %v1779 = vld [vmem:[%s5 + $0x58] sm:$0xff]
  %v1780 = vld [vmem:[%s5 + $0x60] sm:$0xff]
  %v1781 = vld [vmem:[%s5 + $0x68] sm:$0xff]
  %v1782 = vld [vmem:[%s5 + $0x70] sm:$0xff]
  %v1783 = vld [vmem:[%s5 + $0x78] sm:$0xff]
  %v1784 = vld [vmem:[%s5 + $0x80] sm:$0xff]
  %v1785 = vld [vmem:[%s5 + $0x88] sm:$0xff]
  %v1786 = vld [vmem:[%s5 + $0x90] sm:$0xff]
  %v1787 = vld [vmem:[%s5 + $0x98] sm:$0xff]
  %v1788 = vld [vmem:[%s5 + $0xa0] sm:$0xff]
  %v1789 = vld [vmem:[%s5 + $0xa8] sm:$0xff]
  %v1790 = vld [vmem:[%s5 + $0xb0] sm:$0xff]
  %v1791 = vld [vmem:[%s5 + $0xb8] sm:$0xff]
  %v1792 = vld [vmem:[%s5 + $0xc0] sm:$0xff]
  %v1793 = vld [vmem:[%s5 + $0xc8] sm:$0xff]
  %v1794 = vld [vmem:[%s5 + $0xd0] sm:$0xff]
  %v1795 = vld [vmem:[%s5 + $0xd8] sm:$0xff]
  %v1796 = vld [vmem:[%s5 + $0xe0] sm:$0xff]
  %v1797 = vld [vmem:[%s5 + $0xe8] sm:$0xff]
  %v1798 = vld [vmem:[%s5 + $0xf0] sm:$0xff]
  %v1799 = vld [vmem:[%s5 + $0xf8] sm:$0xff]
  %v1800 = vld [vmem:[%s5 + $0x100] sm:$0xff]
  %v1801 = vld [vmem:[%s5 + $0x108] sm:$0xff]
  %v1802 = vld [vmem:[%s5 + $0x110] sm:$0xff]
  %v1803 = vld [vmem:[%s5 + $0x118] sm:$0xff]
  %v1804 = vld [vmem:[%s5 + $0x120] sm:$0xff]
  %v1805 = vld [vmem:[%s5 + $0x128] sm:$0xff]
  %v1806 = vld [vmem:[%s5 + $0x130] sm:$0xff]
  %v1807 = vld [vmem:[%s5 + $0x138] sm:$0xff]
  %v1808 = vld [vmem:[%s5 + $0x140] sm:$0xff]
  %v1809 = vld [vmem:[%s5 + $0x148] sm:$0xff]
  %v1810 = vld [vmem:[%s5 + $0x150] sm:$0xff]
  %v1811 = vld [vmem:[%s5 + $0x158] sm:$0xff]
  %v1812 = vld [vmem:[%s5 + $0x160] sm:$0xff]
  %v1813 = vld [vmem:[%s5 + $0x168] sm:$0xff]
  %v1814 = vld [vmem:[%s5 + $0x170] sm:$0xff]
  %v1815 = vld [vmem:[%s5 + $0x178] sm:$0xff]
  %v1816 = vld [vmem:[%s7] sm:$0x7]
  %v1818 = vlaneseq
  %v1819 = vshrl.u32 %v1818, 7
  %v1820 = vsub.s32 0, %v1819
  %v1821 = vrot.slane %v1816, %v1820
  %v1822 = vlaneseq
  %v1823 = vshrl.u32 %v1822, 7
  %v1824 = vsub.s32 1, %v1823
  %v1825 = vrot.slane %v1816, %v1824
  %v1826 = vlaneseq
  %v1827 = vshrl.u32 %v1826, 7
  %v1828 = vsub.s32 2, %v1827
  %v1829 = vrot.slane %v1816, %v1828
  %1833 = vmatprep.subr.mxu0 %v1769
  %1834 = vmatpush1.msra.mxu0 %v1768
  %1835 = vmatprep.subr.mxu0 %v1772
  %1836 = vmatpush1.msra.mxu0 %v1771
  %1837 = vmatprep.subr.mxu0 %v1775
  %1838 = vmatpush1.msra.mxu0 %v1774
  %1839 = vmatprep.subr.mxu0 %v1778
  %1840 = vmatpush1.msra.mxu0 %v1777
  %1841 = vmatprep.subr.mxu0 %v1781
  %1842 = vmatpush1.msra.mxu0 %v1780
  %1843 = vmatprep.subr.mxu0 %v1784
  %1844 = vmatpush1.msra.mxu0 %v1783
  %1845 = vmatprep.subr.mxu0 %v1787
  %1846 = vmatpush1.msra.mxu0 %v1786
  %1847 = vmatprep.subr.mxu0 %v1790
  %1848 = vmatpush1.msra.mxu0 %v1789
  %1849 = vmatprep.subr.mxu0 %v1793
  %1850 = vmatpush1.msra.mxu0 %v1792
  %1851 = vmatprep.subr.mxu0 %v1796
  %1852 = vmatpush1.msra.mxu0 %v1795
  %1853 = vmatprep.subr.mxu0 %v1799
  %1854 = vmatpush1.msra.mxu0 %v1798
  %1855 = vmatprep.subr.mxu0 %v1802
  %1856 = vmatpush1.msra.mxu0 %v1801
  %1857 = vmatprep.subr.mxu0 %v1805
  %1858 = vmatpush1.msra.mxu0 %v1804
  %1859 = vmatprep.subr.mxu0 %v1808
  %1860 = vmatpush1.msra.mxu0 %v1807
  %1861 = vmatprep.subr.mxu0 %v1811
  %1862 = vmatpush1.msra.mxu0 %v1810
  %1863 = vmatprep.subr.mxu0 %v1814
  %1864 = vmatpush1.msra.mxu0 %v1813
  %1865 = vmatprep.subr.mxu0 0.0
  %1866 = vmatpush1.msra.mxu0 0.0
  %1867 = vmatprep.subr.mxu0 0.0
  %1868 = vmatpush1.msra.mxu0 0.0
  %1869 = vmatprep.subr.mxu0 0.0
  %1870 = vmatpush1.msra.mxu0 0.0
  %1871 = vmatprep.subr.mxu0 0.0
  %1872 = vmatpush1.msra.mxu0 0.0
  %1873 = vmatprep.subr.mxu0 0.0
  %1874 = vmatpush1.msra.mxu0 0.0
  %1875 = vmatprep.subr.mxu0 0.0
  %1876 = vmatpush1.msra.mxu0 0.0
  %1877 = vmatprep.subr.mxu0 0.0
  %1878 = vmatpush1.msra.mxu0 0.0
  %1879 = vmatprep.subr.mxu0 0.0
  %1880 = vmatpush1.msra.mxu0 0.0
  %1881 = vmatprep.subr.mxu0 0.0
  %1882 = vmatpush1.msra.mxu0 0.0
  %1883 = vmatprep.subr.mxu0 0.0
  %1884 = vmatpush1.msra.mxu0 0.0
  %1885 = vmatprep.subr.mxu0 0.0
  %1886 = vmatpush1.msra.mxu0 0.0
  %1887 = vmatprep.subr.mxu0 0.0
  %1888 = vmatpush1.msra.mxu0 0.0
  %1889 = vmatprep.subr.mxu0 0.0
  %1890 = vmatpush1.msra.mxu0 0.0
  %1891 = vmatprep.subr.mxu0 0.0
  %1892 = vmatpush1.msra.mxu0 0.0
  %1893 = vmatprep.subr.mxu0 0.0
  %1894 = vmatpush1.msra.mxu0 0.0
  %1895 = vmatprep.subr.mxu0 0.0
  %1896 = vmatpush1.msra.mxu0 0.0
  %1897 = vmatprep.mubr.f32.mxu0 0.0
  %1898 = vmatmul.mubr.f32.gmra.mrb[0].mxu0 %v1760
  %v1899 = vpop.f32.mrb[0].mxu0
  %v1900 = vadd.f32 %v1821, %v1899
  %v1901 = vpop.f32.mrb[0].mxu0
  %v1902 = vadd.f32 %v1825, %v1901
  %1903 = vmatprep.mubr.f32.mxu0 0.0
  %1904 = vmatmul.mubr.f32.gmra.mrb[0].mxu0 %v1761
  %v1905 = vpop.f32.mrb[0].mxu0
  %v1906 = vadd.f32 %v1821, %v1905
  %v1907 = vpop.f32.mrb[0].mxu0
  %v1908 = vadd.f32 %v1825, %v1907
  %1909 = vmatprep.mubr.f32.mxu0 0.0
  %1910 = vmatmul.mubr.f32.gmra.mrb[0].mxu0 %v1762
  %v1911 = vpop.f32.mrb[0].mxu0
  %v1912 = vadd.f32 %v1821, %v1911
  %v1913 = vpop.f32.mrb[0].mxu0
  %v1914 = vadd.f32 %v1825, %v1913
  %1915 = vmatprep.mubr.f32.mxu0 0.0
  %1916 = vmatmul.mubr.f32.gmra.mrb[0].mxu0 %v1763
  %v1917 = vpop.f32.mrb[0].mxu0
  %v1918 = vadd.f32 %v1821, %v1917
  %v1919 = vpop.f32.mrb[0].mxu0
  %v1920 = vadd.f32 %v1825, %v1919
  %1921 = vmatprep.mubr.f32.mxu0 0.0
  %1922 = vmatmul.mubr.f32.gmra.mrb[0].mxu0 %v1764
  %v1923 = vpop.f32.mrb[0].mxu0
  %v1924 = vadd.f32 %v1821, %v1923
  %v1925 = vpop.f32.mrb[0].mxu0
  %v1926 = vadd.f32 %v1825, %v1925
  %1927 = vmatprep.mubr.f32.mxu0 0.0
  %1928 = vmatmul.mubr.f32.gmra.mrb[0].mxu0 %v1765
  %v1929 = vpop.f32.mrb[0].mxu0
  %v1930 = vadd.f32 %v1821, %v1929
  %v1931 = vpop.f32.mrb[0].mxu0
  %v1932 = vadd.f32 %v1825, %v1931
  %1933 = vmatprep.mubr.f32.mxu0 0.0
  %1934 = vmatmul.mubr.f32.gmra.mrb[0].mxu0 %v1766
  %v1935 = vpop.f32.mrb[0].mxu0
  %v1936 = vadd.f32 %v1821, %v1935
  %v1937 = vpop.f32.mrb[0].mxu0
  %v1938 = vadd.f32 %v1825, %v1937
  %1939 = vmatprep.mubr.f32.mxu0 0.0
  %1940 = vmatmul.mubr.f32.gmra.mrb[0].mxu0 %v1767
  %v1941 = vpop.f32.mrb[0].mxu0
  %v1942 = vadd.f32 %v1821, %v1941
  %v1943 = vpop.f32.mrb[0].mxu0
  %v1944 = vadd.f32 %v1825, %v1943
  %1945 = vdwg.mxu0
  %1946 = vmatprep.subr.mxu0 0.0
  %1947 = vmatpush1.msra.mxu0 %v1770
  %1948 = vmatprep.subr.mxu0 0.0
  %1949 = vmatpush1.msra.mxu0 %v1773
  %1950 = vmatprep.subr.mxu0 0.0
  %1951 = vmatpush1.msra.mxu0 %v1776
  %1952 = vmatprep.subr.mxu0 0.0
  %1953 = vmatpush1.msra.mxu0 %v1779
  %1954 = vmatprep.subr.mxu0 0.0
  %1955 = vmatpush1.msra.mxu0 %v1782
  %1956 = vmatprep.subr.mxu0 0.0
  %1957 = vmatpush1.msra.mxu0 %v1785
  %1958 = vmatprep.subr.mxu0 0.0
  %1959 = vmatpush1.msra.mxu0 %v1788
  %1960 = vmatprep.subr.mxu0 0.0
  %1961 = vmatpush1.msra.mxu0 %v1791
  %1962 = vmatprep.subr.mxu0 0.0
  %1963 = vmatpush1.msra.mxu0 %v1794
  %1964 = vmatprep.subr.mxu0 0.0
  %1965 = vmatpush1.msra.mxu0 %v1797
  %1966 = vmatprep.subr.mxu0 0.0
  %1967 = vmatpush1.msra.mxu0 %v1800
  %1968 = vmatprep.subr.mxu0 0.0
  %1969 = vmatpush1.msra.mxu0 %v1803
  %1970 = vmatprep.subr.mxu0 0.0
  %1971 = vmatpush1.msra.mxu0 %v1806
  %1972 = vmatprep.subr.mxu0 0.0
  %1973 = vmatpush1.msra.mxu0 %v1809
  %1974 = vmatprep.subr.mxu0 0.0
  %1975 = vmatpush1.msra.mxu0 %v1812
  %1976 = vmatprep.subr.mxu0 0.0
  %1977 = vmatpush1.msra.mxu0 %v1815
  %1978 = vmatprep.subr.mxu0 0.0
  %1979 = vmatpush1.msra.mxu0 0.0
  %1980 = vmatprep.subr.mxu0 0.0
  %1981 = vmatpush1.msra.mxu0 0.0
  %1982 = vmatprep.subr.mxu0 0.0
  %1983 = vmatpush1.msra.mxu0 0.0
  %1984 = vmatprep.subr.mxu0 0.0
  %1985 = vmatpush1.msra.mxu0 0.0
  %1986 = vmatprep.subr.mxu0 0.0
  %1987 = vmatpush1.msra.mxu0 0.0
  %1988 = vmatprep.subr.mxu0 0.0
  %1989 = vmatpush1.msra.mxu0 0.0
  %1990 = vmatprep.subr.mxu0 0.0
  %1991 = vmatpush1.msra.mxu0 0.0
  %1992 = vmatprep.subr.mxu0 0.0
  %1993 = vmatpush1.msra.mxu0 0.0
  %1994 = vmatprep.subr.mxu0 0.0
  %1995 = vmatpush1.msra.mxu0 0.0
  %1996 = vmatprep.subr.mxu0 0.0
  %1997 = vmatpush1.msra.mxu0 0.0
  %1998 = vmatprep.subr.mxu0 0.0
  %1999 = vmatpush1.msra.mxu0 0.0
  %2000 = vmatprep.subr.mxu0 0.0
  %2001 = vmatpush1.msra.mxu0 0.0
  %2002 = vmatprep.subr.mxu0 0.0
  %2003 = vmatpush1.msra.mxu0 0.0
  %2004 = vmatprep.subr.mxu0 0.0
  %2005 = vmatpush1.msra.mxu0 0.0
  %2006 = vmatprep.subr.mxu0 0.0
  %2007 = vmatpush1.msra.mxu0 0.0
  %2008 = vmatprep.subr.mxu0 0.0
  %2009 = vmatpush1.msra.mxu0 0.0
  %2010 = vmatprep.mubr.f32.mxu0 0.0
  %2011 = vmatmul.mubr.f32.gmra.mrb[0].mxu0 %v1760
  %v2012 = vpop.f32.mrb[0].mxu0
  %v2013 = vadd.f32 %v1829, %v2012
  %v2014 = vpop.f32.mrb[0].mxu0
  %2015 = vmatprep.mubr.f32.mxu0 0.0
  %2016 = vmatmul.mubr.f32.gmra.mrb[0].mxu0 %v1761
  %v2017 = vpop.f32.mrb[0].mxu0
  %v2018 = vadd.f32 %v1829, %v2017
  %v2019 = vpop.f32.mrb[0].mxu0
  %2020 = vmatprep.mubr.f32.mxu0 0.0
  %2021 = vmatmul.mubr.f32.gmra.mrb[0].mxu0 %v1762
  %v2022 = vpop.f32.mrb[0].mxu0
  %v2023 = vadd.f32 %v1829, %v2022
  %v2024 = vpop.f32.mrb[0].mxu0
  %2025 = vmatprep.mubr.f32.mxu0 0.0
  %2026 = vmatmul.mubr.f32.gmra.mrb[0].mxu0 %v1763
  %v2027 = vpop.f32.mrb[0].mxu0
  %v2028 = vadd.f32 %v1829, %v2027
  %v2029 = vpop.f32.mrb[0].mxu0
  %2030 = vmatprep.mubr.f32.mxu0 0.0
  %2031 = vmatmul.mubr.f32.gmra.mrb[0].mxu0 %v1764
  %v2032 = vpop.f32.mrb[0].mxu0
  %v2033 = vadd.f32 %v1829, %v2032
  %v2034 = vpop.f32.mrb[0].mxu0
  %2035 = vmatprep.mubr.f32.mxu0 0.0
  %2036 = vmatmul.mubr.f32.gmra.mrb[0].mxu0 %v1765
  %v2037 = vpop.f32.mrb[0].mxu0
  %v2038 = vadd.f32 %v1829, %v2037
  %v2039 = vpop.f32.mrb[0].mxu0
  %2040 = vmatprep.mubr.f32.mxu0 0.0
  %2041 = vmatmul.mubr.f32.gmra.mrb[0].mxu0 %v1766
  %v2042 = vpop.f32.mrb[0].mxu0
  %v2043 = vadd.f32 %v1829, %v2042
  %v2044 = vpop.f32.mrb[0].mxu0
  %2045 = vmatprep.mubr.f32.mxu0 0.0
  %2046 = vmatmul.mubr.f32.gmra.mrb[0].mxu0 %v1767
  %v2047 = vpop.f32.mrb[0].mxu0
  %v2048 = vadd.f32 %v1829, %v2047
  %v2049 = vpop.f32.mrb[0].mxu0
  %2050 = vdwg.mxu0
  %2051 = vst [vmem:[#allocation3] sm:$0xff] %v1900
  %2052 = vst [vmem:[#allocation3 + $0x8] sm:$0xff] %v1902
  %2053 = vst [vmem:[#allocation3 + $0x10] sm:$0xff] %v2013
  %2054 = vst [vmem:[#allocation3 + $0x18] sm:$0xff] %v1906
  %2055 = vst [vmem:[#allocation3 + $0x20] sm:$0xff] %v1908
  %2056 = vst [vmem:[#allocation3 + $0x28] sm:$0xff] %v2018
  %2057 = vst [vmem:[#allocation3 + $0x30] sm:$0xff] %v1912
  %2058 = vst [vmem:[#allocation3 + $0x38] sm:$0xff] %v1914
  %2059 = vst [vmem:[#allocation3 + $0x40] sm:$0xff] %v2023
  %2060 = vst [vmem:[#allocation3 + $0x48] sm:$0xff] %v1918
  %2061 = vst [vmem:[#allocation3 + $0x50] sm:$0xff] %v1920
  %2062 = vst [vmem:[#allocation3 + $0x58] sm:$0xff] %v2028
  %2063 = vst [vmem:[#allocation3 + $0x60] sm:$0xff] %v1924
  %2064 = vst [vmem:[#allocation3 + $0x68] sm:$0xff] %v1926
  %2065 = vst [vmem:[#allocation3 + $0x70] sm:$0xff] %v2033
  %2066 = vst [vmem:[#allocation3 + $0x78] sm:$0xff] %v1930
  %2067 = vst [vmem:[#allocation3 + $0x80] sm:$0xff] %v1932
  %2068 = vst [vmem:[#allocation3 + $0x88] sm:$0xff] %v2038
  %2069 = vst [vmem:[#allocation3 + $0x90] sm:$0xff] %v1936
  %2070 = vst [vmem:[#allocation3 + $0x98] sm:$0xff] %v1938
  %2071 = vst [vmem:[#allocation3 + $0xa0] sm:$0xff] %v2043
  %2072 = vst [vmem:[#allocation3 + $0xa8] sm:$0xff] %v1942
  %2073 = vst [vmem:[#allocation3 + $0xb0] sm:$0xff] %v1944
  %2074 = vst [vmem:[#allocation3 + $0xb8] sm:$0xff] %v2048
  %v2075 = vld [vmem:[%s6] sm:$0xff]
  %v2076 = vld [vmem:[%s6 + $0x8] sm:$0xff]
  %v2077 = vld [vmem:[%s6 + $0x10] sm:$0xff]
  %v2078 = vld [vmem:[%s6 + $0x18] sm:$0xff]
  %v2079 = vld [vmem:[%s6 + $0x20] sm:$0xff]
  %v2080 = vld [vmem:[%s6 + $0x28] sm:$0xff]
  %v2081 = vld [vmem:[%s6 + $0x30] sm:$0xff]
  %v2082 = vld [vmem:[%s6 + $0x38] sm:$0xff]
  %v2083 = vld [vmem:[%s6 + $0x40] sm:$0xff]
  %v2084 = vld [vmem:[%s6 + $0x48] sm:$0xff]
  %v2085 = vld [vmem:[%s6 + $0x50] sm:$0xff]
  %v2086 = vld [vmem:[%s6 + $0x58] sm:$0xff]
  %v2087 = vld [vmem:[%s6 + $0x60] sm:$0xff]
  %v2088 = vld [vmem:[%s6 + $0x68] sm:$0xff]
  %v2089 = vld [vmem:[%s6 + $0x70] sm:$0xff]
  %v2090 = vld [vmem:[%s6 + $0x78] sm:$0xff]
  %v2091 = vld [vmem:[%s6 + $0x80] sm:$0xff]
  %v2092 = vld [vmem:[%s6 + $0x88] sm:$0xff]
  %v2093 = vld [vmem:[%s6 + $0x90] sm:$0xff]
  %v2094 = vld [vmem:[%s6 + $0x98] sm:$0xff]
  %v2095 = vld [vmem:[%s6 + $0xa0] sm:$0xff]
  %v2096 = vld [vmem:[%s6 + $0xa8] sm:$0xff]
  %v2097 = vld [vmem:[%s6 + $0xb0] sm:$0xff]
  %v2098 = vld [vmem:[%s6 + $0xb8] sm:$0xff]
  %v2099 = vld [vmem:[%s6 + $0xc0] sm:$0xff]
  %v2100 = vld [vmem:[%s6 + $0xc8] sm:$0xff]
  %v2101 = vld [vmem:[%s6 + $0xd0] sm:$0xff]
  %v2102 = vld [vmem:[%s6 + $0xd8] sm:$0xff]
  %v2103 = vld [vmem:[%s6 + $0xe0] sm:$0xff]
  %v2104 = vld [vmem:[%s6 + $0xe8] sm:$0xff]
  %v2105 = vld [vmem:[%s6 + $0xf0] sm:$0xff]
  %v2106 = vld [vmem:[%s6 + $0xf8] sm:$0xff]
  %v2107 = vld [vmem:[%s6 + $0x100] sm:$0xff]
  %v2108 = vld [vmem:[%s6 + $0x108] sm:$0xff]
  %v2109 = vld [vmem:[%s6 + $0x110] sm:$0xff]
  %v2110 = vld [vmem:[%s6 + $0x118] sm:$0xff]
  %v2111 = vld [vmem:[%s6 + $0x120] sm:$0xff]
  %v2112 = vld [vmem:[%s6 + $0x128] sm:$0xff]
  %v2113 = vld [vmem:[%s6 + $0x130] sm:$0xff]
  %v2114 = vld [vmem:[%s6 + $0x138] sm:$0xff]
  %v2115 = vld [vmem:[%s6 + $0x140] sm:$0xff]
  %v2116 = vld [vmem:[%s6 + $0x148] sm:$0xff]
  %v2117 = vld [vmem:[%s6 + $0x150] sm:$0xff]
  %v2118 = vld [vmem:[%s6 + $0x158] sm:$0xff]
  %v2119 = vld [vmem:[%s6 + $0x160] sm:$0xff]
  %v2120 = vld [vmem:[%s6 + $0x168] sm:$0xff]
  %v2121 = vld [vmem:[%s6 + $0x170] sm:$0xff]
  %v2122 = vld [vmem:[%s6 + $0x178] sm:$0xff]
  %v2123 = vld [vmem:[%s8] sm:$0x7]
  %v2124 = vld [vmem:[%s387] sm:$0xff]
  %v2125 = vld [vmem:[%s387 + $0x8] sm:$0xff]
  %v2126 = vld [vmem:[%s387 + $0x10] sm:$0xff]
  %v2128 = vlaneseq
  %v2129 = vshrl.u32 %v2128, 7
  %v2130 = vsub.s32 0, %v2129
  %v2131 = vrot.slane %v2123, %v2130
  %v2132 = vlaneseq
  %v2133 = vshrl.u32 %v2132, 7
  %v2134 = vsub.s32 1, %v2133
  %v2135 = vrot.slane %v2123, %v2134
  %v2136 = vlaneseq
  %v2137 = vshrl.u32 %v2136, 7
  %v2138 = vsub.s32 2, %v2137
  %v2139 = vrot.slane %v2123, %v2138
  %2143 = vmatprep.subr.mxu0 %v2076
  %2144 = vmatpush1.msra.mxu0 %v2075
  %2145 = vmatprep.subr.mxu0 %v2079
  %2146 = vmatpush1.msra.mxu0 %v2078
  %2147 = vmatprep.subr.mxu0 %v2082
  %2148 = vmatpush1.msra.mxu0 %v2081
  %2149 = vmatprep.subr.mxu0 %v2085
  %2150 = vmatpush1.msra.mxu0 %v2084
  %2151 = vmatprep.subr.mxu0 %v2088
  %2152 = vmatpush1.msra.mxu0 %v2087
  %2153 = vmatprep.subr.mxu0 %v2091
  %2154 = vmatpush1.msra.mxu0 %v2090
  %2155 = vmatprep.subr.mxu0 %v2094
  %2156 = vmatpush1.msra.mxu0 %v2093
  %2157 = vmatprep.subr.mxu0 %v2097
  %2158 = vmatpush1.msra.mxu0 %v2096
  %2159 = vmatprep.subr.mxu0 %v2100
  %2160 = vmatpush1.msra.mxu0 %v2099
  %2161 = vmatprep.subr.mxu0 %v2103
  %2162 = vmatpush1.msra.mxu0 %v2102
  %2163 = vmatprep.subr.mxu0 %v2106
  %2164 = vmatpush1.msra.mxu0 %v2105
  %2165 = vmatprep.subr.mxu0 %v2109
  %2166 = vmatpush1.msra.mxu0 %v2108
  %2167 = vmatprep.subr.mxu0 %v2112
  %2168 = vmatpush1.msra.mxu0 %v2111
  %2169 = vmatprep.subr.mxu0 %v2115
  %2170 = vmatpush1.msra.mxu0 %v2114
  %2171 = vmatprep.subr.mxu0 %v2118
  %2172 = vmatpush1.msra.mxu0 %v2117
  %2173 = vmatprep.subr.mxu0 %v2121
  %2174 = vmatpush1.msra.mxu0 %v2120
  %2175 = vmatprep.subr.mxu0 0.0
  %2176 = vmatpush1.msra.mxu0 0.0
  %2177 = vmatprep.subr.mxu0 0.0
  %2178 = vmatpush1.msra.mxu0 0.0
  %2179 = vmatprep.subr.mxu0 0.0
  %2180 = vmatpush1.msra.mxu0 0.0
  %2181 = vmatprep.subr.mxu0 0.0
  %2182 = vmatpush1.msra.mxu0 0.0
  %2183 = vmatprep.subr.mxu0 0.0
  %2184 = vmatpush1.msra.mxu0 0.0
  %2185 = vmatprep.subr.mxu0 0.0
  %2186 = vmatpush1.msra.mxu0 0.0
  %2187 = vmatprep.subr.mxu0 0.0
  %2188 = vmatpush1.msra.mxu0 0.0
  %2189 = vmatprep.subr.mxu0 0.0
  %2190 = vmatpush1.msra.mxu0 0.0
  %2191 = vmatprep.subr.mxu0 0.0
  %2192 = vmatpush1.msra.mxu0 0.0
  %2193 = vmatprep.subr.mxu0 0.0
  %2194 = vmatpush1.msra.mxu0 0.0
  %2195 = vmatprep.subr.mxu0 0.0
  %2196 = vmatpush1.msra.mxu0 0.0
  %2197 = vmatprep.subr.mxu0 0.0
  %2198 = vmatpush1.msra.mxu0 0.0
  %2199 = vmatprep.subr.mxu0 0.0
  %2200 = vmatpush1.msra.mxu0 0.0
  %2201 = vmatprep.subr.mxu0 0.0
  %2202 = vmatpush1.msra.mxu0 0.0
  %2203 = vmatprep.subr.mxu0 0.0
  %2204 = vmatpush1.msra.mxu0 0.0
  %2205 = vmatprep.subr.mxu0 0.0
  %2206 = vmatpush1.msra.mxu0 0.0
  %2207 = vmatprep.mubr.f32.mxu0 0.0
  %2208 = vmatmul.mubr.f32.gmra.mrb[0].mxu0 0.0
  %v2209 = vpop.f32.mrb[0].mxu0
  %v2210 = vadd.f32 %v2131, %v2209
  %v2211 = vpop.f32.mrb[0].mxu0
  %v2212 = vadd.f32 %v2135, %v2211
  %2213 = vdwg.mxu0
  %2214 = vmatprep.subr.mxu0 0.0
  %2215 = vmatpush1.msra.mxu0 %v2077
  %2216 = vmatprep.subr.mxu0 0.0
  %2217 = vmatpush1.msra.mxu0 %v2080
  %2218 = vmatprep.subr.mxu0 0.0
  %2219 = vmatpush1.msra.mxu0 %v2083
  %2220 = vmatprep.subr.mxu0 0.0
  %2221 = vmatpush1.msra.mxu0 %v2086
  %2222 = vmatprep.subr.mxu0 0.0
  %2223 = vmatpush1.msra.mxu0 %v2089
  %2224 = vmatprep.subr.mxu0 0.0
  %2225 = vmatpush1.msra.mxu0 %v2092
  %2226 = vmatprep.subr.mxu0 0.0
  %2227 = vmatpush1.msra.mxu0 %v2095
  %2228 = vmatprep.subr.mxu0 0.0
  %2229 = vmatpush1.msra.mxu0 %v2098
  %2230 = vmatprep.subr.mxu0 0.0
  %2231 = vmatpush1.msra.mxu0 %v2101
  %2232 = vmatprep.subr.mxu0 0.0
  %2233 = vmatpush1.msra.mxu0 %v2104
  %2234 = vmatprep.subr.mxu0 0.0
  %2235 = vmatpush1.msra.mxu0 %v2107
  %2236 = vmatprep.subr.mxu0 0.0
  %2237 = vmatpush1.msra.mxu0 %v2110
  %2238 = vmatprep.subr.mxu0 0.0
  %2239 = vmatpush1.msra.mxu0 %v2113
  %2240 = vmatprep.subr.mxu0 0.0
  %2241 = vmatpush1.msra.mxu0 %v2116
  %2242 = vmatprep.subr.mxu0 0.0
  %2243 = vmatpush1.msra.mxu0 %v2119
  %2244 = vmatprep.subr.mxu0 0.0
  %2245 = vmatpush1.msra.mxu0 %v2122
  %2246 = vmatprep.subr.mxu0 0.0
  %2247 = vmatpush1.msra.mxu0 0.0
  %2248 = vmatprep.subr.mxu0 0.0
  %2249 = vmatpush1.msra.mxu0 0.0
  %2250 = vmatprep.subr.mxu0 0.0
  %2251 = vmatpush1.msra.mxu0 0.0
  %2252 = vmatprep.subr.mxu0 0.0
  %2253 = vmatpush1.msra.mxu0 0.0
  %2254 = vmatprep.subr.mxu0 0.0
  %2255 = vmatpush1.msra.mxu0 0.0
  %2256 = vmatprep.subr.mxu0 0.0
  %2257 = vmatpush1.msra.mxu0 0.0
  %2258 = vmatprep.subr.mxu0 0.0
  %2259 = vmatpush1.msra.mxu0 0.0
  %2260 = vmatprep.subr.mxu0 0.0
  %2261 = vmatpush1.msra.mxu0 0.0
  %2262 = vmatprep.subr.mxu0 0.0
  %2263 = vmatpush1.msra.mxu0 0.0
  %2264 = vmatprep.subr.mxu0 0.0
  %2265 = vmatpush1.msra.mxu0 0.0
  %2266 = vmatprep.subr.mxu0 0.0
  %2267 = vmatpush1.msra.mxu0 0.0
  %2268 = vmatprep.subr.mxu0 0.0
  %2269 = vmatpush1.msra.mxu0 0.0
  %2270 = vmatprep.subr.mxu0 0.0
  %2271 = vmatpush1.msra.mxu0 0.0
  %2272 = vmatprep.subr.mxu0 0.0
  %2273 = vmatpush1.msra.mxu0 0.0
  %2274 = vmatprep.subr.mxu0 0.0
  %2275 = vmatpush1.msra.mxu0 0.0
  %2276 = vmatprep.subr.mxu0 0.0
  %2277 = vmatpush1.msra.mxu0 0.0
  %2278 = vmatprep.mubr.f32.mxu0 0.0
  %2279 = vmatmul.mubr.f32.gmra.mrb[0].mxu0 0.0
  %v2280 = vpop.f32.mrb[0].mxu0
  %v2281 = vadd.f32 %v2139, %v2280
  %v2282 = vpop.f32.mrb[0].mxu0
  %2283 = vdwg.mxu0
  %v2284 = vadd.f32 %v2124, %v2210
  %v2285 = vxor.u32 %v2284, 2147483648
  %v2286 = vmul.f32 %v2285, 1.442695
  %v2287 = vpow.pop %v2286
  %v2288 = vadd.f32 %v2287, 1.0
  %v2289 = vrcp.pop %v2288
  %v2290 = vmul.f32 1.0, %v2289
  %v2291 = vadd.f32 %v2125, %v2212
  %v2292 = vxor.u32 %v2291, 2147483648
  %v2293 = vmul.f32 %v2292, 1.442695
  %v2294 = vpow.pop %v2293
  %v2295 = vadd.f32 %v2294, 1.0
  %v2296 = vrcp.pop %v2295
  %v2297 = vmul.f32 1.0, %v2296
  %v2298 = vmul.f32 %v2290, %v2281
  %v2299 = vadd.f32 %v2126, %v2298
  %v2300 = vtanh.pop %v2299
  %v2301 = vsub.f32 1.0, %v2297
  %v2302 = vmul.f32 %v2301, %v2300
  %v2303 = vmul.f32 %v2297, 0.0
  %v2304 = vadd.f32 %v2302, %v2303
  %v2305 = vld [vmem:[%s572] sm:$0xff]
  %v2306 = vld [vmem:[%s572 + $0x8] sm:$0xff]
  %v2307 = vld [vmem:[%s572 + $0x10] sm:$0xff]
  %2308 = vmatprep.subr.mxu0 %v2076
  %2309 = vmatpush1.msra.mxu0 %v2075
  %2310 = vmatprep.subr.mxu0 %v2079
  %2311 = vmatpush1.msra.mxu0 %v2078
  %2312 = vmatprep.subr.mxu0 %v2082
  %2313 = vmatpush1.msra.mxu0 %v2081
  %2314 = vmatprep.subr.mxu0 %v2085
  %2315 = vmatpush1.msra.mxu0 %v2084
  %2316 = vmatprep.subr.mxu0 %v2088
  %2317 = vmatpush1.msra.mxu0 %v2087
  %2318 = vmatprep.subr.mxu0 %v2091
  %2319 = vmatpush1.msra.mxu0 %v2090
  %2320 = vmatprep.subr.mxu0 %v2094
  %2321 = vmatpush1.msra.mxu0 %v2093
  %2322 = vmatprep.subr.mxu0 %v2097
  %2323 = vmatpush1.msra.mxu0 %v2096
  %2324 = vmatprep.subr.mxu0 %v2100
  %2325 = vmatpush1.msra.mxu0 %v2099
  %2326 = vmatprep.subr.mxu0 %v2103
  %2327 = vmatpush1.msra.mxu0 %v2102
  %2328 = vmatprep.subr.mxu0 %v2106
  %2329 = vmatpush1.msra.mxu0 %v2105
  %2330 = vmatprep.subr.mxu0 %v2109
  %2331 = vmatpush1.msra.mxu0 %v2108
  %2332 = vmatprep.subr.mxu0 %v2112
  %2333 = vmatpush1.msra.mxu0 %v2111
  %2334 = vmatprep.subr.mxu0 %v2115
  %2335 = vmatpush1.msra.mxu0 %v2114
  %2336 = vmatprep.subr.mxu0 %v2118
  %2337 = vmatpush1.msra.mxu0 %v2117
  %2338 = vmatprep.subr.mxu0 %v2121
  %2339 = vmatpush1.msra.mxu0 %v2120
  %2340 = vmatprep.subr.mxu0 0.0
  %2341 = vmatpush1.msra.mxu0 0.0
  %2342 = vmatprep.subr.mxu0 0.0
  %2343 = vmatpush1.msra.mxu0 0.0
  %2344 = vmatprep.subr.mxu0 0.0
  %2345 = vmatpush1.msra.mxu0 0.0
  %2346 = vmatprep.subr.mxu0 0.0
  %2347 = vmatpush1.msra.mxu0 0.0
  %2348 = vmatprep.subr.mxu0 0.0
  %2349 = vmatpush1.msra.mxu0 0.0
  %2350 = vmatprep.subr.mxu0 0.0
  %2351 = vmatpush1.msra.mxu0 0.0
  %2352 = vmatprep.subr.mxu0 0.0
  %2353 = vmatpush1.msra.mxu0 0.0
  %2354 = vmatprep.subr.mxu0 0.0
  %2355 = vmatpush1.msra.mxu0 0.0
  %2356 = vmatprep.subr.mxu0 0.0
  %2357 = vmatpush1.msra.mxu0 0.0
  %2358 = vmatprep.subr.mxu0 0.0
  %2359 = vmatpush1.msra.mxu0 0.0
  %2360 = vmatprep.subr.mxu0 0.0
  %2361 = vmatpush1.msra.mxu0 0.0
  %2362 = vmatprep.subr.mxu0 0.0
  %2363 = vmatpush1.msra.mxu0 0.0
  %2364 = vmatprep.subr.mxu0 0.0
  %2365 = vmatpush1.msra.mxu0 0.0
  %2366 = vmatprep.subr.mxu0 0.0
  %2367 = vmatpush1.msra.mxu0 0.0
  %2368 = vmatprep.subr.mxu0 0.0
  %2369 = vmatpush1.msra.mxu0 0.0
  %2370 = vmatprep.subr.mxu0 0.0
  %2371 = vmatpush1.msra.mxu0 0.0
  %2372 = vmatprep.mubr.f32.mxu0 0.0
  %2373 = vmatmul.mubr.f32.gmra.mrb[0].mxu0 %v2304
  %v2374 = vpop.f32.mrb[0].mxu0
  %v2375 = vadd.f32 %v2131, %v2374
  %v2376 = vpop.f32.mrb[0].mxu0
  %v2377 = vadd.f32 %v2135, %v2376
  %2378 = vdwg.mxu0
  %2379 = vmatprep.subr.mxu0 0.0
  %2380 = vmatpush1.msra.mxu0 %v2077
  %2381 = vmatprep.subr.mxu0 0.0
  %2382 = vmatpush1.msra.mxu0 %v2080
  %2383 = vmatprep.subr.mxu0 0.0
  %2384 = vmatpush1.msra.mxu0 %v2083
  %2385 = vmatprep.subr.mxu0 0.0
  %2386 = vmatpush1.msra.mxu0 %v2086
  %2387 = vmatprep.subr.mxu0 0.0
  %2388 = vmatpush1.msra.mxu0 %v2089
  %2389 = vmatprep.subr.mxu0 0.0
  %2390 = vmatpush1.msra.mxu0 %v2092
  %2391 = vmatprep.subr.mxu0 0.0
  %2392 = vmatpush1.msra.mxu0 %v2095
  %2393 = vmatprep.subr.mxu0 0.0
  %2394 = vmatpush1.msra.mxu0 %v2098
  %2395 = vmatprep.subr.mxu0 0.0
  %2396 = vmatpush1.msra.mxu0 %v2101
  %2397 = vmatprep.subr.mxu0 0.0
  %2398 = vmatpush1.msra.mxu0 %v2104
  %2399 = vmatprep.subr.mxu0 0.0
  %2400 = vmatpush1.msra.mxu0 %v2107
  %2401 = vmatprep.subr.mxu0 0.0
  %2402 = vmatpush1.msra.mxu0 %v2110
  %2403 = vmatprep.subr.mxu0 0.0
  %2404 = vmatpush1.msra.mxu0 %v2113
  %2405 = vmatprep.subr.mxu0 0.0
  %2406 = vmatpush1.msra.mxu0 %v2116
  %2407 = vmatprep.subr.mxu0 0.0
  %2408 = vmatpush1.msra.mxu0 %v2119
  %2409 = vmatprep.subr.mxu0 0.0
  %2410 = vmatpush1.msra.mxu0 %v2122
  %2411 = vmatprep.subr.mxu0 0.0
  %2412 = vmatpush1.msra.mxu0 0.0
  %2413 = vmatprep.subr.mxu0 0.0
  %2414 = vmatpush1.msra.mxu0 0.0
  %2415 = vmatprep.subr.mxu0 0.0
  %2416 = vmatpush1.msra.mxu0 0.0
  %2417 = vmatprep.subr.mxu0 0.0
  %2418 = vmatpush1.msra.mxu0 0.0
  %2419 = vmatprep.subr.mxu0 0.0
  %2420 = vmatpush1.msra.mxu0 0.0
  %2421 = vmatprep.subr.mxu0 0.0
  %2422 = vmatpush1.msra.mxu0 0.0
  %2423 = vmatprep.subr.mxu0 0.0
  %2424 = vmatpush1.msra.mxu0 0.0
  %2425 = vmatprep.subr.mxu0 0.0
  %2426 = vmatpush1.msra.mxu0 0.0
  %2427 = vmatprep.subr.mxu0 0.0
  %2428 = vmatpush1.msra.mxu0 0.0
  %2429 = vmatprep.subr.mxu0 0.0
  %2430 = vmatpush1.msra.mxu0 0.0
  %2431 = vmatprep.subr.mxu0 0.0
  %2432 = vmatpush1.msra.mxu0 0.0
  %2433 = vmatprep.subr.mxu0 0.0
  %2434 = vmatpush1.msra.mxu0 0.0
  %2435 = vmatprep.subr.mxu0 0.0
  %2436 = vmatpush1.msra.mxu0 0.0
  %2437 = vmatprep.subr.mxu0 0.0
  %2438 = vmatpush1.msra.mxu0 0.0
  %2439 = vmatprep.subr.mxu0 0.0
  %2440 = vmatpush1.msra.mxu0 0.0
  %2441 = vmatprep.subr.mxu0 0.0
  %2442 = vmatpush1.msra.mxu0 0.0
  %2443 = vmatprep.mubr.f32.mxu0 0.0
  %2444 = vmatmul.mubr.f32.gmra.mrb[0].mxu0 %v2304
  %v2445 = vpop.f32.mrb[0].mxu0
  %v2446 = vadd.f32 %v2139, %v2445
  %v2447 = vpop.f32.mrb[0].mxu0
  %2448 = vdwg.mxu0
  %v2449 = vadd.f32 %v2305, %v2375
  %v2450 = vxor.u32 %v2449, 2147483648
  %v2451 = vmul.f32 %v2450, 1.442695
  %v2452 = vpow.pop %v2451
  %v2453 = vadd.f32 %v2452, 1.0
  %v2454 = vrcp.pop %v2453
  %v2455 = vmul.f32 1.0, %v2454
  %v2456 = vadd.f32 %v2306, %v2377
  %v2457 = vxor.u32 %v2456, 2147483648
  %v2458 = vmul.f32 %v2457, 1.442695
  %v2459 = vpow.pop %v2458
  %v2460 = vadd.f32 %v2459, 1.0
  %v2461 = vrcp.pop %v2460
  %v2462 = vmul.f32 1.0, %v2461
  %v2463 = vmul.f32 %v2455, %v2446
  %v2464 = vadd.f32 %v2307, %v2463
  %v2465 = vtanh.pop %v2464
  %v2466 = vsub.f32 1.0, %v2462
  %v2467 = vmul.f32 %v2466, %v2465
  %v2468 = vmul.f32 %v2462, %v2304
  %v2469 = vadd.f32 %v2467, %v2468
  %v2470 = vld [vmem:[%s742] sm:$0xff]
  %v2471 = vld [vmem:[%s742 + $0x8] sm:$0xff]
  %v2472 = vld [vmem:[%s742 + $0x10] sm:$0xff]
  %2473 = vmatprep.subr.mxu0 %v2076
  %2474 = vmatpush1.msra.mxu0 %v2075
  %2475 = vmatprep.subr.mxu0 %v2079
  %2476 = vmatpush1.msra.mxu0 %v2078
  %2477 = vmatprep.subr.mxu0 %v2082
  %2478 = vmatpush1.msra.mxu0 %v2081
  %2479 = vmatprep.subr.mxu0 %v2085
  %2480 = vmatpush1.msra.mxu0 %v2084
  %2481 = vmatprep.subr.mxu0 %v2088
  %2482 = vmatpush1.msra.mxu0 %v2087
  %2483 = vmatprep.subr.mxu0 %v2091
  %2484 = vmatpush1.msra.mxu0 %v2090
  %2485 = vmatprep.subr.mxu0 %v2094
  %2486 = vmatpush1.msra.mxu0 %v2093
  %2487 = vmatprep.subr.mxu0 %v2097
  %2488 = vmatpush1.msra.mxu0 %v2096
  %2489 = vmatprep.subr.mxu0 %v2100
  %2490 = vmatpush1.msra.mxu0 %v2099
  %2491 = vmatprep.subr.mxu0 %v2103
  %2492 = vmatpush1.msra.mxu0 %v2102
  %2493 = vmatprep.subr.mxu0 %v2106
  %2494 = vmatpush1.msra.mxu0 %v2105
  %2495 = vmatprep.subr.mxu0 %v2109
  %2496 = vmatpush1.msra.mxu0 %v2108
  %2497 = vmatprep.subr.mxu0 %v2112
  %2498 = vmatpush1.msra.mxu0 %v2111
  %2499 = vmatprep.subr.mxu0 %v2115
  %2500 = vmatpush1.msra.mxu0 %v2114
  %2501 = vmatprep.subr.mxu0 %v2118
  %2502 = vmatpush1.msra.mxu0 %v2117
  %2503 = vmatprep.subr.mxu0 %v2121
  %2504 = vmatpush1.msra.mxu0 %v2120
  %2505 = vmatprep.subr.mxu0 0.0
  %2506 = vmatpush1.msra.mxu0 0.0
  %2507 = vmatprep.subr.mxu0 0.0
  %2508 = vmatpush1.msra.mxu0 0.0
  %2509 = vmatprep.subr.mxu0 0.0
  %2510 = vmatpush1.msra.mxu0 0.0
  %2511 = vmatprep.subr.mxu0 0.0
  %2512 = vmatpush1.msra.mxu0 0.0
  %2513 = vmatprep.subr.mxu0 0.0
  %2514 = vmatpush1.msra.mxu0 0.0
  %2515 = vmatprep.subr.mxu0 0.0
  %2516 = vmatpush1.msra.mxu0 0.0
  %2517 = vmatprep.subr.mxu0 0.0
  %2518 = vmatpush1.msra.mxu0 0.0
  %2519 = vmatprep.subr.mxu0 0.0
  %2520 = vmatpush1.msra.mxu0 0.0
  %2521 = vmatprep.subr.mxu0 0.0
  %2522 = vmatpush1.msra.mxu0 0.0
  %2523 = vmatprep.subr.mxu0 0.0
  %2524 = vmatpush1.msra.mxu0 0.0
  %2525 = vmatprep.subr.mxu0 0.0
  %2526 = vmatpush1.msra.mxu0 0.0
  %2527 = vmatprep.subr.mxu0 0.0
  %2528 = vmatpush1.msra.mxu0 0.0
  %2529 = vmatprep.subr.mxu0 0.0
  %2530 = vmatpush1.msra.mxu0 0.0
  %2531 = vmatprep.subr.mxu0 0.0
  %2532 = vmatpush1.msra.mxu0 0.0
  %2533 = vmatprep.subr.mxu0 0.0
  %2534 = vmatpush1.msra.mxu0 0.0
  %2535 = vmatprep.subr.mxu0 0.0
  %2536 = vmatpush1.msra.mxu0 0.0
  %2537 = vmatprep.mubr.f32.mxu0 0.0
  %2538 = vmatmul.mubr.f32.gmra.mrb[0].mxu0 %v2469
  %v2539 = vpop.f32.mrb[0].mxu0
  %v2540 = vadd.f32 %v2131, %v2539
  %v2541 = vpop.f32.mrb[0].mxu0
  %v2542 = vadd.f32 %v2135, %v2541
  %2543 = vdwg.mxu0
  %2544 = vmatprep.subr.mxu0 0.0
  %2545 = vmatpush1.msra.mxu0 %v2077
  %2546 = vmatprep.subr.mxu0 0.0
  %2547 = vmatpush1.msra.mxu0 %v2080
  %2548 = vmatprep.subr.mxu0 0.0
  %2549 = vmatpush1.msra.mxu0 %v2083
  %2550 = vmatprep.subr.mxu0 0.0
  %2551 = vmatpush1.msra.mxu0 %v2086
  %2552 = vmatprep.subr.mxu0 0.0
  %2553 = vmatpush1.msra.mxu0 %v2089
  %2554 = vmatprep.subr.mxu0 0.0
  %2555 = vmatpush1.msra.mxu0 %v2092
  %2556 = vmatprep.subr.mxu0 0.0
  %2557 = vmatpush1.msra.mxu0 %v2095
  %2558 = vmatprep.subr.mxu0 0.0
  %2559 = vmatpush1.msra.mxu0 %v2098
  %2560 = vmatprep.subr.mxu0 0.0
  %2561 = vmatpush1.msra.mxu0 %v2101
  %2562 = vmatprep.subr.mxu0 0.0
  %2563 = vmatpush1.msra.mxu0 %v2104
  %2564 = vmatprep.subr.mxu0 0.0
  %2565 = vmatpush1.msra.mxu0 %v2107
  %2566 = vmatprep.subr.mxu0 0.0
  %2567 = vmatpush1.msra.mxu0 %v2110
  %2568 = vmatprep.subr.mxu0 0.0
  %2569 = vmatpush1.msra.mxu0 %v2113
  %2570 = vmatprep.subr.mxu0 0.0
  %2571 = vmatpush1.msra.mxu0 %v2116
  %2572 = vmatprep.subr.mxu0 0.0
  %2573 = vmatpush1.msra.mxu0 %v2119
  %2574 = vmatprep.subr.mxu0 0.0
  %2575 = vmatpush1.msra.mxu0 %v2122
  %2576 = vmatprep.subr.mxu0 0.0
  %2577 = vmatpush1.msra.mxu0 0.0
  %2578 = vmatprep.subr.mxu0 0.0
  %2579 = vmatpush1.msra.mxu0 0.0
  %2580 = vmatprep.subr.mxu0 0.0
  %2581 = vmatpush1.msra.mxu0 0.0
  %2582 = vmatprep.subr.mxu0 0.0
  %2583 = vmatpush1.msra.mxu0 0.0
  %2584 = vmatprep.subr.mxu0 0.0
  %2585 = vmatpush1.msra.mxu0 0.0
  %2586 = vmatprep.subr.mxu0 0.0
  %2587 = vmatpush1.msra.mxu0 0.0
  %2588 = vmatprep.subr.mxu0 0.0
  %2589 = vmatpush1.msra.mxu0 0.0
  %2590 = vmatprep.subr.mxu0 0.0
  %2591 = vmatpush1.msra.mxu0 0.0
  %2592 = vmatprep.subr.mxu0 0.0
  %2593 = vmatpush1.msra.mxu0 0.0
  %2594 = vmatprep.subr.mxu0 0.0
  %2595 = vmatpush1.msra.mxu0 0.0
  %2596 = vmatprep.subr.mxu0 0.0
  %2597 = vmatpush1.msra.mxu0 0.0
  %2598 = vmatprep.subr.mxu0 0.0
  %2599 = vmatpush1.msra.mxu0 0.0
  %2600 = vmatprep.subr.mxu0 0.0
  %2601 = vmatpush1.msra.mxu0 0.0
  %2602 = vmatprep.subr.mxu0 0.0
  %2603 = vmatpush1.msra.mxu0 0.0
  %2604 = vmatprep.subr.mxu0 0.0
  %2605 = vmatpush1.msra.mxu0 0.0
  %2606 = vmatprep.subr.mxu0 0.0
  %2607 = vmatpush1.msra.mxu0 0.0
  %2608 = vmatprep.mubr.f32.mxu0 0.0
  %2609 = vmatmul.mubr.f32.gmra.mrb[0].mxu0 %v2469
  %v2610 = vpop.f32.mrb[0].mxu0
  %v2611 = vadd.f32 %v2139, %v2610
  %v2612 = vpop.f32.mrb[0].mxu0
  %2613 = vdwg.mxu0
  %v2614 = vadd.f32 %v2470, %v2540
  %v2615 = vxor.u32 %v2614, 2147483648
  %v2616 = vmul.f32 %v2615, 1.442695
  %v2617 = vpow.pop %v2616
  %v2618 = vadd.f32 %v2617, 1.0
  %v2619 = vrcp.pop %v2618
  %v2620 = vmul.f32 1.0, %v2619
  %v2621 = vadd.f32 %v2471, %v2542
  %v2622 = vxor.u32 %v2621, 2147483648
  %v2623 = vmul.f32 %v2622, 1.442695
  %v2624 = vpow.pop %v2623
  %v2625 = vadd.f32 %v2624, 1.0
  %v2626 = vrcp.pop %v2625
  %v2627 = vmul.f32 1.0, %v2626
  %v2628 = vmul.f32 %v2620, %v2611
  %v2629 = vadd.f32 %v2472, %v2628
  %v2630 = vtanh.pop %v2629
  %v2631 = vsub.f32 1.0, %v2627
  %v2632 = vmul.f32 %v2631, %v2630
  %v2633 = vmul.f32 %v2627, %v2469
  %v2634 = vadd.f32 %v2632, %v2633
  %v2635 = vld [vmem:[%s912] sm:$0xff]
  %v2636 = vld [vmem:[%s912 + $0x8] sm:$0xff]
  %v2637 = vld [vmem:[%s912 + $0x10] sm:$0xff]
  %2638 = vmatprep.subr.mxu0 %v2076
  %2639 = vmatpush1.msra.mxu0 %v2075
  %2640 = vmatprep.subr.mxu0 %v2079
  %2641 = vmatpush1.msra.mxu0 %v2078
  %2642 = vmatprep.subr.mxu0 %v2082
  %2643 = vmatpush1.msra.mxu0 %v2081
  %2644 = vmatprep.subr.mxu0 %v2085
  %2645 = vmatpush1.msra.mxu0 %v2084
  %2646 = vmatprep.subr.mxu0 %v2088
  %2647 = vmatpush1.msra.mxu0 %v2087
  %2648 = vmatprep.subr.mxu0 %v2091
  %2649 = vmatpush1.msra.mxu0 %v2090
  %2650 = vmatprep.subr.mxu0 %v2094
  %2651 = vmatpush1.msra.mxu0 %v2093
  %2652 = vmatprep.subr.mxu0 %v2097
  %2653 = vmatpush1.msra.mxu0 %v2096
  %2654 = vmatprep.subr.mxu0 %v2100
  %2655 = vmatpush1.msra.mxu0 %v2099
  %2656 = vmatprep.subr.mxu0 %v2103
  %2657 = vmatpush1.msra.mxu0 %v2102
  %2658 = vmatprep.subr.mxu0 %v2106
  %2659 = vmatpush1.msra.mxu0 %v2105
  %2660 = vmatprep.subr.mxu0 %v2109
  %2661 = vmatpush1.msra.mxu0 %v2108
  %2662 = vmatprep.subr.mxu0 %v2112
  %2663 = vmatpush1.msra.mxu0 %v2111
  %2664 = vmatprep.subr.mxu0 %v2115
  %2665 = vmatpush1.msra.mxu0 %v2114
  %2666 = vmatprep.subr.mxu0 %v2118
  %2667 = vmatpush1.msra.mxu0 %v2117
  %2668 = vmatprep.subr.mxu0 %v2121
  %2669 = vmatpush1.msra.mxu0 %v2120
  %2670 = vmatprep.subr.mxu0 0.0
  %2671 = vmatpush1.msra.mxu0 0.0
  %2672 = vmatprep.subr.mxu0 0.0
  %2673 = vmatpush1.msra.mxu0 0.0
  %2674 = vmatprep.subr.mxu0 0.0
  %2675 = vmatpush1.msra.mxu0 0.0
  %2676 = vmatprep.subr.mxu0 0.0
  %2677 = vmatpush1.msra.mxu0 0.0
  %2678 = vmatprep.subr.mxu0 0.0
  %2679 = vmatpush1.msra.mxu0 0.0
  %2680 = vmatprep.subr.mxu0 0.0
  %2681 = vmatpush1.msra.mxu0 0.0
  %2682 = vmatprep.subr.mxu0 0.0
  %2683 = vmatpush1.msra.mxu0 0.0
  %2684 = vmatprep.subr.mxu0 0.0
  %2685 = vmatpush1.msra.mxu0 0.0
  %2686 = vmatprep.subr.mxu0 0.0
  %2687 = vmatpush1.msra.mxu0 0.0
  %2688 = vmatprep.subr.mxu0 0.0
  %2689 = vmatpush1.msra.mxu0 0.0
  %2690 = vmatprep.subr.mxu0 0.0
  %2691 = vmatpush1.msra.mxu0 0.0
  %2692 = vmatprep.subr.mxu0 0.0
  %2693 = vmatpush1.msra.mxu0 0.0
  %2694 = vmatprep.subr.mxu0 0.0
  %2695 = vmatpush1.msra.mxu0 0.0
  %2696 = vmatprep.subr.mxu0 0.0
  %2697 = vmatpush1.msra.mxu0 0.0
  %2698 = vmatprep.subr.mxu0 0.0
  %2699 = vmatpush1.msra.mxu0 0.0
  %2700 = vmatprep.subr.mxu0 0.0
  %2701 = vmatpush1.msra.mxu0 0.0
  %2702 = vmatprep.mubr.f32.mxu0 0.0
  %2703 = vmatmul.mubr.f32.gmra.mrb[0].mxu0 %v2634
  %v2704 = vpop.f32.mrb[0].mxu0
  %v2705 = vadd.f32 %v2131, %v2704
  %v2706 = vpop.f32.mrb[0].mxu0
  %v2707 = vadd.f32 %v2135, %v2706
  %2708 = vdwg.mxu0
  %2709 = vmatprep.subr.mxu0 0.0
  %2710 = vmatpush1.msra.mxu0 %v2077
  %2711 = vmatprep.subr.mxu0 0.0
  %2712 = vmatpush1.msra.mxu0 %v2080
  %2713 = vmatprep.subr.mxu0 0.0
  %2714 = vmatpush1.msra.mxu0 %v2083
  %2715 = vmatprep.subr.mxu0 0.0
  %2716 = vmatpush1.msra.mxu0 %v2086
  %2717 = vmatprep.subr.mxu0 0.0
  %2718 = vmatpush1.msra.mxu0 %v2089
  %2719 = vmatprep.subr.mxu0 0.0
  %2720 = vmatpush1.msra.mxu0 %v2092
  %2721 = vmatprep.subr.mxu0 0.0
  %2722 = vmatpush1.msra.mxu0 %v2095
  %2723 = vmatprep.subr.mxu0 0.0
  %2724 = vmatpush1.msra.mxu0 %v2098
  %2725 = vmatprep.subr.mxu0 0.0
  %2726 = vmatpush1.msra.mxu0 %v2101
  %2727 = vmatprep.subr.mxu0 0.0
  %2728 = vmatpush1.msra.mxu0 %v2104
  %2729 = vmatprep.subr.mxu0 0.0
  %2730 = vmatpush1.msra.mxu0 %v2107
  %2731 = vmatprep.subr.mxu0 0.0
  %2732 = vmatpush1.msra.mxu0 %v2110
  %2733 = vmatprep.subr.mxu0 0.0
  %2734 = vmatpush1.msra.mxu0 %v2113
  %2735 = vmatprep.subr.mxu0 0.0
  %2736 = vmatpush1.msra.mxu0 %v2116
  %2737 = vmatprep.subr.mxu0 0.0
  %2738 = vmatpush1.msra.mxu0 %v2119
  %2739 = vmatprep.subr.mxu0 0.0
  %2740 = vmatpush1.msra.mxu0 %v2122
  %2741 = vmatprep.subr.mxu0 0.0
  %2742 = vmatpush1.msra.mxu0 0.0
  %2743 = vmatprep.subr.mxu0 0.0
  %2744 = vmatpush1.msra.mxu0 0.0
  %2745 = vmatprep.subr.mxu0 0.0
  %2746 = vmatpush1.msra.mxu0 0.0
  %2747 = vmatprep.subr.mxu0 0.0
  %2748 = vmatpush1.msra.mxu0 0.0
  %2749 = vmatprep.subr.mxu0 0.0
  %2750 = vmatpush1.msra.mxu0 0.0
  %2751 = vmatprep.subr.mxu0 0.0
  %2752 = vmatpush1.msra.mxu0 0.0
  %2753 = vmatprep.subr.mxu0 0.0
  %2754 = vmatpush1.msra.mxu0 0.0
  %2755 = vmatprep.subr.mxu0 0.0
  %2756 = vmatpush1.msra.mxu0 0.0
  %2757 = vmatprep.subr.mxu0 0.0
  %2758 = vmatpush1.msra.mxu0 0.0
  %2759 = vmatprep.subr.mxu0 0.0
  %2760 = vmatpush1.msra.mxu0 0.0
  %2761 = vmatprep.subr.mxu0 0.0
  %2762 = vmatpush1.msra.mxu0 0.0
  %2763 = vmatprep.subr.mxu0 0.0
  %2764 = vmatpush1.msra.mxu0 0.0
  %2765 = vmatprep.subr.mxu0 0.0
  %2766 = vmatpush1.msra.mxu0 0.0
  %2767 = vmatprep.subr.mxu0 0.0
  %2768 = vmatpush1.msra.mxu0 0.0
  %2769 = vmatprep.subr.mxu0 0.0
  %2770 = vmatpush1.msra.mxu0 0.0
  %2771 = vmatprep.subr.mxu0 0.0
  %2772 = vmatpush1.msra.mxu0 0.0
  %2773 = vmatprep.mubr.f32.mxu0 0.0
  %2774 = vmatmul.mubr.f32.gmra.mrb[0].mxu0 %v2634
  %v2775 = vpop.f32.mrb[0].mxu0
  %v2776 = vadd.f32 %v2139, %v2775
  %v2777 = vpop.f32.mrb[0].mxu0
  %2778 = vdwg.mxu0
  %v2779 = vadd.f32 %v2635, %v2705
  %v2780 = vxor.u32 %v2779, 2147483648
  %v2781 = vmul.f32 %v2780, 1.442695
  %v2782 = vpow.pop %v2781
  %v2783 = vadd.f32 %v2782, 1.0
  %v2784 = vrcp.pop %v2783
  %v2785 = vmul.f32 1.0, %v2784
  %v2786 = vadd.f32 %v2636, %v2707
  %v2787 = vxor.u32 %v2786, 2147483648
  %v2788 = vmul.f32 %v2787, 1.442695
  %v2789 = vpow.pop %v2788
  %v2790 = vadd.f32 %v2789, 1.0
  %v2791 = vrcp.pop %v2790
  %v2792 = vmul.f32 1.0, %v2791
  %v2793 = vmul.f32 %v2785, %v2776
  %v2794 = vadd.f32 %v2637, %v2793
  %v2795 = vtanh.pop %v2794
  %v2796 = vsub.f32 1.0, %v2792
  %v2797 = vmul.f32 %v2796, %v2795
  %v2798 = vmul.f32 %v2792, %v2634
  %v2799 = vadd.f32 %v2797, %v2798
  %v2800 = vld [vmem:[%s1082] sm:$0xff]
  %v2801 = vld [vmem:[%s1082 + $0x8] sm:$0xff]
  %v2802 = vld [vmem:[%s1082 + $0x10] sm:$0xff]
  %2803 = vmatprep.subr.mxu0 %v2076
  %2804 = vmatpush1.msra.mxu0 %v2075
  %2805 = vmatprep.subr.mxu0 %v2079
  %2806 = vmatpush1.msra.mxu0 %v2078
  %2807 = vmatprep.subr.mxu0 %v2082
  %2808 = vmatpush1.msra.mxu0 %v2081
  %2809 = vmatprep.subr.mxu0 %v2085
  %2810 = vmatpush1.msra.mxu0 %v2084
  %2811 = vmatprep.subr.mxu0 %v2088
  %2812 = vmatpush1.msra.mxu0 %v2087
  %2813 = vmatprep.subr.mxu0 %v2091
  %2814 = vmatpush1.msra.mxu0 %v2090
  %2815 = vmatprep.subr.mxu0 %v2094
  %2816 = vmatpush1.msra.mxu0 %v2093
  %2817 = vmatprep.subr.mxu0 %v2097
  %2818 = vmatpush1.msra.mxu0 %v2096
  %2819 = vmatprep.subr.mxu0 %v2100
  %2820 = vmatpush1.msra.mxu0 %v2099
  %2821 = vmatprep.subr.mxu0 %v2103
  %2822 = vmatpush1.msra.mxu0 %v2102
  %2823 = vmatprep.subr.mxu0 %v2106
  %2824 = vmatpush1.msra.mxu0 %v2105
  %2825 = vmatprep.subr.mxu0 %v2109
  %2826 = vmatpush1.msra.mxu0 %v2108
  %2827 = vmatprep.subr.mxu0 %v2112
  %2828 = vmatpush1.msra.mxu0 %v2111
  %2829 = vmatprep.subr.mxu0 %v2115
  %2830 = vmatpush1.msra.mxu0 %v2114
  %2831 = vmatprep.subr.mxu0 %v2118
  %2832 = vmatpush1.msra.mxu0 %v2117
  %2833 = vmatprep.subr.mxu0 %v2121
  %2834 = vmatpush1.msra.mxu0 %v2120
  %2835 = vmatprep.subr.mxu0 0.0
  %2836 = vmatpush1.msra.mxu0 0.0
  %2837 = vmatprep.subr.mxu0 0.0
  %2838 = vmatpush1.msra.mxu0 0.0
  %2839 = vmatprep.subr.mxu0 0.0
  %2840 = vmatpush1.msra.mxu0 0.0
  %2841 = vmatprep.subr.mxu0 0.0
  %2842 = vmatpush1.msra.mxu0 0.0
  %2843 = vmatprep.subr.mxu0 0.0
  %2844 = vmatpush1.msra.mxu0 0.0
  %2845 = vmatprep.subr.mxu0 0.0
  %2846 = vmatpush1.msra.mxu0 0.0
  %2847 = vmatprep.subr.mxu0 0.0
  %2848 = vmatpush1.msra.mxu0 0.0
  %2849 = vmatprep.subr.mxu0 0.0
  %2850 = vmatpush1.msra.mxu0 0.0
  %2851 = vmatprep.subr.mxu0 0.0
  %2852 = vmatpush1.msra.mxu0 0.0
  %2853 = vmatprep.subr.mxu0 0.0
  %2854 = vmatpush1.msra.mxu0 0.0
  %2855 = vmatprep.subr.mxu0 0.0
  %2856 = vmatpush1.msra.mxu0 0.0
  %2857 = vmatprep.subr.mxu0 0.0
  %2858 = vmatpush1.msra.mxu0 0.0
  %2859 = vmatprep.subr.mxu0 0.0
  %2860 = vmatpush1.msra.mxu0 0.0
  %2861 = vmatprep.subr.mxu0 0.0
  %2862 = vmatpush1.msra.mxu0 0.0
  %2863 = vmatprep.subr.mxu0 0.0
  %2864 = vmatpush1.msra.mxu0 0.0
  %2865 = vmatprep.subr.mxu0 0.0
  %2866 = vmatpush1.msra.mxu0 0.0
  %2867 = vmatprep.mubr.f32.mxu0 0.0
  %2868 = vmatmul.mubr.f32.gmra.mrb[0].mxu0 %v2799
  %v2869 = vpop.f32.mrb[0].mxu0
  %v2870 = vadd.f32 %v2131, %v2869
  %v2871 = vpop.f32.mrb[0].mxu0
  %v2872 = vadd.f32 %v2135, %v2871
  %2873 = vdwg.mxu0
  %2874 = vmatprep.subr.mxu0 0.0
  %2875 = vmatpush1.msra.mxu0 %v2077
  %2876 = vmatprep.subr.mxu0 0.0
  %2877 = vmatpush1.msra.mxu0 %v2080
  %2878 = vmatprep.subr.mxu0 0.0
  %2879 = vmatpush1.msra.mxu0 %v2083
  %2880 = vmatprep.subr.mxu0 0.0
  %2881 = vmatpush1.msra.mxu0 %v2086
  %2882 = vmatprep.subr.mxu0 0.0
  %2883 = vmatpush1.msra.mxu0 %v2089
  %2884 = vmatprep.subr.mxu0 0.0
  %2885 = vmatpush1.msra.mxu0 %v2092
  %2886 = vmatprep.subr.mxu0 0.0
  %2887 = vmatpush1.msra.mxu0 %v2095
  %2888 = vmatprep.subr.mxu0 0.0
  %2889 = vmatpush1.msra.mxu0 %v2098
  %2890 = vmatprep.subr.mxu0 0.0
  %2891 = vmatpush1.msra.mxu0 %v2101
  %2892 = vmatprep.subr.mxu0 0.0
  %2893 = vmatpush1.msra.mxu0 %v2104
  %2894 = vmatprep.subr.mxu0 0.0
  %2895 = vmatpush1.msra.mxu0 %v2107
  %2896 = vmatprep.subr.mxu0 0.0
  %2897 = vmatpush1.msra.mxu0 %v2110
  %2898 = vmatprep.subr.mxu0 0.0
  %2899 = vmatpush1.msra.mxu0 %v2113
  %2900 = vmatprep.subr.mxu0 0.0
  %2901 = vmatpush1.msra.mxu0 %v2116
  %2902 = vmatprep.subr.mxu0 0.0
  %2903 = vmatpush1.msra.mxu0 %v2119
  %2904 = vmatprep.subr.mxu0 0.0
  %2905 = vmatpush1.msra.mxu0 %v2122
  %2906 = vmatprep.subr.mxu0 0.0
  %2907 = vmatpush1.msra.mxu0 0.0
  %2908 = vmatprep.subr.mxu0 0.0
  %2909 = vmatpush1.msra.mxu0 0.0
  %2910 = vmatprep.subr.mxu0 0.0
  %2911 = vmatpush1.msra.mxu0 0.0
  %2912 = vmatprep.subr.mxu0 0.0
  %2913 = vmatpush1.msra.mxu0 0.0
  %2914 = vmatprep.subr.mxu0 0.0
  %2915 = vmatpush1.msra.mxu0 0.0
  %2916 = vmatprep.subr.mxu0 0.0
  %2917 = vmatpush1.msra.mxu0 0.0
  %2918 = vmatprep.subr.mxu0 0.0
  %2919 = vmatpush1.msra.mxu0 0.0
  %2920 = vmatprep.subr.mxu0 0.0
  %2921 = vmatpush1.msra.mxu0 0.0
  %2922 = vmatprep.subr.mxu0 0.0
  %2923 = vmatpush1.msra.mxu0 0.0
  %2924 = vmatprep.subr.mxu0 0.0
  %2925 = vmatpush1.msra.mxu0 0.0
  %2926 = vmatprep.subr.mxu0 0.0
  %2927 = vmatpush1.msra.mxu0 0.0
  %2928 = vmatprep.subr.mxu0 0.0
  %2929 = vmatpush1.msra.mxu0 0.0
  %2930 = vmatprep.subr.mxu0 0.0
  %2931 = vmatpush1.msra.mxu0 0.0
  %2932 = vmatprep.subr.mxu0 0.0
  %2933 = vmatpush1.msra.mxu0 0.0
  %2934 = vmatprep.subr.mxu0 0.0
  %2935 = vmatpush1.msra.mxu0 0.0
  %2936 = vmatprep.subr.mxu0 0.0
  %2937 = vmatpush1.msra.mxu0 0.0
  %2938 = vmatprep.mubr.f32.mxu0 0.0
  %2939 = vmatmul.mubr.f32.gmra.mrb[0].mxu0 %v2799
  %v2940 = vpop.f32.mrb[0].mxu0
  %v2941 = vadd.f32 %v2139, %v2940
  %v2942 = vpop.f32.mrb[0].mxu0
  %2943 = vdwg.mxu0
  %v2944 = vadd.f32 %v2800, %v2870
  %v2945 = vxor.u32 %v2944, 2147483648
  %v2946 = vmul.f32 %v2945, 1.442695
  %v2947 = vpow.pop %v2946
  %v2948 = vadd.f32 %v2947, 1.0
  %v2949 = vrcp.pop %v2948
  %v2950 = vmul.f32 1.0, %v2949
  %v2951 = vadd.f32 %v2801, %v2872
  %v2952 = vxor.u32 %v2951, 2147483648
  %v2953 = vmul.f32 %v2952, 1.442695
  %v2954 = vpow.pop %v2953
  %v2955 = vadd.f32 %v2954, 1.0
  %v2956 = vrcp.pop %v2955
  %v2957 = vmul.f32 1.0, %v2956
  %v2958 = vmul.f32 %v2950, %v2941
  %v2959 = vadd.f32 %v2802, %v2958
  %v2960 = vtanh.pop %v2959
  %v2961 = vsub.f32 1.0, %v2957
  %v2962 = vmul.f32 %v2961, %v2960
  %v2963 = vmul.f32 %v2957, %v2799
  %v2964 = vadd.f32 %v2962, %v2963
  %v2965 = vld [vmem:[%s1252] sm:$0xff]
  %v2966 = vld [vmem:[%s1252 + $0x8] sm:$0xff]
  %v2967 = vld [vmem:[%s1252 + $0x10] sm:$0xff]
  %2968 = vmatprep.subr.mxu0 %v2076
  %2969 = vmatpush1.msra.mxu0 %v2075
  %2970 = vmatprep.subr.mxu0 %v2079
  %2971 = vmatpush1.msra.mxu0 %v2078
  %2972 = vmatprep.subr.mxu0 %v2082
  %2973 = vmatpush1.msra.mxu0 %v2081
  %2974 = vmatprep.subr.mxu0 %v2085
  %2975 = vmatpush1.msra.mxu0 %v2084
  %2976 = vmatprep.subr.mxu0 %v2088
  %2977 = vmatpush1.msra.mxu0 %v2087
  %2978 = vmatprep.subr.mxu0 %v2091
  %2979 = vmatpush1.msra.mxu0 %v2090
  %2980 = vmatprep.subr.mxu0 %v2094
  %2981 = vmatpush1.msra.mxu0 %v2093
  %2982 = vmatprep.subr.mxu0 %v2097
  %2983 = vmatpush1.msra.mxu0 %v2096
  %2984 = vmatprep.subr.mxu0 %v2100
  %2985 = vmatpush1.msra.mxu0 %v2099
  %2986 = vmatprep.subr.mxu0 %v2103
  %2987 = vmatpush1.msra.mxu0 %v2102
  %2988 = vmatprep.subr.mxu0 %v2106
  %2989 = vmatpush1.msra.mxu0 %v2105
  %2990 = vmatprep.subr.mxu0 %v2109
  %2991 = vmatpush1.msra.mxu0 %v2108
  %2992 = vmatprep.subr.mxu0 %v2112
  %2993 = vmatpush1.msra.mxu0 %v2111
  %2994 = vmatprep.subr.mxu0 %v2115
  %2995 = vmatpush1.msra.mxu0 %v2114
  %2996 = vmatprep.subr.mxu0 %v2118
  %2997 = vmatpush1.msra.mxu0 %v2117
  %2998 = vmatprep.subr.mxu0 %v2121
  %2999 = vmatpush1.msra.mxu0 %v2120
  %3000 = vmatprep.subr.mxu0 0.0
  %3001 = vmatpush1.msra.mxu0 0.0
  %3002 = vmatprep.subr.mxu0 0.0
  %3003 = vmatpush1.msra.mxu0 0.0
  %3004 = vmatprep.subr.mxu0 0.0
  %3005 = vmatpush1.msra.mxu0 0.0
  %3006 = vmatprep.subr.mxu0 0.0
  %3007 = vmatpush1.msra.mxu0 0.0
  %3008 = vmatprep.subr.mxu0 0.0
  %3009 = vmatpush1.msra.mxu0 0.0
  %3010 = vmatprep.subr.mxu0 0.0
  %3011 = vmatpush1.msra.mxu0 0.0
  %3012 = vmatprep.subr.mxu0 0.0
  %3013 = vmatpush1.msra.mxu0 0.0
  %3014 = vmatprep.subr.mxu0 0.0
  %3015 = vmatpush1.msra.mxu0 0.0
  %3016 = vmatprep.subr.mxu0 0.0
  %3017 = vmatpush1.msra.mxu0 0.0
  %3018 = vmatprep.subr.mxu0 0.0
  %3019 = vmatpush1.msra.mxu0 0.0
  %3020 = vmatprep.subr.mxu0 0.0
  %3021 = vmatpush1.msra.mxu0 0.0
  %3022 = vmatprep.subr.mxu0 0.0
  %3023 = vmatpush1.msra.mxu0 0.0
  %3024 = vmatprep.subr.mxu0 0.0
  %3025 = vmatpush1.msra.mxu0 0.0
  %3026 = vmatprep.subr.mxu0 0.0
  %3027 = vmatpush1.msra.mxu0 0.0
  %3028 = vmatprep.subr.mxu0 0.0
  %3029 = vmatpush1.msra.mxu0 0.0
  %3030 = vmatprep.subr.mxu0 0.0
  %3031 = vmatpush1.msra.mxu0 0.0
  %3032 = vmatprep.mubr.f32.mxu0 0.0
  %3033 = vmatmul.mubr.f32.gmra.mrb[0].mxu0 %v2964
  %v3034 = vpop.f32.mrb[0].mxu0
  %v3035 = vadd.f32 %v2131, %v3034
  %v3036 = vpop.f32.mrb[0].mxu0
  %v3037 = vadd.f32 %v2135, %v3036
  %3038 = vdwg.mxu0
  %3039 = vmatprep.subr.mxu0 0.0
  %3040 = vmatpush1.msra.mxu0 %v2077
  %3041 = vmatprep.subr.mxu0 0.0
  %3042 = vmatpush1.msra.mxu0 %v2080
  %3043 = vmatprep.subr.mxu0 0.0
  %3044 = vmatpush1.msra.mxu0 %v2083
  %3045 = vmatprep.subr.mxu0 0.0
  %3046 = vmatpush1.msra.mxu0 %v2086
  %3047 = vmatprep.subr.mxu0 0.0
  %3048 = vmatpush1.msra.mxu0 %v2089
  %3049 = vmatprep.subr.mxu0 0.0
  %3050 = vmatpush1.msra.mxu0 %v2092
  %3051 = vmatprep.subr.mxu0 0.0
  %3052 = vmatpush1.msra.mxu0 %v2095
  %3053 = vmatprep.subr.mxu0 0.0
  %3054 = vmatpush1.msra.mxu0 %v2098
  %3055 = vmatprep.subr.mxu0 0.0
  %3056 = vmatpush1.msra.mxu0 %v2101
  %3057 = vmatprep.subr.mxu0 0.0
  %3058 = vmatpush1.msra.mxu0 %v2104
  %3059 = vmatprep.subr.mxu0 0.0
  %3060 = vmatpush1.msra.mxu0 %v2107
  %3061 = vmatprep.subr.mxu0 0.0
  %3062 = vmatpush1.msra.mxu0 %v2110
  %3063 = vmatprep.subr.mxu0 0.0
  %3064 = vmatpush1.msra.mxu0 %v2113
  %3065 = vmatprep.subr.mxu0 0.0
  %3066 = vmatpush1.msra.mxu0 %v2116
  %3067 = vmatprep.subr.mxu0 0.0
  %3068 = vmatpush1.msra.mxu0 %v2119
  %3069 = vmatprep.subr.mxu0 0.0
  %3070 = vmatpush1.msra.mxu0 %v2122
  %3071 = vmatprep.subr.mxu0 0.0
  %3072 = vmatpush1.msra.mxu0 0.0
  %3073 = vmatprep.subr.mxu0 0.0
  %3074 = vmatpush1.msra.mxu0 0.0
  %3075 = vmatprep.subr.mxu0 0.0
  %3076 = vmatpush1.msra.mxu0 0.0
  %3077 = vmatprep.subr.mxu0 0.0
  %3078 = vmatpush1.msra.mxu0 0.0
  %3079 = vmatprep.subr.mxu0 0.0
  %3080 = vmatpush1.msra.mxu0 0.0
  %3081 = vmatprep.subr.mxu0 0.0
  %3082 = vmatpush1.msra.mxu0 0.0
  %3083 = vmatprep.subr.mxu0 0.0
  %3084 = vmatpush1.msra.mxu0 0.0
  %3085 = vmatprep.subr.mxu0 0.0
  %3086 = vmatpush1.msra.mxu0 0.0
  %3087 = vmatprep.subr.mxu0 0.0
  %3088 = vmatpush1.msra.mxu0 0.0
  %3089 = vmatprep.subr.mxu0 0.0
  %3090 = vmatpush1.msra.mxu0 0.0
  %3091 = vmatprep.subr.mxu0 0.0
  %3092 = vmatpush1.msra.mxu0 0.0
  %3093 = vmatprep.subr.mxu0 0.0
  %3094 = vmatpush1.msra.mxu0 0.0
  %3095 = vmatprep.subr.mxu0 0.0
  %3096 = vmatpush1.msra.mxu0 0.0
  %3097 = vmatprep.subr.mxu0 0.0
  %3098 = vmatpush1.msra.mxu0 0.0
  %3099 = vmatprep.subr.mxu0 0.0
  %3100 = vmatpush1.msra.mxu0 0.0
  %3101 = vmatprep.subr.mxu0 0.0
  %3102 = vmatpush1.msra.mxu0 0.0
  %3103 = vmatprep.mubr.f32.mxu0 0.0
  %3104 = vmatmul.mubr.f32.gmra.mrb[0].mxu0 %v2964
  %v3105 = vpop.f32.mrb[0].mxu0
  %v3106 = vadd.f32 %v2139, %v3105
  %v3107 = vpop.f32.mrb[0].mxu0
  %3108 = vdwg.mxu0
  %v3109 = vadd.f32 %v2965, %v3035
  %v3110 = vxor.u32 %v3109, 2147483648
  %v3111 = vmul.f32 %v3110, 1.442695
  %v3112 = vpow.pop %v3111
  %v3113 = vadd.f32 %v3112, 1.0
  %v3114 = vrcp.pop %v3113
  %v3115 = vmul.f32 1.0, %v3114
  %v3116 = vadd.f32 %v2966, %v3037
  %v3117 = vxor.u32 %v3116, 2147483648
  %v3118 = vmul.f32 %v3117, 1.442695
  %v3119 = vpow.pop %v3118
  %v3120 = vadd.f32 %v3119, 1.0
  %v3121 = vrcp.pop %v3120
  %v3122 = vmul.f32 1.0, %v3121
  %v3123 = vmul.f32 %v3115, %v3106
  %v3124 = vadd.f32 %v2967, %v3123
  %v3125 = vtanh.pop %v3124
  %v3126 = vsub.f32 1.0, %v3122
  %v3127 = vmul.f32 %v3126, %v3125
  %v3128 = vmul.f32 %v3122, %v2964
  %v3129 = vadd.f32 %v3127, %v3128
  %v3130 = vld [vmem:[%s1422] sm:$0xff]
  %v3131 = vld [vmem:[%s1422 + $0x8] sm:$0xff]
  %v3132 = vld [vmem:[%s1422 + $0x10] sm:$0xff]
  %3133 = vmatprep.subr.mxu0 %v2076
  %3134 = vmatpush1.msra.mxu0 %v2075
  %3135 = vmatprep.subr.mxu0 %v2079
  %3136 = vmatpush1.msra.mxu0 %v2078
  %3137 = vmatprep.subr.mxu0 %v2082
  %3138 = vmatpush1.msra.mxu0 %v2081
  %3139 = vmatprep.subr.mxu0 %v2085
  %3140 = vmatpush1.msra.mxu0 %v2084
  %3141 = vmatprep.subr.mxu0 %v2088
  %3142 = vmatpush1.msra.mxu0 %v2087
  %3143 = vmatprep.subr.mxu0 %v2091
  %3144 = vmatpush1.msra.mxu0 %v2090
  %3145 = vmatprep.subr.mxu0 %v2094
  %3146 = vmatpush1.msra.mxu0 %v2093
  %3147 = vmatprep.subr.mxu0 %v2097
  %3148 = vmatpush1.msra.mxu0 %v2096
  %3149 = vmatprep.subr.mxu0 %v2100
  %3150 = vmatpush1.msra.mxu0 %v2099
  %3151 = vmatprep.subr.mxu0 %v2103
  %3152 = vmatpush1.msra.mxu0 %v2102
  %3153 = vmatprep.subr.mxu0 %v2106
  %3154 = vmatpush1.msra.mxu0 %v2105
  %3155 = vmatprep.subr.mxu0 %v2109
  %3156 = vmatpush1.msra.mxu0 %v2108
  %3157 = vmatprep.subr.mxu0 %v2112
  %3158 = vmatpush1.msra.mxu0 %v2111
  %3159 = vmatprep.subr.mxu0 %v2115
  %3160 = vmatpush1.msra.mxu0 %v2114
  %3161 = vmatprep.subr.mxu0 %v2118
  %3162 = vmatpush1.msra.mxu0 %v2117
  %3163 = vmatprep.subr.mxu0 %v2121
  %3164 = vmatpush1.msra.mxu0 %v2120
  %3165 = vmatprep.subr.mxu0 0.0
  %3166 = vmatpush1.msra.mxu0 0.0
  %3167 = vmatprep.subr.mxu0 0.0
  %3168 = vmatpush1.msra.mxu0 0.0
  %3169 = vmatprep.subr.mxu0 0.0
  %3170 = vmatpush1.msra.mxu0 0.0
  %3171 = vmatprep.subr.mxu0 0.0
  %3172 = vmatpush1.msra.mxu0 0.0
  %3173 = vmatprep.subr.mxu0 0.0
  %3174 = vmatpush1.msra.mxu0 0.0
  %3175 = vmatprep.subr.mxu0 0.0
  %3176 = vmatpush1.msra.mxu0 0.0
  %3177 = vmatprep.subr.mxu0 0.0
  %3178 = vmatpush1.msra.mxu0 0.0
  %3179 = vmatprep.subr.mxu0 0.0
  %3180 = vmatpush1.msra.mxu0 0.0
  %3181 = vmatprep.subr.mxu0 0.0
  %3182 = vmatpush1.msra.mxu0 0.0
  %3183 = vmatprep.subr.mxu0 0.0
  %3184 = vmatpush1.msra.mxu0 0.0
  %3185 = vmatprep.subr.mxu0 0.0
  %3186 = vmatpush1.msra.mxu0 0.0
  %3187 = vmatprep.subr.mxu0 0.0
  %3188 = vmatpush1.msra.mxu0 0.0
  %3189 = vmatprep.subr.mxu0 0.0
  %3190 = vmatpush1.msra.mxu0 0.0
  %3191 = vmatprep.subr.mxu0 0.0
  %3192 = vmatpush1.msra.mxu0 0.0
  %3193 = vmatprep.subr.mxu0 0.0
  %3194 = vmatpush1.msra.mxu0 0.0
  %3195 = vmatprep.subr.mxu0 0.0
  %3196 = vmatpush1.msra.mxu0 0.0
  %3197 = vmatprep.mubr.f32.mxu0 0.0
  %3198 = vmatmul.mubr.f32.gmra.mrb[0].mxu0 %v3129
  %v3199 = vpop.f32.mrb[0].mxu0
  %v3200 = vadd.f32 %v2131, %v3199
  %v3201 = vpop.f32.mrb[0].mxu0
  %v3202 = vadd.f32 %v2135, %v3201
  %3203 = vdwg.mxu0
  %3204 = vmatprep.subr.mxu0 0.0
  %3205 = vmatpush1.msra.mxu0 %v2077
  %3206 = vmatprep.subr.mxu0 0.0
  %3207 = vmatpush1.msra.mxu0 %v2080
  %3208 = vmatprep.subr.mxu0 0.0
  %3209 = vmatpush1.msra.mxu0 %v2083
  %3210 = vmatprep.subr.mxu0 0.0
  %3211 = vmatpush1.msra.mxu0 %v2086
  %3212 = vmatprep.subr.mxu0 0.0
  %3213 = vmatpush1.msra.mxu0 %v2089
  %3214 = vmatprep.subr.mxu0 0.0
  %3215 = vmatpush1.msra.mxu0 %v2092
  %3216 = vmatprep.subr.mxu0 0.0
  %3217 = vmatpush1.msra.mxu0 %v2095
  %3218 = vmatprep.subr.mxu0 0.0
  %3219 = vmatpush1.msra.mxu0 %v2098
  %3220 = vmatprep.subr.mxu0 0.0
  %3221 = vmatpush1.msra.mxu0 %v2101
  %3222 = vmatprep.subr.mxu0 0.0
  %3223 = vmatpush1.msra.mxu0 %v2104
  %3224 = vmatprep.subr.mxu0 0.0
  %3225 = vmatpush1.msra.mxu0 %v2107
  %3226 = vmatprep.subr.mxu0 0.0
  %3227 = vmatpush1.msra.mxu0 %v2110
  %3228 = vmatprep.subr.mxu0 0.0
  %3229 = vmatpush1.msra.mxu0 %v2113
  %3230 = vmatprep.subr.mxu0 0.0
  %3231 = vmatpush1.msra.mxu0 %v2116
  %3232 = vmatprep.subr.mxu0 0.0
  %3233 = vmatpush1.msra.mxu0 %v2119
  %3234 = vmatprep.subr.mxu0 0.0
  %3235 = vmatpush1.msra.mxu0 %v2122
  %3236 = vmatprep.subr.mxu0 0.0
  %3237 = vmatpush1.msra.mxu0 0.0
  %3238 = vmatprep.subr.mxu0 0.0
  %3239 = vmatpush1.msra.mxu0 0.0
  %3240 = vmatprep.subr.mxu0 0.0
  %3241 = vmatpush1.msra.mxu0 0.0
  %3242 = vmatprep.subr.mxu0 0.0
  %3243 = vmatpush1.msra.mxu0 0.0
  %3244 = vmatprep.subr.mxu0 0.0
  %3245 = vmatpush1.msra.mxu0 0.0
  %3246 = vmatprep.subr.mxu0 0.0
  %3247 = vmatpush1.msra.mxu0 0.0
  %3248 = vmatprep.subr.mxu0 0.0
  %3249 = vmatpush1.msra.mxu0 0.0
  %3250 = vmatprep.subr.mxu0 0.0
  %3251 = vmatpush1.msra.mxu0 0.0
  %3252 = vmatprep.subr.mxu0 0.0
  %3253 = vmatpush1.msra.mxu0 0.0
  %3254 = vmatprep.subr.mxu0 0.0
  %3255 = vmatpush1.msra.mxu0 0.0
  %3256 = vmatprep.subr.mxu0 0.0
  %3257 = vmatpush1.msra.mxu0 0.0
  %3258 = vmatprep.subr.mxu0 0.0
  %3259 = vmatpush1.msra.mxu0 0.0
  %3260 = vmatprep.subr.mxu0 0.0
  %3261 = vmatpush1.msra.mxu0 0.0
  %3262 = vmatprep.subr.mxu0 0.0
  %3263 = vmatpush1.msra.mxu0 0.0
  %3264 = vmatprep.subr.mxu0 0.0
  %3265 = vmatpush1.msra.mxu0 0.0
  %3266 = vmatprep.subr.mxu0 0.0
  %3267 = vmatpush1.msra.mxu0 0.0
  %3268 = vmatprep.mubr.f32.mxu0 0.0
  %3269 = vmatmul.mubr.f32.gmra.mrb[0].mxu0 %v3129
  %v3270 = vpop.f32.mrb[0].mxu0
  %v3271 = vadd.f32 %v2139, %v3270
  %v3272 = vpop.f32.mrb[0].mxu0
  %3273 = vdwg.mxu0
  %v3274 = vadd.f32 %v3130, %v3200
  %v3275 = vxor.u32 %v3274, 2147483648
  %v3276 = vmul.f32 %v3275, 1.442695
  %v3277 = vpow.pop %v3276
  %v3278 = vadd.f32 %v3277, 1.0
  %v3279 = vrcp.pop %v3278
  %v3280 = vmul.f32 1.0, %v3279
  %v3281 = vadd.f32 %v3131, %v3202
  %v3282 = vxor.u32 %v3281, 2147483648
  %v3283 = vmul.f32 %v3282, 1.442695
  %v3284 = vpow.pop %v3283
  %v3285 = vadd.f32 %v3284, 1.0
  %v3286 = vrcp.pop %v3285
  %v3287 = vmul.f32 1.0, %v3286
  %v3288 = vmul.f32 %v3280, %v3271
  %v3289 = vadd.f32 %v3132, %v3288
  %v3290 = vtanh.pop %v3289
  %v3291 = vsub.f32 1.0, %v3287
  %v3292 = vmul.f32 %v3291, %v3290
  %v3293 = vmul.f32 %v3287, %v3129
  %v3294 = vadd.f32 %v3292, %v3293
  %v3295 = vld [vmem:[%s1592] sm:$0xff]
  %v3296 = vld [vmem:[%s1592 + $0x8] sm:$0xff]
  %v3297 = vld [vmem:[%s1592 + $0x10] sm:$0xff]
  %3298 = vmatprep.subr.mxu0 %v2076
  %3299 = vmatpush1.msra.mxu0 %v2075
  %3300 = vmatprep.subr.mxu0 %v2079
  %3301 = vmatpush1.msra.mxu0 %v2078
  %3302 = vmatprep.subr.mxu0 %v2082
  %3303 = vmatpush1.msra.mxu0 %v2081
  %3304 = vmatprep.subr.mxu0 %v2085
  %3305 = vmatpush1.msra.mxu0 %v2084
  %3306 = vmatprep.subr.mxu0 %v2088
  %3307 = vmatpush1.msra.mxu0 %v2087
  %3308 = vmatprep.subr.mxu0 %v2091
  %3309 = vmatpush1.msra.mxu0 %v2090
  %3310 = vmatprep.subr.mxu0 %v2094
  %3311 = vmatpush1.msra.mxu0 %v2093
  %3312 = vmatprep.subr.mxu0 %v2097
  %3313 = vmatpush1.msra.mxu0 %v2096
  %3314 = vmatprep.subr.mxu0 %v2100
  %3315 = vmatpush1.msra.mxu0 %v2099
  %3316 = vmatprep.subr.mxu0 %v2103
  %3317 = vmatpush1.msra.mxu0 %v2102
  %3318 = vmatprep.subr.mxu0 %v2106
  %3319 = vmatpush1.msra.mxu0 %v2105
  %3320 = vmatprep.subr.mxu0 %v2109
  %3321 = vmatpush1.msra.mxu0 %v2108
  %3322 = vmatprep.subr.mxu0 %v2112
  %3323 = vmatpush1.msra.mxu0 %v2111
  %3324 = vmatprep.subr.mxu0 %v2115
  %3325 = vmatpush1.msra.mxu0 %v2114
  %3326 = vmatprep.subr.mxu0 %v2118
  %3327 = vmatpush1.msra.mxu0 %v2117
  %3328 = vmatprep.subr.mxu0 %v2121
  %3329 = vmatpush1.msra.mxu0 %v2120
  %3330 = vmatprep.subr.mxu0 0.0
  %3331 = vmatpush1.msra.mxu0 0.0
  %3332 = vmatprep.subr.mxu0 0.0
  %3333 = vmatpush1.msra.mxu0 0.0
  %3334 = vmatprep.subr.mxu0 0.0
  %3335 = vmatpush1.msra.mxu0 0.0
  %3336 = vmatprep.subr.mxu0 0.0
  %3337 = vmatpush1.msra.mxu0 0.0
  %3338 = vmatprep.subr.mxu0 0.0
  %3339 = vmatpush1.msra.mxu0 0.0
  %3340 = vmatprep.subr.mxu0 0.0
  %3341 = vmatpush1.msra.mxu0 0.0
  %3342 = vmatprep.subr.mxu0 0.0
  %3343 = vmatpush1.msra.mxu0 0.0
  %3344 = vmatprep.subr.mxu0 0.0
  %3345 = vmatpush1.msra.mxu0 0.0
  %3346 = vmatprep.subr.mxu0 0.0
  %3347 = vmatpush1.msra.mxu0 0.0
  %3348 = vmatprep.subr.mxu0 0.0
  %3349 = vmatpush1.msra.mxu0 0.0
  %3350 = vmatprep.subr.mxu0 0.0
  %3351 = vmatpush1.msra.mxu0 0.0
  %3352 = vmatprep.subr.mxu0 0.0
  %3353 = vmatpush1.msra.mxu0 0.0
  %3354 = vmatprep.subr.mxu0 0.0
  %3355 = vmatpush1.msra.mxu0 0.0
  %3356 = vmatprep.subr.mxu0 0.0
  %3357 = vmatpush1.msra.mxu0 0.0
  %3358 = vmatprep.subr.mxu0 0.0
  %3359 = vmatpush1.msra.mxu0 0.0
  %3360 = vmatprep.subr.mxu0 0.0
  %3361 = vmatpush1.msra.mxu0 0.0
  %3362 = vmatprep.mubr.f32.mxu0 0.0
  %3363 = vmatmul.mubr.f32.gmra.mrb[0].mxu0 %v3294
  %v3364 = vpop.f32.mrb[0].mxu0
  %v3365 = vadd.f32 %v2131, %v3364
  %v3366 = vpop.f32.mrb[0].mxu0
  %v3367 = vadd.f32 %v2135, %v3366
  %3368 = vdwg.mxu0
  %3369 = vmatprep.subr.mxu0 0.0
  %3370 = vmatpush1.msra.mxu0 %v2077
  %3371 = vmatprep.subr.mxu0 0.0
  %3372 = vmatpush1.msra.mxu0 %v2080
  %3373 = vmatprep.subr.mxu0 0.0
  %3374 = vmatpush1.msra.mxu0 %v2083
  %3375 = vmatprep.subr.mxu0 0.0
  %3376 = vmatpush1.msra.mxu0 %v2086
  %3377 = vmatprep.subr.mxu0 0.0
  %3378 = vmatpush1.msra.mxu0 %v2089
  %3379 = vmatprep.subr.mxu0 0.0
  %3380 = vmatpush1.msra.mxu0 %v2092
  %3381 = vmatprep.subr.mxu0 0.0
  %3382 = vmatpush1.msra.mxu0 %v2095
  %3383 = vmatprep.subr.mxu0 0.0
  %3384 = vmatpush1.msra.mxu0 %v2098
  %3385 = vmatprep.subr.mxu0 0.0
  %3386 = vmatpush1.msra.mxu0 %v2101
  %3387 = vmatprep.subr.mxu0 0.0
  %3388 = vmatpush1.msra.mxu0 %v2104
  %3389 = vmatprep.subr.mxu0 0.0
  %3390 = vmatpush1.msra.mxu0 %v2107
  %3391 = vmatprep.subr.mxu0 0.0
  %3392 = vmatpush1.msra.mxu0 %v2110
  %3393 = vmatprep.subr.mxu0 0.0
  %3394 = vmatpush1.msra.mxu0 %v2113
  %3395 = vmatprep.subr.mxu0 0.0
  %3396 = vmatpush1.msra.mxu0 %v2116
  %3397 = vmatprep.subr.mxu0 0.0
  %3398 = vmatpush1.msra.mxu0 %v2119
  %3399 = vmatprep.subr.mxu0 0.0
  %3400 = vmatpush1.msra.mxu0 %v2122
  %3401 = vmatprep.subr.mxu0 0.0
  %3402 = vmatpush1.msra.mxu0 0.0
  %3403 = vmatprep.subr.mxu0 0.0
  %3404 = vmatpush1.msra.mxu0 0.0
  %3405 = vmatprep.subr.mxu0 0.0
  %3406 = vmatpush1.msra.mxu0 0.0
  %3407 = vmatprep.subr.mxu0 0.0
  %3408 = vmatpush1.msra.mxu0 0.0
  %3409 = vmatprep.subr.mxu0 0.0
  %3410 = vmatpush1.msra.mxu0 0.0
  %3411 = vmatprep.subr.mxu0 0.0
  %3412 = vmatpush1.msra.mxu0 0.0
  %3413 = vmatprep.subr.mxu0 0.0
  %3414 = vmatpush1.msra.mxu0 0.0
  %3415 = vmatprep.subr.mxu0 0.0
  %3416 = vmatpush1.msra.mxu0 0.0
  %3417 = vmatprep.subr.mxu0 0.0
  %3418 = vmatpush1.msra.mxu0 0.0
  %3419 = vmatprep.subr.mxu0 0.0
  %3420 = vmatpush1.msra.mxu0 0.0
  %3421 = vmatprep.subr.mxu0 0.0
  %3422 = vmatpush1.msra.mxu0 0.0
  %3423 = vmatprep.subr.mxu0 0.0
  %3424 = vmatpush1.msra.mxu0 0.0
  %3425 = vmatprep.subr.mxu0 0.0
  %3426 = vmatpush1.msra.mxu0 0.0
  %3427 = vmatprep.subr.mxu0 0.0
  %3428 = vmatpush1.msra.mxu0 0.0
  %3429 = vmatprep.subr.mxu0 0.0
  %3430 = vmatpush1.msra.mxu0 0.0
  %3431 = vmatprep.subr.mxu0 0.0
  %3432 = vmatpush1.msra.mxu0 0.0
  %3433 = vmatprep.mubr.f32.mxu0 0.0
  %3434 = vmatmul.mubr.f32.gmra.mrb[0].mxu0 %v3294
  %v3435 = vpop.f32.mrb[0].mxu0
  %v3436 = vadd.f32 %v2139, %v3435
  %v3437 = vpop.f32.mrb[0].mxu0
  %3438 = vdwg.mxu0
  %v3439 = vadd.f32 %v3295, %v3365
  %v3440 = vxor.u32 %v3439, 2147483648
  %v3441 = vmul.f32 %v3440, 1.442695
  %v3442 = vpow.pop %v3441
  %v3443 = vadd.f32 %v3442, 1.0
  %v3444 = vrcp.pop %v3443
  %v3445 = vmul.f32 1.0, %v3444
  %v3446 = vadd.f32 %v3296, %v3367
  %v3447 = vxor.u32 %v3446, 2147483648
  %v3448 = vmul.f32 %v3447, 1.442695
  %v3449 = vpow.pop %v3448
  %v3450 = vadd.f32 %v3449, 1.0
  %v3451 = vrcp.pop %v3450
  %v3452 = vmul.f32 1.0, %v3451
  %v3453 = vmul.f32 %v3445, %v3436
  %v3454 = vadd.f32 %v3297, %v3453
  %v3455 = vtanh.pop %v3454
  %v3456 = vsub.f32 1.0, %v3452
  %v3457 = vmul.f32 %v3456, %v3455
  %v3458 = vmul.f32 %v3452, %v3294
  %v3459 = vadd.f32 %v3457, %v3458
  %v3460 = vld [vmem:[%s9] sm:$0xff]
  %v3461 = vld [vmem:[%s9 + $0x8] sm:$0xff]
  %v3462 = vld [vmem:[%s9 + $0x10] sm:$0xff]
  %v3463 = vld [vmem:[%s9 + $0x18] sm:$0xff]
  %v3464 = vld [vmem:[%s9 + $0x20] sm:$0xff]
  %v3465 = vld [vmem:[%s9 + $0x28] sm:$0xff]
  %v3466 = vld [vmem:[%s9 + $0x30] sm:$0xff]
  %v3467 = vld [vmem:[%s9 + $0x38] sm:$0xff]
  %v3468 = vld [vmem:[%s9 + $0x40] sm:$0xff]
  %v3469 = vld [vmem:[%s9 + $0x48] sm:$0xff]
  %v3470 = vld [vmem:[%s9 + $0x50] sm:$0xff]
  %v3471 = vld [vmem:[%s9 + $0x58] sm:$0xff]
  %v3472 = vld [vmem:[%s9 + $0x60] sm:$0xff]
  %v3473 = vld [vmem:[%s9 + $0x68] sm:$0xff]
  %v3474 = vld [vmem:[%s9 + $0x70] sm:$0xff]
  %v3475 = vld [vmem:[%s9 + $0x78] sm:$0xff]
  %v3476 = vld [vmem:[%s10] sm:$0x1]
  %v3478 = vlaneseq
  %v3479 = vshrl.u32 %v3478, 7
  %v3480 = vsub.s32 0, %v3479
  %v3481 = vrot.slane %v3476, %v3480
  %3483 = vmatprep.subr.mxu0 0.0
  %3484 = vmatpush1.msra.mxu0 %v3460
  %3485 = vmatprep.subr.mxu0 0.0
  %3486 = vmatpush1.msra.mxu0 %v3461
  %3487 = vmatprep.subr.mxu0 0.0
  %3488 = vmatpush1.msra.mxu0 %v3462
  %3489 = vmatprep.subr.mxu0 0.0
  %3490 = vmatpush1.msra.mxu0 %v3463
  %3491 = vmatprep.subr.mxu0 0.0
  %3492 = vmatpush1.msra.mxu0 %v3464
  %3493 = vmatprep.subr.mxu0 0.0
  %3494 = vmatpush1.msra.mxu0 %v3465
  %3495 = vmatprep.subr.mxu0 0.0
  %3496 = vmatpush1.msra.mxu0 %v3466
  %3497 = vmatprep.subr.mxu0 0.0
  %3498 = vmatpush1.msra.mxu0 %v3467
  %3499 = vmatprep.subr.mxu0 0.0
  %3500 = vmatpush1.msra.mxu0 %v3468
  %3501 = vmatprep.subr.mxu0 0.0
  %3502 = vmatpush1.msra.mxu0 %v3469
  %3503 = vmatprep.subr.mxu0 0.0
  %3504 = vmatpush1.msra.mxu0 %v3470
  %3505 = vmatprep.subr.mxu0 0.0
  %3506 = vmatpush1.msra.mxu0 %v3471
  %3507 = vmatprep.subr.mxu0 0.0
  %3508 = vmatpush1.msra.mxu0 %v3472
  %3509 = vmatprep.subr.mxu0 0.0
  %3510 = vmatpush1.msra.mxu0 %v3473
  %3511 = vmatprep.subr.mxu0 0.0
  %3512 = vmatpush1.msra.mxu0 %v3474
  %3513 = vmatprep.subr.mxu0 0.0
  %3514 = vmatpush1.msra.mxu0 %v3475
  %3515 = vmatprep.subr.mxu0 0.0
  %3516 = vmatpush1.msra.mxu0 0.0
  %3517 = vmatprep.subr.mxu0 0.0
  %3518 = vmatpush1.msra.mxu0 0.0
  %3519 = vmatprep.subr.mxu0 0.0
  %3520 = vmatpush1.msra.mxu0 0.0
  %3521 = vmatprep.subr.mxu0 0.0
  %3522 = vmatpush1.msra.mxu0 0.0
  %3523 = vmatprep.subr.mxu0 0.0
  %3524 = vmatpush1.msra.mxu0 0.0
  %3525 = vmatprep.subr.mxu0 0.0
  %3526 = vmatpush1.msra.mxu0 0.0
  %3527 = vmatprep.subr.mxu0 0.0
  %3528 = vmatpush1.msra.mxu0 0.0
  %3529 = vmatprep.subr.mxu0 0.0
  %3530 = vmatpush1.msra.mxu0 0.0
  %3531 = vmatprep.subr.mxu0 0.0
  %3532 = vmatpush1.msra.mxu0 0.0
  %3533 = vmatprep.subr.mxu0 0.0
  %3534 = vmatpush1.msra.mxu0 0.0
  %3535 = vmatprep.subr.mxu0 0.0
  %3536 = vmatpush1.msra.mxu0 0.0
  %3537 = vmatprep.subr.mxu0 0.0
  %3538 = vmatpush1.msra.mxu0 0.0
  %3539 = vmatprep.subr.mxu0 0.0
  %3540 = vmatpush1.msra.mxu0 0.0
  %3541 = vmatprep.subr.mxu0 0.0
  %3542 = vmatpush1.msra.mxu0 0.0
  %3543 = vmatprep.subr.mxu0 0.0
  %3544 = vmatpush1.msra.mxu0 0.0
  %3545 = vmatprep.subr.mxu0 0.0
  %3546 = vmatpush1.msra.mxu0 0.0
  %3547 = vmatprep.mubr.f32.mxu0 0.0
  %3548 = vmatmul.mubr.f32.gmra.mrb[0].mxu0 %v3459
  %v3549 = vpop.f32.mrb[0].mxu0
  %v3550 = vadd.f32 %v3481, %v3549
  %v3551 = vpop.f32.mrb[0].mxu0
  %3552 = vdwg.mxu0
  %3553 = vst [vmem:[%s11] sm:$0xff] %v3550
  // Predicated region
  $region46: #{gru_forward.1} parent=0 // pred_check
    _
  $region47: #{gru_forward.1} parent=0 // pred_check_branch
    %3555 = sbr.rel (0) target = $region49
  $region48: #{gru_forward.1} parent=0 // pred_region
    _
  $region49: #{gru_forward.1} parent=0 // pred_fallthru
    _
  // Predicated region
  $region50: #{gru_forward.1} parent=0 // pred_check
    _
  $region51: #{gru_forward.1} parent=0 // pred_check_branch
    %3557 = sbr.rel (0) target = $region53
  $region52: #{gru_forward.1} parent=0 // pred_region
    _
  $region53: #{gru_forward.1} parent=0 // pred_fallthru
    _

</llo_original>
